<compile_context>
chip_gen: v6e
topology: v6e:2x2x1
jax: 0.10.0
libtpu: 0.0.40
codegen_flags: <defaults>
</compile_context>

<pallas_src>
import jax
import jax.numpy as jnp
from jax.experimental import pallas as pl
from jax.experimental.pallas import tpu as pltpu

# ---- model dimensions (small, synthetic) -----------------------------------
N_NODES = 32                      # nodes per forward (one PyG batch)
N_GRAPHS = 4                      # graphs per forward
NODES_PER_GRAPH = N_NODES // N_GRAPHS        # 8 == one f32 sublane tile
F_IN = 16                         # raw node feature dim
HIDDEN = 32                       # hidden dim of encoder / heads
HEAD_DIM_G = 4                    # graph-head output dim
HEAD_DIM_N = 4                    # node-head output dim
VAR_OUTPUT = 1                    # heads emit head_dim*(1+var_output) columns

assert N_NODES == HIDDEN, "adjacency rows ride in the HIDDEN-lane data slab"

# ---- batching over independent forwards -------------------------------------
BATCH = 16                        # independent forwards fused into one pallas_call
FWDS_PER_STEP = 8                 # forwards per grid step -> 256 node rows / matmul
GRID_STEPS = BATCH // FWDS_PER_STEP
ROWS_PER_STEP = FWDS_PER_STEP * N_NODES        # 256 node rows per step
G_ROWS = FWDS_PER_STEP * N_GRAPHS              # 32 graph rows per step
OUT_ROWS = G_ROWS + ROWS_PER_STEP              # 288-row merged output slab per step

# ---- packed parameter slab layout -------------------------------------------
_LAYER_NAMES = ("emb", "conv1", "feat1", "conv2", "feat2", "sh", "gh", "nh1", "nh2")
N_LAYERS = len(_LAYER_NAMES)
W_ROWS = N_LAYERS * HIDDEN                     # 288 weight rows
BIAS_STRIDE = 8                                # each bias on its own 8-row tile
PARAM_ROWS = W_ROWS + N_LAYERS * BIAS_STRIDE   # 360 rows (multiple of 8)


def _fused_kernel(data_ref, param_ref, out_ref):
    relu = lambda t: jnp.maximum(t, 0.0)
    dot = lambda a, b: jnp.dot(a, b, preferred_element_type=jnp.float32)

    # static, sublane-aligned carves of the (VMEM-resident) parameter slab
    def W(i):
        return param_ref[i * HIDDEN:(i + 1) * HIDDEN, :]

    def B(i):
        r = W_ROWS + i * BIAS_STRIDE           # always a multiple of 8
        return param_ref[r:r + 1, :]           # (1, HIDDEN) row on a tile boundary

    # data block: (FWDS, 2*N_NODES, HIDDEN) = [features ; per-forward adjacency]
    x = data_ref[:, 0:N_NODES, :].reshape(ROWS_PER_STEP, HIDDEN)      # (256, 32)
    adj = data_ref[:, N_NODES:2 * N_NODES, :]                         # (8, 32, 32)

    def conv(h2, i):
        # h = adj @ (h @ W_conv) + b_conv, batched per forward (block-diagonal adj)
        hw = dot(h2, W(i)).reshape(FWDS_PER_STEP, N_NODES, HIDDEN)
        out = jnp.einsum("fnm,fmk->fnk", adj, hw,
                         preferred_element_type=jnp.float32)
        return out.reshape(ROWS_PER_STEP, HIDDEN) + B(i)

    # ----------------- EncoderModel.forward (all forwards stacked on rows) ----
    h = relu(dot(x, W(0)) + B(0))              # embedding + activation
    h = conv(h, 1)                             # conv 1
    h = relu(dot(h, W(2)) + B(2))              # feature layer 1 + act
    h = conv(h, 3)                             # conv 2
    h = relu(dot(h, W(4)) + B(4))              # feature layer 2 + act

    # ----------------- DecoderModel.forward -----------------------------------
    # global_mean_pool: graphs are contiguous & equal-sized -> reshape + sublane mean
    x_graph = jnp.mean(
        h.reshape(FWDS_PER_STEP * N_GRAPHS, NODES_PER_GRAPH, HIDDEN), axis=1
    )                                          # (32, 32): (forward, graph) major order

    # graph head (branch-0): graph_shared MLP then head MLP
    g = relu(dot(x_graph, W(5)) + B(5))
    out_g = dot(g, W(6)) + B(6)                # (32, 32): cols [0, 2*hd) valid, rest zero

    # node head (branch-0, MLP-type node_NN)
    n = relu(dot(h, W(7)) + B(7))
    out_n = dot(n, W(8)) + B(8)                # (256, 32)

    # square the var half in place (lanes >= head_dim; padded lanes are zero -> stay zero)
    lane_g = jax.lax.broadcasted_iota(jnp.int32, out_g.shape, 1)
    lane_n = jax.lax.broadcasted_iota(jnp.int32, out_n.shape, 1)
    out_ref[0:G_ROWS, :] = jnp.where(lane_g >= HEAD_DIM_G, out_g * out_g, out_g)
    out_ref[G_ROWS:OUT_ROWS, :] = jnp.where(lane_n >= HEAD_DIM_N, out_n * out_n, out_n)


def multitask_forward(data_slab, param_slab):
    """Batched fused encoder+decoder forward.

    data_slab : (BATCH, 2*N_NODES, HIDDEN)  -- per-forward [padded features ; adjacency]
    param_slab: (PARAM_ROWS, HIDDEN)        -- shared weights, DMA'd once, VMEM-resident
    """
    batch = data_slab.shape[0]
    assert batch % FWDS_PER_STEP == 0
    grid_steps = batch // FWDS_PER_STEP

    out = pl.pallas_call(
        _fused_kernel,
        out_shape=jax.ShapeDtypeStruct((grid_steps * OUT_ROWS, HIDDEN), jnp.float32),
        grid_spec=pltpu.PrefetchScalarGridSpec(
            num_scalar_prefetch=0,
            grid=(grid_steps,),
            in_specs=[
                # per-step slice of the data slab
                pl.BlockSpec((FWDS_PER_STEP, 2 * N_NODES, HIDDEN),
                             lambda i: (i, 0, 0)),
                # constant index_map -> weights DMA'd once, resident across all steps
                pl.BlockSpec((PARAM_ROWS, HIDDEN), lambda i: (0, 0)),
            ],
            out_specs=pl.BlockSpec((OUT_ROWS, HIDDEN), lambda i: (i, 0)),
        ),
        compiler_params=pltpu.CompilerParams(
            dimension_semantics=("parallel",),   # v7x: shard batch axis across both TCs
        ),
    )(data_slab, param_slab)

    # wrapper-side split (free layout plumbing), matching DecoderModel's return
    out = out.reshape(grid_steps, OUT_ROWS, HIDDEN)
    g = out[:, :G_ROWS, :].reshape(batch, N_GRAPHS, HIDDEN)
    n = out[:, G_ROWS:, :].reshape(batch, N_NODES, HIDDEN)
    head_g = g[..., :HEAD_DIM_G]
    var_g = g[..., HEAD_DIM_G:HEAD_DIM_G * (1 + VAR_OUTPUT)]
    head_n = n[..., :HEAD_DIM_N]
    var_n = n[..., HEAD_DIM_N:HEAD_DIM_N * (1 + VAR_OUTPUT)]
    return ([head_g, head_n], [var_g, var_n])


# ------------------------- packing helpers ----------------------------------
def _pack_data(x, adj):
    """x: (B, N_NODES, F_IN), adj: (B, N_NODES, N_NODES) -> (B, 2*N_NODES, HIDDEN)."""
    b = x.shape[0]
    x_pad = jnp.zeros((b, N_NODES, HIDDEN), jnp.float32).at[:, :, :F_IN].set(x)
    return jnp.concatenate([x_pad, adj.astype(jnp.float32)], axis=1)


def _pack_params(p):
    """Zero-pad every weight to (HIDDEN, HIDDEN) and every bias to an 8-row block."""
    w_rows, b_rows = [], []
    for name in _LAYER_NAMES:
        w = p["w_" + name]
        b = p["b_" + name]
        w_pad = jnp.zeros((HIDDEN, HIDDEN), jnp.float32).at[:w.shape[0], :w.shape[1]].set(w)
        b_pad = jnp.zeros((BIAS_STRIDE, HIDDEN), jnp.float32).at[0:1, :b.shape[1]].set(b)
        w_rows.append(w_pad)
        b_rows.append(b_pad)
    return jnp.concatenate(w_rows + b_rows, axis=0)          # (PARAM_ROWS, HIDDEN)


# ------------------------- reference & inputs --------------------------------
def _reference_forward_single(x, adj, pool, p):
    """Pure-JAX reference of one forward for the correctness check."""
    relu = lambda t: jnp.maximum(t, 0.0)
    h = relu(x @ p["w_emb"] + p["b_emb"])
    h = adj @ (h @ p["w_conv1"]) + p["b_conv1"]
    h = relu(h @ p["w_feat1"] + p["b_feat1"])
    h = adj @ (h @ p["w_conv2"]) + p["b_conv2"]
    h = relu(h @ p["w_feat2"] + p["b_feat2"])
    x_graph = pool @ h
    g = relu(x_graph @ p["w_sh"] + p["b_sh"])
    out_g = g @ p["w_gh"] + p["b_gh"]
    n = relu(h @ p["w_nh1"] + p["b_nh1"])
    out_n = n @ p["w_nh2"] + p["b_nh2"]
    return (
        [out_g[:, :HEAD_DIM_G], out_n[:, :HEAD_DIM_N]],
        [out_g[:, HEAD_DIM_G:] ** 2, out_n[:, HEAD_DIM_N:] ** 2],
    )


def _init_params(key):
    dims = {
        "w_emb": (F_IN, HIDDEN), "b_emb": (1, HIDDEN),
        "w_conv1": (HIDDEN, HIDDEN), "b_conv1": (1, HIDDEN),
        "w_feat1": (HIDDEN, HIDDEN), "b_feat1": (1, HIDDEN),
        "w_conv2": (HIDDEN, HIDDEN), "b_conv2": (1, HIDDEN),
        "w_feat2": (HIDDEN, HIDDEN), "b_feat2": (1, HIDDEN),
        "w_sh": (HIDDEN, HIDDEN), "b_sh": (1, HIDDEN),
        "w_gh": (HIDDEN, HEAD_DIM_G * (1 + VAR_OUTPUT)), "b_gh": (1, HEAD_DIM_G * (1 + VAR_OUTPUT)),
        "w_nh1": (HIDDEN, HIDDEN), "b_nh1": (1, HIDDEN),
        "w_nh2": (HIDDEN, HEAD_DIM_N * (1 + VAR_OUTPUT)), "b_nh2": (1, HEAD_DIM_N * (1 + VAR_OUTPUT)),
    }
    keys = jax.random.split(key, len(dims))
    params = {}
    for (name, shape), k in zip(dims.items(), keys):
        scale = 1.0 / jnp.sqrt(jnp.asarray(shape[0], jnp.float32))
        params[name] = (scale * jax.random.normal(k, shape, jnp.float32)).astype(jnp.float32)
    return params


def _build_graph_inputs(key, batch):
    """BATCH independent forwards: random features + random per-graph adjacencies."""
    kx, ka = jax.random.split(key)
    x = jax.random.normal(kx, (batch, N_NODES, F_IN), jnp.float32)

    # data.batch: N_GRAPHS graphs with equal, consecutive node counts (as in PyG)
    batch_vec = jnp.repeat(jnp.arange(N_GRAPHS), NODES_PER_GRAPH)

    # global_mean_pool matrix (only used by the pure-JAX reference)
    onehot = (batch_vec[None, :] == jnp.arange(N_GRAPHS)[:, None]).astype(jnp.float32)
    pool = onehot / onehot.sum(axis=1, keepdims=True)

    # Per-forward dense row-normalized adjacency: random symmetric edges inside each
    # graph block + self loops (block diagonal per forward, varies with forward index).
    same_graph = (batch_vec[:, None] == batch_vec[None, :]).astype(jnp.float32)
    rnd = jax.random.bernoulli(ka, 0.35, (batch, N_NODES, N_NODES)).astype(jnp.float32)
    sym = jnp.maximum(rnd, jnp.swapaxes(rnd, 1, 2))
    eye = jnp.eye(N_NODES, dtype=jnp.float32)
    adj = jnp.minimum(sym * same_graph[None, :, :] + eye[None, :, :], 1.0)
    adj = adj / adj.sum(axis=2, keepdims=True)
    return x, adj, pool


if __name__ == "__main__":
    key = jax.random.PRNGKey(0)
    k_data, k_param = jax.random.split(key)
    x, adj, pool = _build_graph_inputs(k_data, BATCH)
    params = _init_params(k_param)

    data_slab = _pack_data(x, adj)          # (BATCH, 64, 32)
    param_slab = _pack_params(params)       # (360, 32)

    outputs, outputs_var = jax.jit(multitask_forward)(data_slab, param_slab)
    jax.block_until_ready(outputs)
    jax.block_until_ready(outputs_var)

    # correctness check against the pure-JAX reference, vmapped over forwards
    ref_outputs, ref_vars = jax.vmap(
        lambda xb, ab: _reference_forward_single(xb, ab, pool, params)
    )(x, adj)
    for got, want in zip(outputs + outputs_var, ref_outputs + ref_vars):
        assert got.shape == want.shape, (got.shape, want.shape)
        assert float(jnp.max(jnp.abs(got - want))) < 2e-4

    print("KERNEL_OK")
</pallas_src>

<mosaic_0001>
module attributes {stable_mosaic.version = 11 : i64} {
  func.func @_fused_kernel(%arg0: i32, %arg1: memref<8x64x32xf32, #tpu.memory_space<vmem>>, %arg2: memref<360x32xf32, #tpu.memory_space<vmem>>, %arg3: memref<288x32xf32, #tpu.memory_space<vmem>>) attributes {dimension_semantics = [#tpu.dimension_semantics<parallel>], iteration_bounds = array<i64: 2>, scalar_prefetch = 0 : i64, scratch_operands = 0 : i64, tpu.core_type = #tpu.core_type<tc>, window_params = [{transform_indices = @transform_0, window_bounds = array<i64: 8, 64, 32>}, {pipeline_mode = #tpu.pipeline_mode<synchronous>, transform_indices = @transform_1, window_bounds = array<i64: 360, 32>}, {transform_indices = @transform_2, window_bounds = array<i64: 288, 32>}]} {
    %c0 = arith.constant 0 : index
    %c0_0 = arith.constant 0 : index
    %c0_1 = arith.constant 0 : index
    %0 = vector.load %arg1[%c0, %c0_0, %c0_1] : memref<8x64x32xf32, #tpu.memory_space<vmem>>, vector<8x32x32xf32>
    %1 = vector.shape_cast %0 : vector<8x32x32xf32> to vector<256x32xf32>
    %c0_2 = arith.constant 0 : index
    %c32 = arith.constant 32 : index
    %c0_3 = arith.constant 0 : index
    %2 = vector.load %arg1[%c0_2, %c32, %c0_3] : memref<8x64x32xf32, #tpu.memory_space<vmem>>, vector<8x32x32xf32>
    %c0_4 = arith.constant 0 : index
    %c0_5 = arith.constant 0 : index
    %3 = vector.load %arg2[%c0_4, %c0_5] : memref<360x32xf32, #tpu.memory_space<vmem>>, vector<32x32xf32>
    %cst = arith.constant dense<0.000000e+00> : vector<256x32xf32>
    %4 = tpu.matmul %1, %3, %cst {dimension_numbers = #tpu.dot_dimension_numbers<[1], [0], [0], [1], [0, 0, 1, 1], [], []>} : vector<256x32xf32>, vector<32x32xf32>, vector<256x32xf32> -> vector<256x32xf32>
    %c288 = arith.constant 288 : index
    %c0_6 = arith.constant 0 : index
    %5 = vector.load %arg2[%c288, %c0_6] : memref<360x32xf32, #tpu.memory_space<vmem>>, vector<1x32xf32>
    %6 = vector.broadcast %5 : vector<1x32xf32> to vector<256x32xf32>
    %7 = arith.addf %4, %6 : vector<256x32xf32>
    %cst_7 = arith.constant 0.000000e+00 : f32
    %8 = vector.broadcast %cst_7 : f32 to vector<256x32xf32>
    %9 = arith.maximumf %7, %8 : vector<256x32xf32>
    %c32_8 = arith.constant 32 : index
    %c0_9 = arith.constant 0 : index
    %10 = vector.load %arg2[%c32_8, %c0_9] : memref<360x32xf32, #tpu.memory_space<vmem>>, vector<32x32xf32>
    %cst_10 = arith.constant dense<0.000000e+00> : vector<256x32xf32>
    %11 = tpu.matmul %9, %10, %cst_10 {dimension_numbers = #tpu.dot_dimension_numbers<[1], [0], [0], [1], [0, 0, 1, 1], [], []>} : vector<256x32xf32>, vector<32x32xf32>, vector<256x32xf32> -> vector<256x32xf32>
    %12 = vector.shape_cast %11 : vector<256x32xf32> to vector<8x32x32xf32>
    "tpu.trace_start"() <{level = 10 : i32, message = "fnm,fmk->fnk"}> : () -> ()
    %cst_11 = arith.constant dense<0.000000e+00> : vector<8x32x32xf32>
    %13 = tpu.matmul %2, %12, %cst_11 {dimension_numbers = #tpu.dot_dimension_numbers<[2], [1], [1], [2], [0, 0, 0, 1, 1, 2], [0], [0]>} : vector<8x32x32xf32>, vector<8x32x32xf32>, vector<8x32x32xf32> -> vector<8x32x32xf32>
    "tpu.trace_stop"() : () -> ()
    %14 = vector.shape_cast %13 : vector<8x32x32xf32> to vector<256x32xf32>
    %c296 = arith.constant 296 : index
    %c0_12 = arith.constant 0 : index
    %15 = vector.load %arg2[%c296, %c0_12] : memref<360x32xf32, #tpu.memory_space<vmem>>, vector<1x32xf32>
    %16 = vector.broadcast %15 : vector<1x32xf32> to vector<256x32xf32>
    %17 = arith.addf %14, %16 : vector<256x32xf32>
    %c64 = arith.constant 64 : index
    %c0_13 = arith.constant 0 : index
    %18 = vector.load %arg2[%c64, %c0_13] : memref<360x32xf32, #tpu.memory_space<vmem>>, vector<32x32xf32>
    %cst_14 = arith.constant dense<0.000000e+00> : vector<256x32xf32>
    %19 = tpu.matmul %17, %18, %cst_14 {dimension_numbers = #tpu.dot_dimension_numbers<[1], [0], [0], [1], [0, 0, 1, 1], [], []>} : vector<256x32xf32>, vector<32x32xf32>, vector<256x32xf32> -> vector<256x32xf32>
    %c304 = arith.constant 304 : index
    %c0_15 = arith.constant 0 : index
    %20 = vector.load %arg2[%c304, %c0_15] : memref<360x32xf32, #tpu.memory_space<vmem>>, vector<1x32xf32>
    %21 = vector.broadcast %20 : vector<1x32xf32> to vector<256x32xf32>
    %22 = arith.addf %19, %21 : vector<256x32xf32>
    %cst_16 = arith.constant 0.000000e+00 : f32
    %23 = vector.broadcast %cst_16 : f32 to vector<256x32xf32>
    %24 = arith.maximumf %22, %23 : vector<256x32xf32>
    %c96 = arith.constant 96 : index
    %c0_17 = arith.constant 0 : index
    %25 = vector.load %arg2[%c96, %c0_17] : memref<360x32xf32, #tpu.memory_space<vmem>>, vector<32x32xf32>
    %cst_18 = arith.constant dense<0.000000e+00> : vector<256x32xf32>
    %26 = tpu.matmul %24, %25, %cst_18 {dimension_numbers = #tpu.dot_dimension_numbers<[1], [0], [0], [1], [0, 0, 1, 1], [], []>} : vector<256x32xf32>, vector<32x32xf32>, vector<256x32xf32> -> vector<256x32xf32>
    %27 = vector.shape_cast %26 : vector<256x32xf32> to vector<8x32x32xf32>
    "tpu.trace_start"() <{level = 10 : i32, message = "fnm,fmk->fnk"}> : () -> ()
    %cst_19 = arith.constant dense<0.000000e+00> : vector<8x32x32xf32>
    %28 = tpu.matmul %2, %27, %cst_19 {dimension_numbers = #tpu.dot_dimension_numbers<[2], [1], [1], [2], [0, 0, 0, 1, 1, 2], [0], [0]>} : vector<8x32x32xf32>, vector<8x32x32xf32>, vector<8x32x32xf32> -> vector<8x32x32xf32>
    "tpu.trace_stop"() : () -> ()
    %29 = vector.shape_cast %28 : vector<8x32x32xf32> to vector<256x32xf32>
    %c312 = arith.constant 312 : index
    %c0_20 = arith.constant 0 : index
    %30 = vector.load %arg2[%c312, %c0_20] : memref<360x32xf32, #tpu.memory_space<vmem>>, vector<1x32xf32>
    %31 = vector.broadcast %30 : vector<1x32xf32> to vector<256x32xf32>
    %32 = arith.addf %29, %31 : vector<256x32xf32>
    %c128 = arith.constant 128 : index
    %c0_21 = arith.constant 0 : index
    %33 = vector.load %arg2[%c128, %c0_21] : memref<360x32xf32, #tpu.memory_space<vmem>>, vector<32x32xf32>
    %cst_22 = arith.constant dense<0.000000e+00> : vector<256x32xf32>
    %34 = tpu.matmul %32, %33, %cst_22 {dimension_numbers = #tpu.dot_dimension_numbers<[1], [0], [0], [1], [0, 0, 1, 1], [], []>} : vector<256x32xf32>, vector<32x32xf32>, vector<256x32xf32> -> vector<256x32xf32>
    %c320 = arith.constant 320 : index
    %c0_23 = arith.constant 0 : index
    %35 = vector.load %arg2[%c320, %c0_23] : memref<360x32xf32, #tpu.memory_space<vmem>>, vector<1x32xf32>
    %36 = vector.broadcast %35 : vector<1x32xf32> to vector<256x32xf32>
    %37 = arith.addf %34, %36 : vector<256x32xf32>
    %cst_24 = arith.constant 0.000000e+00 : f32
    %38 = vector.broadcast %cst_24 : f32 to vector<256x32xf32>
    %39 = arith.maximumf %37, %38 : vector<256x32xf32>
    %40 = vector.shape_cast %39 : vector<256x32xf32> to vector<32x8x32xf32>
    %cst_25 = arith.constant dense<0.000000e+00> : vector<32x32xf32>
    %41 = vector.multi_reduction <add>, %40, %cst_25 [1] : vector<32x8x32xf32> to vector<32x32xf32>
    %cst_26 = arith.constant 8.000000e+00 : f32
    %42 = vector.broadcast %cst_26 : f32 to vector<32x32xf32>
    %43 = arith.divf %41, %42 : vector<32x32xf32>
    %c160 = arith.constant 160 : index
    %c0_27 = arith.constant 0 : index
    %44 = vector.load %arg2[%c160, %c0_27] : memref<360x32xf32, #tpu.memory_space<vmem>>, vector<32x32xf32>
    %cst_28 = arith.constant dense<0.000000e+00> : vector<32x32xf32>
    %45 = tpu.matmul %43, %44, %cst_28 {dimension_numbers = #tpu.dot_dimension_numbers<[1], [0], [0], [1], [0, 0, 1, 1], [], []>} : vector<32x32xf32>, vector<32x32xf32>, vector<32x32xf32> -> vector<32x32xf32>
    %c328 = arith.constant 328 : index
    %c0_29 = arith.constant 0 : index
    %46 = vector.load %arg2[%c328, %c0_29] : memref<360x32xf32, #tpu.memory_space<vmem>>, vector<1x32xf32>
    %47 = vector.broadcast %46 : vector<1x32xf32> to vector<32x32xf32>
    %48 = arith.addf %45, %47 : vector<32x32xf32>
    %cst_30 = arith.constant 0.000000e+00 : f32
    %49 = vector.broadcast %cst_30 : f32 to vector<32x32xf32>
    %50 = arith.maximumf %48, %49 : vector<32x32xf32>
    %c192 = arith.constant 192 : index
    %c0_31 = arith.constant 0 : index
    %51 = vector.load %arg2[%c192, %c0_31] : memref<360x32xf32, #tpu.memory_space<vmem>>, vector<32x32xf32>
    %cst_32 = arith.constant dense<0.000000e+00> : vector<32x32xf32>
    %52 = tpu.matmul %50, %51, %cst_32 {dimension_numbers = #tpu.dot_dimension_numbers<[1], [0], [0], [1], [0, 0, 1, 1], [], []>} : vector<32x32xf32>, vector<32x32xf32>, vector<32x32xf32> -> vector<32x32xf32>
    %c336 = arith.constant 336 : index
    %c0_33 = arith.constant 0 : index
    %53 = vector.load %arg2[%c336, %c0_33] : memref<360x32xf32, #tpu.memory_space<vmem>>, vector<1x32xf32>
    %54 = vector.broadcast %53 : vector<1x32xf32> to vector<32x32xf32>
    %55 = arith.addf %52, %54 : vector<32x32xf32>
    %c224 = arith.constant 224 : index
    %c0_34 = arith.constant 0 : index
    %56 = vector.load %arg2[%c224, %c0_34] : memref<360x32xf32, #tpu.memory_space<vmem>>, vector<32x32xf32>
    %cst_35 = arith.constant dense<0.000000e+00> : vector<256x32xf32>
    %57 = tpu.matmul %39, %56, %cst_35 {dimension_numbers = #tpu.dot_dimension_numbers<[1], [0], [0], [1], [0, 0, 1, 1], [], []>} : vector<256x32xf32>, vector<32x32xf32>, vector<256x32xf32> -> vector<256x32xf32>
    %c344 = arith.constant 344 : index
    %c0_36 = arith.constant 0 : index
    %58 = vector.load %arg2[%c344, %c0_36] : memref<360x32xf32, #tpu.memory_space<vmem>>, vector<1x32xf32>
    %59 = vector.broadcast %58 : vector<1x32xf32> to vector<256x32xf32>
    %60 = arith.addf %57, %59 : vector<256x32xf32>
    %cst_37 = arith.constant 0.000000e+00 : f32
    %61 = vector.broadcast %cst_37 : f32 to vector<256x32xf32>
    %62 = arith.maximumf %60, %61 : vector<256x32xf32>
    %c256 = arith.constant 256 : index
    %c0_38 = arith.constant 0 : index
    %63 = vector.load %arg2[%c256, %c0_38] : memref<360x32xf32, #tpu.memory_space<vmem>>, vector<32x32xf32>
    %cst_39 = arith.constant dense<0.000000e+00> : vector<256x32xf32>
    %64 = tpu.matmul %62, %63, %cst_39 {dimension_numbers = #tpu.dot_dimension_numbers<[1], [0], [0], [1], [0, 0, 1, 1], [], []>} : vector<256x32xf32>, vector<32x32xf32>, vector<256x32xf32> -> vector<256x32xf32>
    %c352 = arith.constant 352 : index
    %c0_40 = arith.constant 0 : index
    %65 = vector.load %arg2[%c352, %c0_40] : memref<360x32xf32, #tpu.memory_space<vmem>>, vector<1x32xf32>
    %66 = vector.broadcast %65 : vector<1x32xf32> to vector<256x32xf32>
    %67 = arith.addf %64, %66 : vector<256x32xf32>
    %68 = tpu.iota {dimensions = array<i32: 1>} : vector<32x32xi32>
    %69 = tpu.iota {dimensions = array<i32: 1>} : vector<256x32xi32>
    %c4_i32 = arith.constant 4 : i32
    %70 = vector.broadcast %c4_i32 : i32 to vector<32x32xi32>
    %71 = arith.cmpi sge, %68, %70 : vector<32x32xi32>
    %72 = arith.mulf %55, %55 : vector<32x32xf32>
    %73 = arith.select %71, %72, %55 : vector<32x32xi1>, vector<32x32xf32>
    %c0_41 = arith.constant 0 : index
    %c0_42 = arith.constant 0 : index
    %74 = vector.load %arg3[%c0_41, %c0_42] : memref<288x32xf32, #tpu.memory_space<vmem>>, vector<32x32xf32>
    tpu.vector_store %arg3[%c0_41, %c0_42], %73 {strides = array<i32>} : memref<288x32xf32, #tpu.memory_space<vmem>>, vector<32x32xf32>,
    %c4_i32_43 = arith.constant 4 : i32
    %75 = vector.broadcast %c4_i32_43 : i32 to vector<256x32xi32>
    %76 = arith.cmpi sge, %69, %75 : vector<256x32xi32>
    %77 = arith.mulf %67, %67 : vector<256x32xf32>
    %78 = arith.select %76, %77, %67 : vector<256x32xi1>, vector<256x32xf32>
    %c32_44 = arith.constant 32 : index
    %c0_45 = arith.constant 0 : index
    %79 = vector.load %arg3[%c32_44, %c0_45] : memref<288x32xf32, #tpu.memory_space<vmem>>, vector<256x32xf32>
    tpu.vector_store %arg3[%c32_44, %c0_45], %78 {strides = array<i32>} : memref<288x32xf32, #tpu.memory_space<vmem>>, vector<256x32xf32>,
    return
  }
  func.func @transform_0(%arg0: i32) -> (i32, i32, i32) {
    %c0_i32 = arith.constant 0 : i32
    %c0_i32_0 = arith.constant 0 : i32
    %c0_i32_1 = arith.constant 0 : i32
    return %arg0, %c0_i32, %c0_i32_0 : i32, i32, i32
  }
  func.func @transform_1(%arg0: i32) -> (i32, i32) {
    %c0_i32 = arith.constant 0 : i32
    %c0_i32_0 = arith.constant 0 : i32
    %c0_i32_1 = arith.constant 0 : i32
    return %c0_i32, %c0_i32_0 : i32, i32
  }
  func.func @transform_2(%arg0: i32) -> (i32, i32) {
    %c0_i32 = arith.constant 0 : i32
    %c0_i32_0 = arith.constant 0 : i32
    return %arg0, %c0_i32 : i32, i32
  }
}

</mosaic_0001>

<llo_original>
// kernel: multitask_forward.1
$region0: #{multitask_forward.1}
  #allocation0 [shape = 'u32[]', space=smem, size = 0x4, offset = 0x4, fixed_abs, tag = 'smem constant byte address 0x4 - core index']
  #allocation1 [shape = 'u32[144,128]{1,0:T(1,128)}', space=vmem, size = 0x12000, scoped, tag = 'internal scratch']
  %s0 = inlined_call_operand.vmem [shape: f32[16,64,32], index: 0, kind: input, shape index: {}]
  %s1 = inlined_call_operand.vmem [shape: f32[360,32], index: 1, kind: input, shape index: {}]
  %s2 = inlined_call_operand.vmem [shape: f32[576,32], index: 2, kind: output, shape index: {}]
  %s3 = sld [smem:[#allocation0]]
  $region41: #{multitask_forward.1} parent=0
    _
  %s5 = ssub.s32 1, %s3
  %s6 = scalar_select 0, %s5, %s3
  loop: start=0, step=1, limit=4
  $region2: #{multitask_forward.1} parent=0 // loop_pre_header
    _
  $region3: #{multitask_forward.1} parent=0 // loop_header
    %s8 = sphi 0, %s12
    %p9 = scmp.ge.s32.totalorder %s8, 4
    %s18 = sphi 0, %s20
    %s21 = sphi 0, %s18
    %s22 = sphi 0, %s21
    %s38 = sphi 0, %s22
    %s42 = sphi 0, %s42
    %s44 = sphi 0, %s42
    %s45 = sphi 0, %s44
    %s59 = sphi 0, %s45
    %s65 = sphi 0, %s67
    %s68 = sphi 0, %s65
    %s69 = sphi 0, %s68
    %s85 = sphi 0, %s69
  $region4: #{multitask_forward.1} parent=0 // loop_header_branch
    %11 = sbr.rel (%p9) target = $region8
  $region5: #{multitask_forward.1} parent=0 // loop_body
    %s13 = ssub.s32 %s8, 1
    %s14 = ssub.s32 %s8, 2
    %s15 = sadd.s32 %s8, 1
    %s16 = ssub.s32 %s8, %s15
    %p17 = scmp.eq.s32.totalorder %s16, 0
    %s19 = sadd.s32 %s18, 1
    %s20 = scalar_select %p17, %s18, %s19
    %p23 = pneg %p17
    %p24 = scmp.eq.s32.totalorder %s8, 1
    %p25 = por %p23, %p24
    %p26 = scmp.ne.s32.totalorder %s18, %s21
    %p27 = scmp.eq.s32.totalorder %s8, 0
    %p28 = por %p26, %p27
    %p29 = scmp.ne.s32.totalorder %s18, %s21
    %p30 = scmp.eq.s32.totalorder %s13, 1
    %p31 = por %p29, %p30
    %p32 = scmp.ne.s32.totalorder %s21, %s22
    %p33 = scmp.eq.s32.totalorder %s13, 0
    %p34 = por %p32, %p33
    %p35 = scmp.ne.s32.totalorder %s21, %s22
    %p36 = scmp.eq.s32.totalorder %s14, 1
    %p37 = por %p35, %p36
    %p39 = scmp.ne.s32.totalorder %s22, %s38
    %p40 = scmp.eq.s32.totalorder %s14, 0
    %p41 = por %p39, %p40
    %s43 = sadd.s32 %s42, 1
    %p46 = scmp.eq.s32.totalorder %s8, 1
    %p47 = scmp.ne.s32.totalorder %s42, %s44
    %p48 = scmp.eq.s32.totalorder %s8, 0
    %p49 = por %p47, %p48
    %p50 = scmp.ne.s32.totalorder %s42, %s44
    %p51 = scmp.eq.s32.totalorder %s13, 1
    %p52 = por %p50, %p51
    %p53 = scmp.ne.s32.totalorder %s44, %s45
    %p54 = scmp.eq.s32.totalorder %s13, 0
    %p55 = por %p53, %p54
    %p56 = scmp.ne.s32.totalorder %s44, %s45
    %p57 = scmp.eq.s32.totalorder %s14, 1
    %p58 = por %p56, %p57
    %p60 = scmp.ne.s32.totalorder %s45, %s59
    %p61 = scmp.eq.s32.totalorder %s14, 0
    %p62 = por %p60, %p61
    %s63 = ssub.s32 %s8, %s15
    %p64 = scmp.eq.s32.totalorder %s63, 0
    %s66 = sadd.s32 %s65, 1
    %s67 = scalar_select %p64, %s65, %s66
    %p70 = pneg %p64
    %p71 = scmp.eq.s32.totalorder %s8, 1
    %p72 = por %p70, %p71
    %p73 = scmp.ne.s32.totalorder %s65, %s68
    %p74 = scmp.eq.s32.totalorder %s8, 0
    %p75 = por %p73, %p74
    %p76 = scmp.ne.s32.totalorder %s65, %s68
    %p77 = scmp.eq.s32.totalorder %s13, 1
    %p78 = por %p76, %p77
    %p79 = scmp.ne.s32.totalorder %s68, %s69
    %p80 = scmp.eq.s32.totalorder %s13, 0
    %p81 = por %p79, %p80
    %p82 = scmp.ne.s32.totalorder %s68, %s69
    %p83 = scmp.eq.s32.totalorder %s14, 1
    %p84 = por %p82, %p83
    %p86 = scmp.ne.s32.totalorder %s69, %s85
    %p87 = scmp.eq.s32.totalorder %s14, 0
    %p88 = por %p86, %p87
    %p89 = scmp.le.s32.totalorder 1, %s8
    %p90 = scmp.lt.s32.totalorder %s8, 3
    %p91 = pnand %p89, %p90
    %p92 = pneg %p91
    // Predicated region
    $region9: #{multitask_forward.1} parent=5 // pred_check
      _
    $region10: #{multitask_forward.1} parent=5 // pred_check_branch
      %94 = sbr.rel (%p91) target = $region12
    $region11: #{multitask_forward.1} parent=5 // pred_region
      %s95 = ssub.s32 %s8, 1
      // Predicated region
      $region13: #{multitask_forward.1} parent=11 // pred_check
        %p96 = pneg %p55
      $region14: #{multitask_forward.1} parent=11 // pred_check_branch
        %98 = sbr.rel (%p96) target = $region16
      $region15: #{multitask_forward.1} parent=11 // pred_region
        _
      $region16: #{multitask_forward.1} parent=11 // pred_fallthru
        _
    $region12: #{multitask_forward.1} parent=5 // pred_fallthru
      _
    %p99 = scmp.lt.s32.totalorder %s8, 2
    // Predicated region
    $region17: #{multitask_forward.1} parent=5 // pred_check
      %p100 = pneg %p99
    $region18: #{multitask_forward.1} parent=5 // pred_check_branch
      %102 = sbr.rel (%p100) target = $region20
    $region19: #{multitask_forward.1} parent=5 // pred_region
      // Predicated region
      $region21: #{multitask_forward.1} parent=19 // pred_check
        %p103 = pneg %p28
      $region22: #{multitask_forward.1} parent=19 // pred_check_branch
        %105 = sbr.rel (%p103) target = $region24
      $region23: #{multitask_forward.1} parent=19 // pred_region
        %s106 = smul.u32 8, %s8
        %p107 = scmp.lt.s32.totalorder %s106, 15
        %s108 = scalar_select %p107, %s106, 15
        %s109 = smul.addr %s108, 8
        %s110 = smul.addr %s109, 8
        %s111 = scalar_lea.vmem %s0, %s110
        %s112 = smul.u32 8, %s8
      $region24: #{multitask_forward.1} parent=19 // pred_fallthru
        _
    $region20: #{multitask_forward.1} parent=5 // pred_fallthru
      _
    %p113 = scmp.le.s32.totalorder 1, %s8
    %p114 = scmp.lt.s32.totalorder %s8, 3
    %p115 = pnand %p113, %p114
    %p116 = pneg %p115
    // Predicated region
    $region25: #{multitask_forward.1} parent=5 // pred_check
      _
    $region26: #{multitask_forward.1} parent=5 // pred_check_branch
      %118 = sbr.rel (%p115) target = $region28
    $region27: #{multitask_forward.1} parent=5 // pred_region
      %s119 = ssub.s32 %s8, 1
      %s120 = smul.u32 8, %s13
      %p121 = scmp.lt.s32.totalorder %s120, 15
      %s122 = scalar_select %p121, %s120, 15
      %s123 = smul.addr %s122, 8
      %s124 = smul.addr %s123, 8
      %s125 = scalar_lea.vmem %s0, %s124
      %p126 = pneg %p34
      %p127 = pneg %p31
      %p128 = pneg %p55
      %p129 = pneg %p52
      %p130 = pneg %p81
      %p131 = pneg %p78
      %s132 = smul.u32 36, %s13
      %p133 = scmp.lt.s32.totalorder %s132, 71
      %s134 = scalar_select %p133, %s132, 71
      %s135 = smul.addr %s134, 8
      %s136 = scalar_lea.vmem %s2, %s135
      %s137 = smul.u32 8, %s13
      %p138 = scmp.lt.s32.totalorder %s137, 15
      %s139 = scalar_select %p138, %s137, 15
      %s140 = smul.addr %s139, 8
      %s141 = smul.addr %s140, 8
      %s142 = scalar_lea.vmem %s0, %s141
      %s143 = smul.u32 8, %s13
      %s144 = smul.u32 36, %s13
      %p145 = scmp.lt.s32.totalorder %s144, 71
      %s146 = scalar_select %p145, %s144, 71
      %s147 = smul.addr %s146, 8
      %s148 = scalar_lea.vmem %s2, %s147
      %s149 = smul.u32 36, %s13
      %v150 = vld [vmem:[%s142] sm:$0xff]
      %v151 = vld [vmem:[%s142 + $0x8] sm:$0xff]
      %v152 = vld [vmem:[%s142 + $0x10] sm:$0xff]
      %v153 = vld [vmem:[%s142 + $0x18] sm:$0xff]
      %v154 = vld [vmem:[%s142 + $0x40] sm:$0xff]
      %v155 = vld [vmem:[%s142 + $0x48] sm:$0xff]
      %v156 = vld [vmem:[%s142 + $0x50] sm:$0xff]
      %v157 = vld [vmem:[%s142 + $0x58] sm:$0xff]
      %v158 = vld [vmem:[%s142 + $0x80] sm:$0xff]
      %v159 = vld [vmem:[%s142 + $0x88] sm:$0xff]
      %v160 = vld [vmem:[%s142 + $0x90] sm:$0xff]
      %v161 = vld [vmem:[%s142 + $0x98] sm:$0xff]
      %v162 = vld [vmem:[%s142 + $0xc0] sm:$0xff]
      %v163 = vld [vmem:[%s142 + $0xc8] sm:$0xff]
      %v164 = vld [vmem:[%s142 + $0xd0] sm:$0xff]
      %v165 = vld [vmem:[%s142 + $0xd8] sm:$0xff]
      %v166 = vld [vmem:[%s142 + $0x100] sm:$0xff]
      %v167 = vld [vmem:[%s142 + $0x108] sm:$0xff]
      %v168 = vld [vmem:[%s142 + $0x110] sm:$0xff]
      %v169 = vld [vmem:[%s142 + $0x118] sm:$0xff]
      %v170 = vld [vmem:[%s142 + $0x140] sm:$0xff]
      %v171 = vld [vmem:[%s142 + $0x148] sm:$0xff]
      %v172 = vld [vmem:[%s142 + $0x150] sm:$0xff]
      %v173 = vld [vmem:[%s142 + $0x158] sm:$0xff]
      %v174 = vld [vmem:[%s142 + $0x180] sm:$0xff]
      %v175 = vld [vmem:[%s142 + $0x188] sm:$0xff]
      %v176 = vld [vmem:[%s142 + $0x190] sm:$0xff]
      %v177 = vld [vmem:[%s142 + $0x198] sm:$0xff]
      %v178 = vld [vmem:[%s142 + $0x1c0] sm:$0xff]
      %v179 = vld [vmem:[%s142 + $0x1c8] sm:$0xff]
      %v180 = vld [vmem:[%s142 + $0x1d0] sm:$0xff]
      %v181 = vld [vmem:[%s142 + $0x1d8] sm:$0xff]
      %v182 = vld [vmem:[%s142 + $0x20] sm:$0xff]
      %v183 = vld [vmem:[%s142 + $0x28] sm:$0xff]
      %v184 = vld [vmem:[%s142 + $0x30] sm:$0xff]
      %v185 = vld [vmem:[%s142 + $0x38] sm:$0xff]
      %v186 = vld [vmem:[%s142 + $0x60] sm:$0xff]
      %v187 = vld [vmem:[%s142 + $0x68] sm:$0xff]
      %v188 = vld [vmem:[%s142 + $0x70] sm:$0xff]
      %v189 = vld [vmem:[%s142 + $0x78] sm:$0xff]
      %v190 = vld [vmem:[%s142 + $0xa0] sm:$0xff]
      %v191 = vld [vmem:[%s142 + $0xa8] sm:$0xff]
      %v192 = vld [vmem:[%s142 + $0xb0] sm:$0xff]
      %v193 = vld [vmem:[%s142 + $0xb8] sm:$0xff]
      %v194 = vld [vmem:[%s142 + $0xe0] sm:$0xff]
      %v195 = vld [vmem:[%s142 + $0xe8] sm:$0xff]
      %v196 = vld [vmem:[%s142 + $0xf0] sm:$0xff]
      %v197 = vld [vmem:[%s142 + $0xf8] sm:$0xff]
      %v198 = vld [vmem:[%s142 + $0x120] sm:$0xff]
      %v199 = vld [vmem:[%s142 + $0x128] sm:$0xff]
      %v200 = vld [vmem:[%s142 + $0x130] sm:$0xff]
      %v201 = vld [vmem:[%s142 + $0x138] sm:$0xff]
      %v202 = vld [vmem:[%s142 + $0x160] sm:$0xff]
      %v203 = vld [vmem:[%s142 + $0x168] sm:$0xff]
      %v204 = vld [vmem:[%s142 + $0x170] sm:$0xff]
      %v205 = vld [vmem:[%s142 + $0x178] sm:$0xff]
      %v206 = vld [vmem:[%s142 + $0x1a0] sm:$0xff]
      %v207 = vld [vmem:[%s142 + $0x1a8] sm:$0xff]
      %v208 = vld [vmem:[%s142 + $0x1b0] sm:$0xff]
      %v209 = vld [vmem:[%s142 + $0x1b8] sm:$0xff]
      %v210 = vld [vmem:[%s142 + $0x1e0] sm:$0xff]
      %v211 = vld [vmem:[%s142 + $0x1e8] sm:$0xff]
      %v212 = vld [vmem:[%s142 + $0x1f0] sm:$0xff]
      %v213 = vld [vmem:[%s142 + $0x1f8] sm:$0xff]
      %v214 = vld [vmem:[%s1] sm:$0xff]
      %v215 = vld [vmem:[%s1 + $0x8] sm:$0xff]
      %v216 = vld [vmem:[%s1 + $0x10] sm:$0xff]
      %v217 = vld [vmem:[%s1 + $0x18] sm:$0xff]
      %v218 = vld [vmem:[%s1 + $0x120] sm:$0x1]
      %v219 = vlaneseq
      %v220 = vshrl.u32 %v219, 7
      %v221 = vsub.s32 0, %v220
      %v222 = vrot.slane %v218, %v221
      %vm223 = vcmask 261120
      %v225 = vsel %vm223, %v150, 0
      %v228 = vsel %vm223, %v151, 0
      %v231 = vsel %vm223, %v152, 0
      %v234 = vsel %vm223, %v153, 0
      %v237 = vsel %vm223, %v154, 0
      %v240 = vsel %vm223, %v155, 0
      %v243 = vsel %vm223, %v156, 0
      %v246 = vsel %vm223, %v157, 0
      %v249 = vsel %vm223, %v158, 0
      %v252 = vsel %vm223, %v159, 0
      %v255 = vsel %vm223, %v160, 0
      %v258 = vsel %vm223, %v161, 0
      %v261 = vsel %vm223, %v162, 0
      %v264 = vsel %vm223, %v163, 0
      %v267 = vsel %vm223, %v164, 0
      %v270 = vsel %vm223, %v165, 0
      %v273 = vsel %vm223, %v166, 0
      %v276 = vsel %vm223, %v167, 0
      %v279 = vsel %vm223, %v168, 0
      %v282 = vsel %vm223, %v169, 0
      %v285 = vsel %vm223, %v170, 0
      %v288 = vsel %vm223, %v171, 0
      %v291 = vsel %vm223, %v172, 0
      %v294 = vsel %vm223, %v173, 0
      %v297 = vsel %vm223, %v174, 0
      %v300 = vsel %vm223, %v175, 0
      %v303 = vsel %vm223, %v176, 0
      %v306 = vsel %vm223, %v177, 0
      %v309 = vsel %vm223, %v178, 0
      %v312 = vsel %vm223, %v179, 0
      %v315 = vsel %vm223, %v180, 0
      %v318 = vsel %vm223, %v181, 0
      %320 = vmatprep.subr.mxu0 0.0
      %321 = vmatpush1.msra.mxu0 0.0
      %322 = vmatprep.subr.mxu0 0.0
      %323 = vmatpush1.msra.mxu0 0.0
      %324 = vmatprep.subr.mxu0 0.0
      %325 = vmatpush1.msra.mxu0 0.0
      %326 = vmatprep.subr.mxu0 0.0
      %327 = vmatpush1.msra.mxu0 0.0
      %328 = vmatprep.subr.mxu0 0.0
      %329 = vmatpush1.msra.mxu0 0.0
      %330 = vmatprep.subr.mxu0 0.0
      %331 = vmatpush1.msra.mxu0 0.0
      %332 = vmatprep.subr.mxu0 0.0
      %333 = vmatpush1.msra.mxu0 0.0
      %334 = vmatprep.subr.mxu0 0.0
      %335 = vmatpush1.msra.mxu0 0.0
      %336 = vmatprep.subr.mxu0 0.0
      %337 = vmatpush1.msra.mxu0 0.0
      %338 = vmatprep.subr.mxu0 0.0
      %339 = vmatpush1.msra.mxu0 0.0
      %340 = vmatprep.subr.mxu0 0.0
      %341 = vmatpush1.msra.mxu0 0.0
      %342 = vmatprep.subr.mxu0 0.0
      %343 = vmatpush1.msra.mxu0 0.0
      %344 = vmatprep.subr.mxu0 0.0
      %345 = vmatpush1.msra.mxu0 %v217
      %346 = vmatprep.subr.mxu0 0.0
      %347 = vmatpush1.msra.mxu0 %v216
      %348 = vmatprep.subr.mxu0 0.0
      %349 = vmatpush1.msra.mxu0 %v215
      %350 = vmatprep.subr.mxu0 0.0
      %351 = vmatpush1.msra.mxu0 %v214
      %352 = vmatprep.subr.mxu0 0.0
      %353 = vmatpush2.msra.mxu0 0.0
      %354 = vmatprep.subr.mxu0 0.0
      %355 = vmatpush2.msra.mxu0 0.0
      %356 = vmatprep.subr.mxu0 0.0
      %357 = vmatpush2.msra.mxu0 0.0
      %358 = vmatprep.subr.mxu0 0.0
      %359 = vmatpush2.msra.mxu0 0.0
      %360 = vmatprep.subr.mxu0 0.0
      %361 = vmatpush2.msra.mxu0 0.0
      %362 = vmatprep.subr.mxu0 0.0
      %363 = vmatpush2.msra.mxu0 0.0
      %364 = vmatprep.subr.mxu0 0.0
      %365 = vmatpush2.msra.mxu0 0.0
      %366 = vmatprep.subr.mxu0 0.0
      %367 = vmatpush2.msra.mxu0 0.0
      %368 = vmatprep.subr.mxu0 0.0
      %369 = vmatpush2.msra.mxu0 0.0
      %370 = vmatprep.subr.mxu0 0.0
      %371 = vmatpush2.msra.mxu0 0.0
      %372 = vmatprep.subr.mxu0 0.0
      %373 = vmatpush2.msra.mxu0 0.0
      %374 = vmatprep.subr.mxu0 0.0
      %375 = vmatpush2.msra.mxu0 0.0
      %376 = vmatprep.subr.mxu0 0.0
      %377 = vmatpush2.msra.mxu0 0.0
      %378 = vmatprep.subr.mxu0 0.0
      %379 = vmatpush2.msra.mxu0 0.0
      %380 = vmatprep.subr.mxu0 0.0
      %381 = vmatpush2.msra.mxu0 0.0
      %382 = vmatprep.subr.mxu0 0.0
      %383 = vmatpush2.msra.mxu0 0.0
      %384 = vmatprep.mubr.f32.mxu0 0.0
      %385 = vmatmul.mubr.f32.gmra.mxu0 %v225
      %v386 = vpop.f32.mrf.mxu0
      %v387 = vadd.f32 %v222, %v386
      %v388 = vpop.f32.mrf.mxu0
      %389 = vmatprep.mubr.f32.mxu0 0.0
      %390 = vmatmul.mubr.f32.gmra.mxu0 %v228
      %v391 = vpop.f32.mrf.mxu0
      %v392 = vadd.f32 %v222, %v391
      %v393 = vpop.f32.mrf.mxu0
      %394 = vmatprep.mubr.f32.mxu0 0.0
      %395 = vmatmul.mubr.f32.gmra.mxu0 %v231
      %v396 = vpop.f32.mrf.mxu0
      %v397 = vadd.f32 %v222, %v396
      %v398 = vpop.f32.mrf.mxu0
      %399 = vmatprep.mubr.f32.mxu0 0.0
      %400 = vmatmul.mubr.f32.gmra.mxu0 %v234
      %v401 = vpop.f32.mrf.mxu0
      %v402 = vadd.f32 %v222, %v401
      %v403 = vpop.f32.mrf.mxu0
      %404 = vmatprep.mubr.f32.mxu0 0.0
      %405 = vmatmul.mubr.f32.gmra.mxu0 %v237
      %v406 = vpop.f32.mrf.mxu0
      %v407 = vadd.f32 %v222, %v406
      %v408 = vpop.f32.mrf.mxu0
      %409 = vmatprep.mubr.f32.mxu0 0.0
      %410 = vmatmul.mubr.f32.gmra.mxu0 %v240
      %v411 = vpop.f32.mrf.mxu0
      %v412 = vadd.f32 %v222, %v411
      %v413 = vpop.f32.mrf.mxu0
      %414 = vmatprep.mubr.f32.mxu0 0.0
      %415 = vmatmul.mubr.f32.gmra.mxu0 %v243
      %v416 = vpop.f32.mrf.mxu0
      %v417 = vadd.f32 %v222, %v416
      %v418 = vpop.f32.mrf.mxu0
      %419 = vmatprep.mubr.f32.mxu0 0.0
      %420 = vmatmul.mubr.f32.gmra.mxu0 %v246
      %v421 = vpop.f32.mrf.mxu0
      %v422 = vadd.f32 %v222, %v421
      %v423 = vpop.f32.mrf.mxu0
      %424 = vmatprep.mubr.f32.mxu0 0.0
      %425 = vmatmul.mubr.f32.gmra.mxu0 %v249
      %v426 = vpop.f32.mrf.mxu0
      %v427 = vadd.f32 %v222, %v426
      %v428 = vpop.f32.mrf.mxu0
      %429 = vmatprep.mubr.f32.mxu0 0.0
      %430 = vmatmul.mubr.f32.gmra.mxu0 %v252
      %v431 = vpop.f32.mrf.mxu0
      %v432 = vadd.f32 %v222, %v431
      %v433 = vpop.f32.mrf.mxu0
      %434 = vmatprep.mubr.f32.mxu0 0.0
      %435 = vmatmul.mubr.f32.gmra.mxu0 %v255
      %v436 = vpop.f32.mrf.mxu0
      %v437 = vadd.f32 %v222, %v436
      %v438 = vpop.f32.mrf.mxu0
      %439 = vmatprep.mubr.f32.mxu0 0.0
      %440 = vmatmul.mubr.f32.gmra.mxu0 %v258
      %v441 = vpop.f32.mrf.mxu0
      %v442 = vadd.f32 %v222, %v441
      %v443 = vpop.f32.mrf.mxu0
      %444 = vmatprep.mubr.f32.mxu0 0.0
      %445 = vmatmul.mubr.f32.gmra.mxu0 %v261
      %v446 = vpop.f32.mrf.mxu0
      %v447 = vadd.f32 %v222, %v446
      %v448 = vpop.f32.mrf.mxu0
      %449 = vmatprep.mubr.f32.mxu0 0.0
      %450 = vmatmul.mubr.f32.gmra.mxu0 %v264
      %v451 = vpop.f32.mrf.mxu0
      %v452 = vadd.f32 %v222, %v451
      %v453 = vpop.f32.mrf.mxu0
      %454 = vmatprep.mubr.f32.mxu0 0.0
      %455 = vmatmul.mubr.f32.gmra.mxu0 %v267
      %v456 = vpop.f32.mrf.mxu0
      %v457 = vadd.f32 %v222, %v456
      %v458 = vpop.f32.mrf.mxu0
      %459 = vmatprep.mubr.f32.mxu0 0.0
      %460 = vmatmul.mubr.f32.gmra.mxu0 %v270
      %v461 = vpop.f32.mrf.mxu0
      %v462 = vadd.f32 %v222, %v461
      %v463 = vpop.f32.mrf.mxu0
      %464 = vmatprep.mubr.f32.mxu0 0.0
      %465 = vmatmul.mubr.f32.gmra.mxu0 %v273
      %v466 = vpop.f32.mrf.mxu0
      %v467 = vadd.f32 %v222, %v466
      %v468 = vpop.f32.mrf.mxu0
      %469 = vmatprep.mubr.f32.mxu0 0.0
      %470 = vmatmul.mubr.f32.gmra.mxu0 %v276
      %v471 = vpop.f32.mrf.mxu0
      %v472 = vadd.f32 %v222, %v471
      %v473 = vpop.f32.mrf.mxu0
      %474 = vmatprep.mubr.f32.mxu0 0.0
      %475 = vmatmul.mubr.f32.gmra.mxu0 %v279
      %v476 = vpop.f32.mrf.mxu0
      %v477 = vadd.f32 %v222, %v476
      %v478 = vpop.f32.mrf.mxu0
      %479 = vmatprep.mubr.f32.mxu0 0.0
      %480 = vmatmul.mubr.f32.gmra.mxu0 %v282
      %v481 = vpop.f32.mrf.mxu0
      %v482 = vadd.f32 %v222, %v481
      %v483 = vpop.f32.mrf.mxu0
      %484 = vmatprep.mubr.f32.mxu0 0.0
      %485 = vmatmul.mubr.f32.gmra.mxu0 %v285
      %v486 = vpop.f32.mrf.mxu0
      %v487 = vadd.f32 %v222, %v486
      %v488 = vpop.f32.mrf.mxu0
      %489 = vmatprep.mubr.f32.mxu0 0.0
      %490 = vmatmul.mubr.f32.gmra.mxu0 %v288
      %v491 = vpop.f32.mrf.mxu0
      %v492 = vadd.f32 %v222, %v491
      %v493 = vpop.f32.mrf.mxu0
      %494 = vmatprep.mubr.f32.mxu0 0.0
      %495 = vmatmul.mubr.f32.gmra.mxu0 %v291
      %v496 = vpop.f32.mrf.mxu0
      %v497 = vadd.f32 %v222, %v496
      %v498 = vpop.f32.mrf.mxu0
      %499 = vmatprep.mubr.f32.mxu0 0.0
      %500 = vmatmul.mubr.f32.gmra.mxu0 %v294
      %v501 = vpop.f32.mrf.mxu0
      %v502 = vadd.f32 %v222, %v501
      %v503 = vpop.f32.mrf.mxu0
      %504 = vmatprep.mubr.f32.mxu0 0.0
      %505 = vmatmul.mubr.f32.gmra.mxu0 %v297
      %v506 = vpop.f32.mrf.mxu0
      %v507 = vadd.f32 %v222, %v506
      %v508 = vpop.f32.mrf.mxu0
      %509 = vmatprep.mubr.f32.mxu0 0.0
      %510 = vmatmul.mubr.f32.gmra.mxu0 %v300
      %v511 = vpop.f32.mrf.mxu0
      %v512 = vadd.f32 %v222, %v511
      %v513 = vpop.f32.mrf.mxu0
      %514 = vmatprep.mubr.f32.mxu0 0.0
      %515 = vmatmul.mubr.f32.gmra.mxu0 %v303
      %v516 = vpop.f32.mrf.mxu0
      %v517 = vadd.f32 %v222, %v516
      %v518 = vpop.f32.mrf.mxu0
      %519 = vmatprep.mubr.f32.mxu0 0.0
      %520 = vmatmul.mubr.f32.gmra.mxu0 %v306
      %v521 = vpop.f32.mrf.mxu0
      %v522 = vadd.f32 %v222, %v521
      %v523 = vpop.f32.mrf.mxu0
      %524 = vmatprep.mubr.f32.mxu0 0.0
      %525 = vmatmul.mubr.f32.gmra.mxu0 %v309
      %v526 = vpop.f32.mrf.mxu0
      %v527 = vadd.f32 %v222, %v526
      %v528 = vpop.f32.mrf.mxu0
      %529 = vmatprep.mubr.f32.mxu0 0.0
      %530 = vmatmul.mubr.f32.gmra.mxu0 %v312
      %v531 = vpop.f32.mrf.mxu0
      %v532 = vadd.f32 %v222, %v531
      %v533 = vpop.f32.mrf.mxu0
      %534 = vmatprep.mubr.f32.mxu0 0.0
      %535 = vmatmul.mubr.f32.gmra.mxu0 %v315
      %v536 = vpop.f32.mrf.mxu0
      %v537 = vadd.f32 %v222, %v536
      %v538 = vpop.f32.mrf.mxu0
      %539 = vmatprep.mubr.f32.mxu0 0.0
      %540 = vmatmul.mubr.f32.gmra.mxu0 %v318
      %v541 = vpop.f32.mrf.mxu0
      %v542 = vadd.f32 %v222, %v541
      %v543 = vpop.f32.mrf.mxu0
      %544 = vdwg.mxu0
      %v545 = vmax.f32 %v387, 0.0
      %v546 = vmax.f32 %v392, 0.0
      %v547 = vmax.f32 %v397, 0.0
      %v548 = vmax.f32 %v402, 0.0
      %v549 = vmax.f32 %v407, 0.0
      %v550 = vmax.f32 %v412, 0.0
      %v551 = vmax.f32 %v417, 0.0
      %v552 = vmax.f32 %v422, 0.0
      %v553 = vmax.f32 %v427, 0.0
      %v554 = vmax.f32 %v432, 0.0
      %v555 = vmax.f32 %v437, 0.0
      %v556 = vmax.f32 %v442, 0.0
      %v557 = vmax.f32 %v447, 0.0
      %v558 = vmax.f32 %v452, 0.0
      %v559 = vmax.f32 %v457, 0.0
      %v560 = vmax.f32 %v462, 0.0
      %v561 = vmax.f32 %v467, 0.0
      %v562 = vmax.f32 %v472, 0.0
      %v563 = vmax.f32 %v477, 0.0
      %v564 = vmax.f32 %v482, 0.0
      %v565 = vmax.f32 %v487, 0.0
      %v566 = vmax.f32 %v492, 0.0
      %v567 = vmax.f32 %v497, 0.0
      %v568 = vmax.f32 %v502, 0.0
      %v569 = vmax.f32 %v507, 0.0
      %v570 = vmax.f32 %v512, 0.0
      %v571 = vmax.f32 %v517, 0.0
      %v572 = vmax.f32 %v522, 0.0
      %v573 = vmax.f32 %v527, 0.0
      %v574 = vmax.f32 %v532, 0.0
      %v575 = vmax.f32 %v537, 0.0
      %v576 = vmax.f32 %v542, 0.0
      %v577 = vld [vmem:[%s1 + $0x20] sm:$0xff]
      %v578 = vld [vmem:[%s1 + $0x28] sm:$0xff]
      %v579 = vld [vmem:[%s1 + $0x30] sm:$0xff]
      %v580 = vld [vmem:[%s1 + $0x38] sm:$0xff]
      %v582 = vsel %vm223, %v545, 0
      %v585 = vsel %vm223, %v546, 0
      %v588 = vsel %vm223, %v547, 0
      %v591 = vsel %vm223, %v548, 0
      %v594 = vsel %vm223, %v549, 0
      %v597 = vsel %vm223, %v550, 0
      %v600 = vsel %vm223, %v551, 0
      %v603 = vsel %vm223, %v552, 0
      %v606 = vsel %vm223, %v553, 0
      %v609 = vsel %vm223, %v554, 0
      %v612 = vsel %vm223, %v555, 0
      %v615 = vsel %vm223, %v556, 0
      %v618 = vsel %vm223, %v557, 0
      %v621 = vsel %vm223, %v558, 0
      %v624 = vsel %vm223, %v559, 0
      %v627 = vsel %vm223, %v560, 0
      %v630 = vsel %vm223, %v561, 0
      %v633 = vsel %vm223, %v562, 0
      %v636 = vsel %vm223, %v563, 0
      %v639 = vsel %vm223, %v564, 0
      %v642 = vsel %vm223, %v565, 0
      %v645 = vsel %vm223, %v566, 0
      %v648 = vsel %vm223, %v567, 0
      %v651 = vsel %vm223, %v568, 0
      %v654 = vsel %vm223, %v569, 0
      %v657 = vsel %vm223, %v570, 0
      %v660 = vsel %vm223, %v571, 0
      %v663 = vsel %vm223, %v572, 0
      %v666 = vsel %vm223, %v573, 0
      %v669 = vsel %vm223, %v574, 0
      %v672 = vsel %vm223, %v575, 0
      %v675 = vsel %vm223, %v576, 0
      %677 = vmatprep.subr.mxu0 0.0
      %678 = vmatpush1.msra.mxu0 0.0
      %679 = vmatprep.subr.mxu0 0.0
      %680 = vmatpush1.msra.mxu0 0.0
      %681 = vmatprep.subr.mxu0 0.0
      %682 = vmatpush1.msra.mxu0 0.0
      %683 = vmatprep.subr.mxu0 0.0
      %684 = vmatpush1.msra.mxu0 0.0
      %685 = vmatprep.subr.mxu0 0.0
      %686 = vmatpush1.msra.mxu0 0.0
      %687 = vmatprep.subr.mxu0 0.0
      %688 = vmatpush1.msra.mxu0 0.0
      %689 = vmatprep.subr.mxu0 0.0
      %690 = vmatpush1.msra.mxu0 0.0
      %691 = vmatprep.subr.mxu0 0.0
      %692 = vmatpush1.msra.mxu0 0.0
      %693 = vmatprep.subr.mxu0 0.0
      %694 = vmatpush1.msra.mxu0 0.0
      %695 = vmatprep.subr.mxu0 0.0
      %696 = vmatpush1.msra.mxu0 0.0
      %697 = vmatprep.subr.mxu0 0.0
      %698 = vmatpush1.msra.mxu0 0.0
      %699 = vmatprep.subr.mxu0 0.0
      %700 = vmatpush1.msra.mxu0 0.0
      %701 = vmatprep.subr.mxu0 0.0
      %702 = vmatpush1.msra.mxu0 %v580
      %703 = vmatprep.subr.mxu0 0.0
      %704 = vmatpush1.msra.mxu0 %v579
      %705 = vmatprep.subr.mxu0 0.0
      %706 = vmatpush1.msra.mxu0 %v578
      %707 = vmatprep.subr.mxu0 0.0
      %708 = vmatpush1.msra.mxu0 %v577
      %709 = vmatprep.subr.mxu0 0.0
      %710 = vmatpush2.msra.mxu0 0.0
      %711 = vmatprep.subr.mxu0 0.0
      %712 = vmatpush2.msra.mxu0 0.0
      %713 = vmatprep.subr.mxu0 0.0
      %714 = vmatpush2.msra.mxu0 0.0
      %715 = vmatprep.subr.mxu0 0.0
      %716 = vmatpush2.msra.mxu0 0.0
      %717 = vmatprep.subr.mxu0 0.0
      %718 = vmatpush2.msra.mxu0 0.0
      %719 = vmatprep.subr.mxu0 0.0
      %720 = vmatpush2.msra.mxu0 0.0
      %721 = vmatprep.subr.mxu0 0.0
      %722 = vmatpush2.msra.mxu0 0.0
      %723 = vmatprep.subr.mxu0 0.0
      %724 = vmatpush2.msra.mxu0 0.0
      %725 = vmatprep.subr.mxu0 0.0
      %726 = vmatpush2.msra.mxu0 0.0
      %727 = vmatprep.subr.mxu0 0.0
      %728 = vmatpush2.msra.mxu0 0.0
      %729 = vmatprep.subr.mxu0 0.0
      %730 = vmatpush2.msra.mxu0 0.0
      %731 = vmatprep.subr.mxu0 0.0
      %732 = vmatpush2.msra.mxu0 0.0
      %733 = vmatprep.subr.mxu0 0.0
      %734 = vmatpush2.msra.mxu0 0.0
      %735 = vmatprep.subr.mxu0 0.0
      %736 = vmatpush2.msra.mxu0 0.0
      %737 = vmatprep.subr.mxu0 0.0
      %738 = vmatpush2.msra.mxu0 0.0
      %739 = vmatprep.subr.mxu0 0.0
      %740 = vmatpush2.msra.mxu0 0.0
      %741 = vmatprep.mubr.f32.mxu0 0.0
      %742 = vmatmul.mubr.f32.gmra.mxu0 %v582
      %v743 = vpop.f32.mrf.mxu0
      %v744 = vadd.f32 0.0, %v743
      %v745 = vpop.f32.mrf.mxu0
      %746 = vmatprep.mubr.f32.mxu0 0.0
      %747 = vmatmul.mubr.f32.gmra.mxu0 %v585
      %v748 = vpop.f32.mrf.mxu0
      %v749 = vadd.f32 0.0, %v748
      %v750 = vpop.f32.mrf.mxu0
      %751 = vmatprep.mubr.f32.mxu0 0.0
      %752 = vmatmul.mubr.f32.gmra.mxu0 %v588
      %v753 = vpop.f32.mrf.mxu0
      %v754 = vadd.f32 0.0, %v753
      %v755 = vpop.f32.mrf.mxu0
      %756 = vmatprep.mubr.f32.mxu0 0.0
      %757 = vmatmul.mubr.f32.gmra.mxu0 %v591
      %v758 = vpop.f32.mrf.mxu0
      %v759 = vadd.f32 0.0, %v758
      %v760 = vpop.f32.mrf.mxu0
      %761 = vmatprep.mubr.f32.mxu0 0.0
      %762 = vmatmul.mubr.f32.gmra.mxu0 %v594
      %v763 = vpop.f32.mrf.mxu0
      %v764 = vadd.f32 0.0, %v763
      %v765 = vpop.f32.mrf.mxu0
      %766 = vmatprep.mubr.f32.mxu0 0.0
      %767 = vmatmul.mubr.f32.gmra.mxu0 %v597
      %v768 = vpop.f32.mrf.mxu0
      %v769 = vadd.f32 0.0, %v768
      %v770 = vpop.f32.mrf.mxu0
      %771 = vmatprep.mubr.f32.mxu0 0.0
      %772 = vmatmul.mubr.f32.gmra.mxu0 %v600
      %v773 = vpop.f32.mrf.mxu0
      %v774 = vadd.f32 0.0, %v773
      %v775 = vpop.f32.mrf.mxu0
      %776 = vmatprep.mubr.f32.mxu0 0.0
      %777 = vmatmul.mubr.f32.gmra.mxu0 %v603
      %v778 = vpop.f32.mrf.mxu0
      %v779 = vadd.f32 0.0, %v778
      %v780 = vpop.f32.mrf.mxu0
      %781 = vmatprep.mubr.f32.mxu0 0.0
      %782 = vmatmul.mubr.f32.gmra.mxu0 %v606
      %v783 = vpop.f32.mrf.mxu0
      %v784 = vadd.f32 0.0, %v783
      %v785 = vpop.f32.mrf.mxu0
      %786 = vmatprep.mubr.f32.mxu0 0.0
      %787 = vmatmul.mubr.f32.gmra.mxu0 %v609
      %v788 = vpop.f32.mrf.mxu0
      %v789 = vadd.f32 0.0, %v788
      %v790 = vpop.f32.mrf.mxu0
      %791 = vmatprep.mubr.f32.mxu0 0.0
      %792 = vmatmul.mubr.f32.gmra.mxu0 %v612
      %v793 = vpop.f32.mrf.mxu0
      %v794 = vadd.f32 0.0, %v793
      %v795 = vpop.f32.mrf.mxu0
      %796 = vmatprep.mubr.f32.mxu0 0.0
      %797 = vmatmul.mubr.f32.gmra.mxu0 %v615
      %v798 = vpop.f32.mrf.mxu0
      %v799 = vadd.f32 0.0, %v798
      %v800 = vpop.f32.mrf.mxu0
      %801 = vmatprep.mubr.f32.mxu0 0.0
      %802 = vmatmul.mubr.f32.gmra.mxu0 %v618
      %v803 = vpop.f32.mrf.mxu0
      %v804 = vadd.f32 0.0, %v803
      %v805 = vpop.f32.mrf.mxu0
      %806 = vmatprep.mubr.f32.mxu0 0.0
      %807 = vmatmul.mubr.f32.gmra.mxu0 %v621
      %v808 = vpop.f32.mrf.mxu0
      %v809 = vadd.f32 0.0, %v808
      %v810 = vpop.f32.mrf.mxu0
      %811 = vmatprep.mubr.f32.mxu0 0.0
      %812 = vmatmul.mubr.f32.gmra.mxu0 %v624
      %v813 = vpop.f32.mrf.mxu0
      %v814 = vadd.f32 0.0, %v813
      %v815 = vpop.f32.mrf.mxu0
      %816 = vmatprep.mubr.f32.mxu0 0.0
      %817 = vmatmul.mubr.f32.gmra.mxu0 %v627
      %v818 = vpop.f32.mrf.mxu0
      %v819 = vadd.f32 0.0, %v818
      %v820 = vpop.f32.mrf.mxu0
      %821 = vmatprep.mubr.f32.mxu0 0.0
      %822 = vmatmul.mubr.f32.gmra.mxu0 %v630
      %v823 = vpop.f32.mrf.mxu0
      %v824 = vadd.f32 0.0, %v823
      %v825 = vpop.f32.mrf.mxu0
      %826 = vmatprep.mubr.f32.mxu0 0.0
      %827 = vmatmul.mubr.f32.gmra.mxu0 %v633
      %v828 = vpop.f32.mrf.mxu0
      %v829 = vadd.f32 0.0, %v828
      %v830 = vpop.f32.mrf.mxu0
      %831 = vmatprep.mubr.f32.mxu0 0.0
      %832 = vmatmul.mubr.f32.gmra.mxu0 %v636
      %v833 = vpop.f32.mrf.mxu0
      %v834 = vadd.f32 0.0, %v833
      %v835 = vpop.f32.mrf.mxu0
      %836 = vmatprep.mubr.f32.mxu0 0.0
      %837 = vmatmul.mubr.f32.gmra.mxu0 %v639
      %v838 = vpop.f32.mrf.mxu0
      %v839 = vadd.f32 0.0, %v838
      %v840 = vpop.f32.mrf.mxu0
      %841 = vmatprep.mubr.f32.mxu0 0.0
      %842 = vmatmul.mubr.f32.gmra.mxu0 %v642
      %v843 = vpop.f32.mrf.mxu0
      %v844 = vadd.f32 0.0, %v843
      %v845 = vpop.f32.mrf.mxu0
      %846 = vmatprep.mubr.f32.mxu0 0.0
      %847 = vmatmul.mubr.f32.gmra.mxu0 %v645
      %v848 = vpop.f32.mrf.mxu0
      %v849 = vadd.f32 0.0, %v848
      %v850 = vpop.f32.mrf.mxu0
      %851 = vmatprep.mubr.f32.mxu0 0.0
      %852 = vmatmul.mubr.f32.gmra.mxu0 %v648
      %v853 = vpop.f32.mrf.mxu0
      %v854 = vadd.f32 0.0, %v853
      %v855 = vpop.f32.mrf.mxu0
      %856 = vmatprep.mubr.f32.mxu0 0.0
      %857 = vmatmul.mubr.f32.gmra.mxu0 %v651
      %v858 = vpop.f32.mrf.mxu0
      %v859 = vadd.f32 0.0, %v858
      %v860 = vpop.f32.mrf.mxu0
      %861 = vmatprep.mubr.f32.mxu0 0.0
      %862 = vmatmul.mubr.f32.gmra.mxu0 %v654
      %v863 = vpop.f32.mrf.mxu0
      %v864 = vadd.f32 0.0, %v863
      %v865 = vpop.f32.mrf.mxu0
      %866 = vmatprep.mubr.f32.mxu0 0.0
      %867 = vmatmul.mubr.f32.gmra.mxu0 %v657
      %v868 = vpop.f32.mrf.mxu0
      %v869 = vadd.f32 0.0, %v868
      %v870 = vpop.f32.mrf.mxu0
      %871 = vmatprep.mubr.f32.mxu0 0.0
      %872 = vmatmul.mubr.f32.gmra.mxu0 %v660
      %v873 = vpop.f32.mrf.mxu0
      %v874 = vadd.f32 0.0, %v873
      %v875 = vpop.f32.mrf.mxu0
      %876 = vmatprep.mubr.f32.mxu0 0.0
      %877 = vmatmul.mubr.f32.gmra.mxu0 %v663
      %v878 = vpop.f32.mrf.mxu0
      %v879 = vadd.f32 0.0, %v878
      %v880 = vpop.f32.mrf.mxu0
      %881 = vmatprep.mubr.f32.mxu0 0.0
      %882 = vmatmul.mubr.f32.gmra.mxu0 %v666
      %v883 = vpop.f32.mrf.mxu0
      %v884 = vadd.f32 0.0, %v883
      %v885 = vpop.f32.mrf.mxu0
      %886 = vmatprep.mubr.f32.mxu0 0.0
      %887 = vmatmul.mubr.f32.gmra.mxu0 %v669
      %v888 = vpop.f32.mrf.mxu0
      %v889 = vadd.f32 0.0, %v888
      %v890 = vpop.f32.mrf.mxu0
      %891 = vmatprep.mubr.f32.mxu0 0.0
      %892 = vmatmul.mubr.f32.gmra.mxu0 %v672
      %v893 = vpop.f32.mrf.mxu0
      %v894 = vadd.f32 0.0, %v893
      %v895 = vpop.f32.mrf.mxu0
      %896 = vmatprep.mubr.f32.mxu0 0.0
      %897 = vmatmul.mubr.f32.gmra.mxu0 %v675
      %v898 = vpop.f32.mrf.mxu0
      %v899 = vadd.f32 0.0, %v898
      %v900 = vpop.f32.mrf.mxu0
      %901 = vdwg.mxu0
      %v903 = vsel %vm223, %v182, 0
      %v906 = vsel %vm223, %v183, 0
      %v909 = vsel %vm223, %v184, 0
      %v912 = vsel %vm223, %v185, 0
      %914 = vmatprep.subr.mxu0 0.0
      %915 = vmatpush1.msra.mxu0 0.0
      %916 = vmatprep.subr.mxu0 0.0
      %917 = vmatpush1.msra.mxu0 0.0
      %918 = vmatprep.subr.mxu0 0.0
      %919 = vmatpush1.msra.mxu0 0.0
      %920 = vmatprep.subr.mxu0 0.0
      %921 = vmatpush1.msra.mxu0 0.0
      %922 = vmatprep.subr.mxu0 0.0
      %923 = vmatpush1.msra.mxu0 0.0
      %924 = vmatprep.subr.mxu0 0.0
      %925 = vmatpush1.msra.mxu0 0.0
      %926 = vmatprep.subr.mxu0 0.0
      %927 = vmatpush1.msra.mxu0 0.0
      %928 = vmatprep.subr.mxu0 0.0
      %929 = vmatpush1.msra.mxu0 0.0
      %930 = vmatprep.subr.mxu0 0.0
      %931 = vmatpush1.msra.mxu0 0.0
      %932 = vmatprep.subr.mxu0 0.0
      %933 = vmatpush1.msra.mxu0 0.0
      %934 = vmatprep.subr.mxu0 0.0
      %935 = vmatpush1.msra.mxu0 0.0
      %936 = vmatprep.subr.mxu0 0.0
      %937 = vmatpush1.msra.mxu0 0.0
      %938 = vmatprep.subr.mxu0 0.0
      %939 = vmatpush1.msra.mxu0 %v759
      %940 = vmatprep.subr.mxu0 0.0
      %941 = vmatpush1.msra.mxu0 %v754
      %942 = vmatprep.subr.mxu0 0.0
      %943 = vmatpush1.msra.mxu0 %v749
      %944 = vmatprep.subr.mxu0 0.0
      %945 = vmatpush1.msra.mxu0 %v744
      %946 = vmatprep.subr.mxu0 0.0
      %947 = vmatpush2.msra.mxu0 0.0
      %948 = vmatprep.subr.mxu0 0.0
      %949 = vmatpush2.msra.mxu0 0.0
      %950 = vmatprep.subr.mxu0 0.0
      %951 = vmatpush2.msra.mxu0 0.0
      %952 = vmatprep.subr.mxu0 0.0
      %953 = vmatpush2.msra.mxu0 0.0
      %954 = vmatprep.subr.mxu0 0.0
      %955 = vmatpush2.msra.mxu0 0.0
      %956 = vmatprep.subr.mxu0 0.0
      %957 = vmatpush2.msra.mxu0 0.0
      %958 = vmatprep.subr.mxu0 0.0
      %959 = vmatpush2.msra.mxu0 0.0
      %960 = vmatprep.subr.mxu0 0.0
      %961 = vmatpush2.msra.mxu0 0.0
      %962 = vmatprep.subr.mxu0 0.0
      %963 = vmatpush2.msra.mxu0 0.0
      %964 = vmatprep.subr.mxu0 0.0
      %965 = vmatpush2.msra.mxu0 0.0
      %966 = vmatprep.subr.mxu0 0.0
      %967 = vmatpush2.msra.mxu0 0.0
      %968 = vmatprep.subr.mxu0 0.0
      %969 = vmatpush2.msra.mxu0 0.0
      %970 = vmatprep.subr.mxu0 0.0
      %971 = vmatpush2.msra.mxu0 0.0
      %972 = vmatprep.subr.mxu0 0.0
      %973 = vmatpush2.msra.mxu0 0.0
      %974 = vmatprep.subr.mxu0 0.0
      %975 = vmatpush2.msra.mxu0 0.0
      %976 = vmatprep.subr.mxu0 0.0
      %977 = vmatpush2.msra.mxu0 0.0
      %978 = vmatprep.mubr.f32.mxu0 0.0
      %979 = vmatmul.mubr.f32.gmra.mxu0 %v903
      %v980 = vpop.f32.mrf.mxu0
      %v981 = vadd.f32 0.0, %v980
      %v982 = vpop.f32.mrf.mxu0
      %983 = vmatprep.mubr.f32.mxu0 0.0
      %984 = vmatmul.mubr.f32.gmra.mxu0 %v906
      %v985 = vpop.f32.mrf.mxu0
      %v986 = vadd.f32 0.0, %v985
      %v987 = vpop.f32.mrf.mxu0
      %988 = vmatprep.mubr.f32.mxu0 0.0
      %989 = vmatmul.mubr.f32.gmra.mxu0 %v909
      %v990 = vpop.f32.mrf.mxu0
      %v991 = vadd.f32 0.0, %v990
      %v992 = vpop.f32.mrf.mxu0
      %993 = vmatprep.mubr.f32.mxu0 0.0
      %994 = vmatmul.mubr.f32.gmra.mxu0 %v912
      %v995 = vpop.f32.mrf.mxu0
      %v996 = vadd.f32 0.0, %v995
      %v997 = vpop.f32.mrf.mxu0
      %998 = vdwg.mxu0
      %v1000 = vsel %vm223, %v186, 0
      %v1003 = vsel %vm223, %v187, 0
      %v1006 = vsel %vm223, %v188, 0
      %v1009 = vsel %vm223, %v189, 0
      %1011 = vmatprep.subr.mxu0 0.0
      %1012 = vmatpush1.msra.mxu0 0.0
      %1013 = vmatprep.subr.mxu0 0.0
      %1014 = vmatpush1.msra.mxu0 0.0
      %1015 = vmatprep.subr.mxu0 0.0
      %1016 = vmatpush1.msra.mxu0 0.0
      %1017 = vmatprep.subr.mxu0 0.0
      %1018 = vmatpush1.msra.mxu0 0.0
      %1019 = vmatprep.subr.mxu0 0.0
      %1020 = vmatpush1.msra.mxu0 0.0
      %1021 = vmatprep.subr.mxu0 0.0
      %1022 = vmatpush1.msra.mxu0 0.0
      %1023 = vmatprep.subr.mxu0 0.0
      %1024 = vmatpush1.msra.mxu0 0.0
      %1025 = vmatprep.subr.mxu0 0.0
      %1026 = vmatpush1.msra.mxu0 0.0
      %1027 = vmatprep.subr.mxu0 0.0
      %1028 = vmatpush1.msra.mxu0 0.0
      %1029 = vmatprep.subr.mxu0 0.0
      %1030 = vmatpush1.msra.mxu0 0.0
      %1031 = vmatprep.subr.mxu0 0.0
      %1032 = vmatpush1.msra.mxu0 0.0
      %1033 = vmatprep.subr.mxu0 0.0
      %1034 = vmatpush1.msra.mxu0 0.0
      %1035 = vmatprep.subr.mxu0 0.0
      %1036 = vmatpush1.msra.mxu0 %v779
      %1037 = vmatprep.subr.mxu0 0.0
      %1038 = vmatpush1.msra.mxu0 %v774
      %1039 = vmatprep.subr.mxu0 0.0
      %1040 = vmatpush1.msra.mxu0 %v769
      %1041 = vmatprep.subr.mxu0 0.0
      %1042 = vmatpush1.msra.mxu0 %v764
      %1043 = vmatprep.subr.mxu0 0.0
      %1044 = vmatpush2.msra.mxu0 0.0
      %1045 = vmatprep.subr.mxu0 0.0
      %1046 = vmatpush2.msra.mxu0 0.0
      %1047 = vmatprep.subr.mxu0 0.0
      %1048 = vmatpush2.msra.mxu0 0.0
      %1049 = vmatprep.subr.mxu0 0.0
      %1050 = vmatpush2.msra.mxu0 0.0
      %1051 = vmatprep.subr.mxu0 0.0
      %1052 = vmatpush2.msra.mxu0 0.0
      %1053 = vmatprep.subr.mxu0 0.0
      %1054 = vmatpush2.msra.mxu0 0.0
      %1055 = vmatprep.subr.mxu0 0.0
      %1056 = vmatpush2.msra.mxu0 0.0
      %1057 = vmatprep.subr.mxu0 0.0
      %1058 = vmatpush2.msra.mxu0 0.0
      %1059 = vmatprep.subr.mxu0 0.0
      %1060 = vmatpush2.msra.mxu0 0.0
      %1061 = vmatprep.subr.mxu0 0.0
      %1062 = vmatpush2.msra.mxu0 0.0
      %1063 = vmatprep.subr.mxu0 0.0
      %1064 = vmatpush2.msra.mxu0 0.0
      %1065 = vmatprep.subr.mxu0 0.0
      %1066 = vmatpush2.msra.mxu0 0.0
      %1067 = vmatprep.subr.mxu0 0.0
      %1068 = vmatpush2.msra.mxu0 0.0
      %1069 = vmatprep.subr.mxu0 0.0
      %1070 = vmatpush2.msra.mxu0 0.0
      %1071 = vmatprep.subr.mxu0 0.0
      %1072 = vmatpush2.msra.mxu0 0.0
      %1073 = vmatprep.subr.mxu0 0.0
      %1074 = vmatpush2.msra.mxu0 0.0
      %1075 = vmatprep.mubr.f32.mxu0 0.0
      %1076 = vmatmul.mubr.f32.gmra.mxu0 %v1000
      %v1077 = vpop.f32.mrf.mxu0
      %v1078 = vadd.f32 0.0, %v1077
      %v1079 = vpop.f32.mrf.mxu0
      %1080 = vmatprep.mubr.f32.mxu0 0.0
      %1081 = vmatmul.mubr.f32.gmra.mxu0 %v1003
      %v1082 = vpop.f32.mrf.mxu0
      %v1083 = vadd.f32 0.0, %v1082
      %v1084 = vpop.f32.mrf.mxu0
      %1085 = vmatprep.mubr.f32.mxu0 0.0
      %1086 = vmatmul.mubr.f32.gmra.mxu0 %v1006
      %v1087 = vpop.f32.mrf.mxu0
      %v1088 = vadd.f32 0.0, %v1087
      %v1089 = vpop.f32.mrf.mxu0
      %1090 = vmatprep.mubr.f32.mxu0 0.0
      %1091 = vmatmul.mubr.f32.gmra.mxu0 %v1009
      %v1092 = vpop.f32.mrf.mxu0
      %v1093 = vadd.f32 0.0, %v1092
      %v1094 = vpop.f32.mrf.mxu0
      %1095 = vdwg.mxu0
      %v1097 = vsel %vm223, %v190, 0
      %v1100 = vsel %vm223, %v191, 0
      %v1103 = vsel %vm223, %v192, 0
      %v1106 = vsel %vm223, %v193, 0
      %1108 = vmatprep.subr.mxu0 0.0
      %1109 = vmatpush1.msra.mxu0 0.0
      %1110 = vmatprep.subr.mxu0 0.0
      %1111 = vmatpush1.msra.mxu0 0.0
      %1112 = vmatprep.subr.mxu0 0.0
      %1113 = vmatpush1.msra.mxu0 0.0
      %1114 = vmatprep.subr.mxu0 0.0
      %1115 = vmatpush1.msra.mxu0 0.0
      %1116 = vmatprep.subr.mxu0 0.0
      %1117 = vmatpush1.msra.mxu0 0.0
      %1118 = vmatprep.subr.mxu0 0.0
      %1119 = vmatpush1.msra.mxu0 0.0
      %1120 = vmatprep.subr.mxu0 0.0
      %1121 = vmatpush1.msra.mxu0 0.0
      %1122 = vmatprep.subr.mxu0 0.0
      %1123 = vmatpush1.msra.mxu0 0.0
      %1124 = vmatprep.subr.mxu0 0.0
      %1125 = vmatpush1.msra.mxu0 0.0
      %1126 = vmatprep.subr.mxu0 0.0
      %1127 = vmatpush1.msra.mxu0 0.0
      %1128 = vmatprep.subr.mxu0 0.0
      %1129 = vmatpush1.msra.mxu0 0.0
      %1130 = vmatprep.subr.mxu0 0.0
      %1131 = vmatpush1.msra.mxu0 0.0
      %1132 = vmatprep.subr.mxu0 0.0
      %1133 = vmatpush1.msra.mxu0 %v799
      %1134 = vmatprep.subr.mxu0 0.0
      %1135 = vmatpush1.msra.mxu0 %v794
      %1136 = vmatprep.subr.mxu0 0.0
      %1137 = vmatpush1.msra.mxu0 %v789
      %1138 = vmatprep.subr.mxu0 0.0
      %1139 = vmatpush1.msra.mxu0 %v784
      %1140 = vmatprep.subr.mxu0 0.0
      %1141 = vmatpush2.msra.mxu0 0.0
      %1142 = vmatprep.subr.mxu0 0.0
      %1143 = vmatpush2.msra.mxu0 0.0
      %1144 = vmatprep.subr.mxu0 0.0
      %1145 = vmatpush2.msra.mxu0 0.0
      %1146 = vmatprep.subr.mxu0 0.0
      %1147 = vmatpush2.msra.mxu0 0.0
      %1148 = vmatprep.subr.mxu0 0.0
      %1149 = vmatpush2.msra.mxu0 0.0
      %1150 = vmatprep.subr.mxu0 0.0
      %1151 = vmatpush2.msra.mxu0 0.0
      %1152 = vmatprep.subr.mxu0 0.0
      %1153 = vmatpush2.msra.mxu0 0.0
      %1154 = vmatprep.subr.mxu0 0.0
      %1155 = vmatpush2.msra.mxu0 0.0
      %1156 = vmatprep.subr.mxu0 0.0
      %1157 = vmatpush2.msra.mxu0 0.0
      %1158 = vmatprep.subr.mxu0 0.0
      %1159 = vmatpush2.msra.mxu0 0.0
      %1160 = vmatprep.subr.mxu0 0.0
      %1161 = vmatpush2.msra.mxu0 0.0
      %1162 = vmatprep.subr.mxu0 0.0
      %1163 = vmatpush2.msra.mxu0 0.0
      %1164 = vmatprep.subr.mxu0 0.0
      %1165 = vmatpush2.msra.mxu0 0.0
      %1166 = vmatprep.subr.mxu0 0.0
      %1167 = vmatpush2.msra.mxu0 0.0
      %1168 = vmatprep.subr.mxu0 0.0
      %1169 = vmatpush2.msra.mxu0 0.0
      %1170 = vmatprep.subr.mxu0 0.0
      %1171 = vmatpush2.msra.mxu0 0.0
      %1172 = vmatprep.mubr.f32.mxu0 0.0
      %1173 = vmatmul.mubr.f32.gmra.mxu0 %v1097
      %v1174 = vpop.f32.mrf.mxu0
      %v1175 = vadd.f32 0.0, %v1174
      %v1176 = vpop.f32.mrf.mxu0
      %1177 = vmatprep.mubr.f32.mxu0 0.0
      %1178 = vmatmul.mubr.f32.gmra.mxu0 %v1100
      %v1179 = vpop.f32.mrf.mxu0
      %v1180 = vadd.f32 0.0, %v1179
      %v1181 = vpop.f32.mrf.mxu0
      %1182 = vmatprep.mubr.f32.mxu0 0.0
      %1183 = vmatmul.mubr.f32.gmra.mxu0 %v1103
      %v1184 = vpop.f32.mrf.mxu0
      %v1185 = vadd.f32 0.0, %v1184
      %v1186 = vpop.f32.mrf.mxu0
      %1187 = vmatprep.mubr.f32.mxu0 0.0
      %1188 = vmatmul.mubr.f32.gmra.mxu0 %v1106
      %v1189 = vpop.f32.mrf.mxu0
      %v1190 = vadd.f32 0.0, %v1189
      %v1191 = vpop.f32.mrf.mxu0
      %1192 = vdwg.mxu0
      %v1194 = vsel %vm223, %v194, 0
      %v1197 = vsel %vm223, %v195, 0
      %v1200 = vsel %vm223, %v196, 0
      %v1203 = vsel %vm223, %v197, 0
      %1205 = vmatprep.subr.mxu0 0.0
      %1206 = vmatpush1.msra.mxu0 0.0
      %1207 = vmatprep.subr.mxu0 0.0
      %1208 = vmatpush1.msra.mxu0 0.0
      %1209 = vmatprep.subr.mxu0 0.0
      %1210 = vmatpush1.msra.mxu0 0.0
      %1211 = vmatprep.subr.mxu0 0.0
      %1212 = vmatpush1.msra.mxu0 0.0
      %1213 = vmatprep.subr.mxu0 0.0
      %1214 = vmatpush1.msra.mxu0 0.0
      %1215 = vmatprep.subr.mxu0 0.0
      %1216 = vmatpush1.msra.mxu0 0.0
      %1217 = vmatprep.subr.mxu0 0.0
      %1218 = vmatpush1.msra.mxu0 0.0
      %1219 = vmatprep.subr.mxu0 0.0
      %1220 = vmatpush1.msra.mxu0 0.0
      %1221 = vmatprep.subr.mxu0 0.0
      %1222 = vmatpush1.msra.mxu0 0.0
      %1223 = vmatprep.subr.mxu0 0.0
      %1224 = vmatpush1.msra.mxu0 0.0
      %1225 = vmatprep.subr.mxu0 0.0
      %1226 = vmatpush1.msra.mxu0 0.0
      %1227 = vmatprep.subr.mxu0 0.0
      %1228 = vmatpush1.msra.mxu0 0.0
      %1229 = vmatprep.subr.mxu0 0.0
      %1230 = vmatpush1.msra.mxu0 %v819
      %1231 = vmatprep.subr.mxu0 0.0
      %1232 = vmatpush1.msra.mxu0 %v814
      %1233 = vmatprep.subr.mxu0 0.0
      %1234 = vmatpush1.msra.mxu0 %v809
      %1235 = vmatprep.subr.mxu0 0.0
      %1236 = vmatpush1.msra.mxu0 %v804
      %1237 = vmatprep.subr.mxu0 0.0
      %1238 = vmatpush2.msra.mxu0 0.0
      %1239 = vmatprep.subr.mxu0 0.0
      %1240 = vmatpush2.msra.mxu0 0.0
      %1241 = vmatprep.subr.mxu0 0.0
      %1242 = vmatpush2.msra.mxu0 0.0
      %1243 = vmatprep.subr.mxu0 0.0
      %1244 = vmatpush2.msra.mxu0 0.0
      %1245 = vmatprep.subr.mxu0 0.0
      %1246 = vmatpush2.msra.mxu0 0.0
      %1247 = vmatprep.subr.mxu0 0.0
      %1248 = vmatpush2.msra.mxu0 0.0
      %1249 = vmatprep.subr.mxu0 0.0
      %1250 = vmatpush2.msra.mxu0 0.0
      %1251 = vmatprep.subr.mxu0 0.0
      %1252 = vmatpush2.msra.mxu0 0.0
      %1253 = vmatprep.subr.mxu0 0.0
      %1254 = vmatpush2.msra.mxu0 0.0
      %1255 = vmatprep.subr.mxu0 0.0
      %1256 = vmatpush2.msra.mxu0 0.0
      %1257 = vmatprep.subr.mxu0 0.0
      %1258 = vmatpush2.msra.mxu0 0.0
      %1259 = vmatprep.subr.mxu0 0.0
      %1260 = vmatpush2.msra.mxu0 0.0
      %1261 = vmatprep.subr.mxu0 0.0
      %1262 = vmatpush2.msra.mxu0 0.0
      %1263 = vmatprep.subr.mxu0 0.0
      %1264 = vmatpush2.msra.mxu0 0.0
      %1265 = vmatprep.subr.mxu0 0.0
      %1266 = vmatpush2.msra.mxu0 0.0
      %1267 = vmatprep.subr.mxu0 0.0
      %1268 = vmatpush2.msra.mxu0 0.0
      %1269 = vmatprep.mubr.f32.mxu0 0.0
      %1270 = vmatmul.mubr.f32.gmra.mxu0 %v1194
      %v1271 = vpop.f32.mrf.mxu0
      %v1272 = vadd.f32 0.0, %v1271
      %v1273 = vpop.f32.mrf.mxu0
      %1274 = vmatprep.mubr.f32.mxu0 0.0
      %1275 = vmatmul.mubr.f32.gmra.mxu0 %v1197
      %v1276 = vpop.f32.mrf.mxu0
      %v1277 = vadd.f32 0.0, %v1276
      %v1278 = vpop.f32.mrf.mxu0
      %1279 = vmatprep.mubr.f32.mxu0 0.0
      %1280 = vmatmul.mubr.f32.gmra.mxu0 %v1200
      %v1281 = vpop.f32.mrf.mxu0
      %v1282 = vadd.f32 0.0, %v1281
      %v1283 = vpop.f32.mrf.mxu0
      %1284 = vmatprep.mubr.f32.mxu0 0.0
      %1285 = vmatmul.mubr.f32.gmra.mxu0 %v1203
      %v1286 = vpop.f32.mrf.mxu0
      %v1287 = vadd.f32 0.0, %v1286
      %v1288 = vpop.f32.mrf.mxu0
      %1289 = vdwg.mxu0
      %v1291 = vsel %vm223, %v198, 0
      %v1294 = vsel %vm223, %v199, 0
      %v1297 = vsel %vm223, %v200, 0
      %v1300 = vsel %vm223, %v201, 0
      %1302 = vmatprep.subr.mxu0 0.0
      %1303 = vmatpush1.msra.mxu0 0.0
      %1304 = vmatprep.subr.mxu0 0.0
      %1305 = vmatpush1.msra.mxu0 0.0
      %1306 = vmatprep.subr.mxu0 0.0
      %1307 = vmatpush1.msra.mxu0 0.0
      %1308 = vmatprep.subr.mxu0 0.0
      %1309 = vmatpush1.msra.mxu0 0.0
      %1310 = vmatprep.subr.mxu0 0.0
      %1311 = vmatpush1.msra.mxu0 0.0
      %1312 = vmatprep.subr.mxu0 0.0
      %1313 = vmatpush1.msra.mxu0 0.0
      %1314 = vmatprep.subr.mxu0 0.0
      %1315 = vmatpush1.msra.mxu0 0.0
      %1316 = vmatprep.subr.mxu0 0.0
      %1317 = vmatpush1.msra.mxu0 0.0
      %1318 = vmatprep.subr.mxu0 0.0
      %1319 = vmatpush1.msra.mxu0 0.0
      %1320 = vmatprep.subr.mxu0 0.0
      %1321 = vmatpush1.msra.mxu0 0.0
      %1322 = vmatprep.subr.mxu0 0.0
      %1323 = vmatpush1.msra.mxu0 0.0
      %1324 = vmatprep.subr.mxu0 0.0
      %1325 = vmatpush1.msra.mxu0 0.0
      %1326 = vmatprep.subr.mxu0 0.0
      %1327 = vmatpush1.msra.mxu0 %v839
      %1328 = vmatprep.subr.mxu0 0.0
      %1329 = vmatpush1.msra.mxu0 %v834
      %1330 = vmatprep.subr.mxu0 0.0
      %1331 = vmatpush1.msra.mxu0 %v829
      %1332 = vmatprep.subr.mxu0 0.0
      %1333 = vmatpush1.msra.mxu0 %v824
      %1334 = vmatprep.subr.mxu0 0.0
      %1335 = vmatpush2.msra.mxu0 0.0
      %1336 = vmatprep.subr.mxu0 0.0
      %1337 = vmatpush2.msra.mxu0 0.0
      %1338 = vmatprep.subr.mxu0 0.0
      %1339 = vmatpush2.msra.mxu0 0.0
      %1340 = vmatprep.subr.mxu0 0.0
      %1341 = vmatpush2.msra.mxu0 0.0
      %1342 = vmatprep.subr.mxu0 0.0
      %1343 = vmatpush2.msra.mxu0 0.0
      %1344 = vmatprep.subr.mxu0 0.0
      %1345 = vmatpush2.msra.mxu0 0.0
      %1346 = vmatprep.subr.mxu0 0.0
      %1347 = vmatpush2.msra.mxu0 0.0
      %1348 = vmatprep.subr.mxu0 0.0
      %1349 = vmatpush2.msra.mxu0 0.0
      %1350 = vmatprep.subr.mxu0 0.0
      %1351 = vmatpush2.msra.mxu0 0.0
      %1352 = vmatprep.subr.mxu0 0.0
      %1353 = vmatpush2.msra.mxu0 0.0
      %1354 = vmatprep.subr.mxu0 0.0
      %1355 = vmatpush2.msra.mxu0 0.0
      %1356 = vmatprep.subr.mxu0 0.0
      %1357 = vmatpush2.msra.mxu0 0.0
      %1358 = vmatprep.subr.mxu0 0.0
      %1359 = vmatpush2.msra.mxu0 0.0
      %1360 = vmatprep.subr.mxu0 0.0
      %1361 = vmatpush2.msra.mxu0 0.0
      %1362 = vmatprep.subr.mxu0 0.0
      %1363 = vmatpush2.msra.mxu0 0.0
      %1364 = vmatprep.subr.mxu0 0.0
      %1365 = vmatpush2.msra.mxu0 0.0
      %1366 = vmatprep.mubr.f32.mxu0 0.0
      %1367 = vmatmul.mubr.f32.gmra.mxu0 %v1291
      %v1368 = vpop.f32.mrf.mxu0
      %v1369 = vadd.f32 0.0, %v1368
      %v1370 = vpop.f32.mrf.mxu0
      %1371 = vmatprep.mubr.f32.mxu0 0.0
      %1372 = vmatmul.mubr.f32.gmra.mxu0 %v1294
      %v1373 = vpop.f32.mrf.mxu0
      %v1374 = vadd.f32 0.0, %v1373
      %v1375 = vpop.f32.mrf.mxu0
      %1376 = vmatprep.mubr.f32.mxu0 0.0
      %1377 = vmatmul.mubr.f32.gmra.mxu0 %v1297
      %v1378 = vpop.f32.mrf.mxu0
      %v1379 = vadd.f32 0.0, %v1378
      %v1380 = vpop.f32.mrf.mxu0
      %1381 = vmatprep.mubr.f32.mxu0 0.0
      %1382 = vmatmul.mubr.f32.gmra.mxu0 %v1300
      %v1383 = vpop.f32.mrf.mxu0
      %v1384 = vadd.f32 0.0, %v1383
      %v1385 = vpop.f32.mrf.mxu0
      %1386 = vdwg.mxu0
      %v1388 = vsel %vm223, %v202, 0
      %v1391 = vsel %vm223, %v203, 0
      %v1394 = vsel %vm223, %v204, 0
      %v1397 = vsel %vm223, %v205, 0
      %1399 = vmatprep.subr.mxu0 0.0
      %1400 = vmatpush1.msra.mxu0 0.0
      %1401 = vmatprep.subr.mxu0 0.0
      %1402 = vmatpush1.msra.mxu0 0.0
      %1403 = vmatprep.subr.mxu0 0.0
      %1404 = vmatpush1.msra.mxu0 0.0
      %1405 = vmatprep.subr.mxu0 0.0
      %1406 = vmatpush1.msra.mxu0 0.0
      %1407 = vmatprep.subr.mxu0 0.0
      %1408 = vmatpush1.msra.mxu0 0.0
      %1409 = vmatprep.subr.mxu0 0.0
      %1410 = vmatpush1.msra.mxu0 0.0
      %1411 = vmatprep.subr.mxu0 0.0
      %1412 = vmatpush1.msra.mxu0 0.0
      %1413 = vmatprep.subr.mxu0 0.0
      %1414 = vmatpush1.msra.mxu0 0.0
      %1415 = vmatprep.subr.mxu0 0.0
      %1416 = vmatpush1.msra.mxu0 0.0
      %1417 = vmatprep.subr.mxu0 0.0
      %1418 = vmatpush1.msra.mxu0 0.0
      %1419 = vmatprep.subr.mxu0 0.0
      %1420 = vmatpush1.msra.mxu0 0.0
      %1421 = vmatprep.subr.mxu0 0.0
      %1422 = vmatpush1.msra.mxu0 0.0
      %1423 = vmatprep.subr.mxu0 0.0
      %1424 = vmatpush1.msra.mxu0 %v859
      %1425 = vmatprep.subr.mxu0 0.0
      %1426 = vmatpush1.msra.mxu0 %v854
      %1427 = vmatprep.subr.mxu0 0.0
      %1428 = vmatpush1.msra.mxu0 %v849
      %1429 = vmatprep.subr.mxu0 0.0
      %1430 = vmatpush1.msra.mxu0 %v844
      %1431 = vmatprep.subr.mxu0 0.0
      %1432 = vmatpush2.msra.mxu0 0.0
      %1433 = vmatprep.subr.mxu0 0.0
      %1434 = vmatpush2.msra.mxu0 0.0
      %1435 = vmatprep.subr.mxu0 0.0
      %1436 = vmatpush2.msra.mxu0 0.0
      %1437 = vmatprep.subr.mxu0 0.0
      %1438 = vmatpush2.msra.mxu0 0.0
      %1439 = vmatprep.subr.mxu0 0.0
      %1440 = vmatpush2.msra.mxu0 0.0
      %1441 = vmatprep.subr.mxu0 0.0
      %1442 = vmatpush2.msra.mxu0 0.0
      %1443 = vmatprep.subr.mxu0 0.0
      %1444 = vmatpush2.msra.mxu0 0.0
      %1445 = vmatprep.subr.mxu0 0.0
      %1446 = vmatpush2.msra.mxu0 0.0
      %1447 = vmatprep.subr.mxu0 0.0
      %1448 = vmatpush2.msra.mxu0 0.0
      %1449 = vmatprep.subr.mxu0 0.0
      %1450 = vmatpush2.msra.mxu0 0.0
      %1451 = vmatprep.subr.mxu0 0.0
      %1452 = vmatpush2.msra.mxu0 0.0
      %1453 = vmatprep.subr.mxu0 0.0
      %1454 = vmatpush2.msra.mxu0 0.0
      %1455 = vmatprep.subr.mxu0 0.0
      %1456 = vmatpush2.msra.mxu0 0.0
      %1457 = vmatprep.subr.mxu0 0.0
      %1458 = vmatpush2.msra.mxu0 0.0
      %1459 = vmatprep.subr.mxu0 0.0
      %1460 = vmatpush2.msra.mxu0 0.0
      %1461 = vmatprep.subr.mxu0 0.0
      %1462 = vmatpush2.msra.mxu0 0.0
      %1463 = vmatprep.mubr.f32.mxu0 0.0
      %1464 = vmatmul.mubr.f32.gmra.mxu0 %v1388
      %v1465 = vpop.f32.mrf.mxu0
      %v1466 = vadd.f32 0.0, %v1465
      %v1467 = vpop.f32.mrf.mxu0
      %1468 = vmatprep.mubr.f32.mxu0 0.0
      %1469 = vmatmul.mubr.f32.gmra.mxu0 %v1391
      %v1470 = vpop.f32.mrf.mxu0
      %v1471 = vadd.f32 0.0, %v1470
      %v1472 = vpop.f32.mrf.mxu0
      %1473 = vmatprep.mubr.f32.mxu0 0.0
      %1474 = vmatmul.mubr.f32.gmra.mxu0 %v1394
      %v1475 = vpop.f32.mrf.mxu0
      %v1476 = vadd.f32 0.0, %v1475
      %v1477 = vpop.f32.mrf.mxu0
      %1478 = vmatprep.mubr.f32.mxu0 0.0
      %1479 = vmatmul.mubr.f32.gmra.mxu0 %v1397
      %v1480 = vpop.f32.mrf.mxu0
      %v1481 = vadd.f32 0.0, %v1480
      %v1482 = vpop.f32.mrf.mxu0
      %1483 = vdwg.mxu0
      %v1485 = vsel %vm223, %v206, 0
      %v1488 = vsel %vm223, %v207, 0
      %v1491 = vsel %vm223, %v208, 0
      %v1494 = vsel %vm223, %v209, 0
      %1496 = vmatprep.subr.mxu0 0.0
      %1497 = vmatpush1.msra.mxu0 0.0
      %1498 = vmatprep.subr.mxu0 0.0
      %1499 = vmatpush1.msra.mxu0 0.0
      %1500 = vmatprep.subr.mxu0 0.0
      %1501 = vmatpush1.msra.mxu0 0.0
      %1502 = vmatprep.subr.mxu0 0.0
      %1503 = vmatpush1.msra.mxu0 0.0
      %1504 = vmatprep.subr.mxu0 0.0
      %1505 = vmatpush1.msra.mxu0 0.0
      %1506 = vmatprep.subr.mxu0 0.0
      %1507 = vmatpush1.msra.mxu0 0.0
      %1508 = vmatprep.subr.mxu0 0.0
      %1509 = vmatpush1.msra.mxu0 0.0
      %1510 = vmatprep.subr.mxu0 0.0
      %1511 = vmatpush1.msra.mxu0 0.0
      %1512 = vmatprep.subr.mxu0 0.0
      %1513 = vmatpush1.msra.mxu0 0.0
      %1514 = vmatprep.subr.mxu0 0.0
      %1515 = vmatpush1.msra.mxu0 0.0
      %1516 = vmatprep.subr.mxu0 0.0
      %1517 = vmatpush1.msra.mxu0 0.0
      %1518 = vmatprep.subr.mxu0 0.0
      %1519 = vmatpush1.msra.mxu0 0.0
      %1520 = vmatprep.subr.mxu0 0.0
      %1521 = vmatpush1.msra.mxu0 %v879
      %1522 = vmatprep.subr.mxu0 0.0
      %1523 = vmatpush1.msra.mxu0 %v874
      %1524 = vmatprep.subr.mxu0 0.0
      %1525 = vmatpush1.msra.mxu0 %v869
      %1526 = vmatprep.subr.mxu0 0.0
      %1527 = vmatpush1.msra.mxu0 %v864
      %1528 = vmatprep.subr.mxu0 0.0
      %1529 = vmatpush2.msra.mxu0 0.0
      %1530 = vmatprep.subr.mxu0 0.0
      %1531 = vmatpush2.msra.mxu0 0.0
      %1532 = vmatprep.subr.mxu0 0.0
      %1533 = vmatpush2.msra.mxu0 0.0
      %1534 = vmatprep.subr.mxu0 0.0
      %1535 = vmatpush2.msra.mxu0 0.0
      %1536 = vmatprep.subr.mxu0 0.0
      %1537 = vmatpush2.msra.mxu0 0.0
      %1538 = vmatprep.subr.mxu0 0.0
      %1539 = vmatpush2.msra.mxu0 0.0
      %1540 = vmatprep.subr.mxu0 0.0
      %1541 = vmatpush2.msra.mxu0 0.0
      %1542 = vmatprep.subr.mxu0 0.0
      %1543 = vmatpush2.msra.mxu0 0.0
      %1544 = vmatprep.subr.mxu0 0.0
      %1545 = vmatpush2.msra.mxu0 0.0
      %1546 = vmatprep.subr.mxu0 0.0
      %1547 = vmatpush2.msra.mxu0 0.0
      %1548 = vmatprep.subr.mxu0 0.0
      %1549 = vmatpush2.msra.mxu0 0.0
      %1550 = vmatprep.subr.mxu0 0.0
      %1551 = vmatpush2.msra.mxu0 0.0
      %1552 = vmatprep.subr.mxu0 0.0
      %1553 = vmatpush2.msra.mxu0 0.0
      %1554 = vmatprep.subr.mxu0 0.0
      %1555 = vmatpush2.msra.mxu0 0.0
      %1556 = vmatprep.subr.mxu0 0.0
      %1557 = vmatpush2.msra.mxu0 0.0
      %1558 = vmatprep.subr.mxu0 0.0
      %1559 = vmatpush2.msra.mxu0 0.0
      %1560 = vmatprep.mubr.f32.mxu0 0.0
      %1561 = vmatmul.mubr.f32.gmra.mxu0 %v1485
      %v1562 = vpop.f32.mrf.mxu0
      %v1563 = vadd.f32 0.0, %v1562
      %v1564 = vpop.f32.mrf.mxu0
      %1565 = vmatprep.mubr.f32.mxu0 0.0
      %1566 = vmatmul.mubr.f32.gmra.mxu0 %v1488
      %v1567 = vpop.f32.mrf.mxu0
      %v1568 = vadd.f32 0.0, %v1567
      %v1569 = vpop.f32.mrf.mxu0
      %1570 = vmatprep.mubr.f32.mxu0 0.0
      %1571 = vmatmul.mubr.f32.gmra.mxu0 %v1491
      %v1572 = vpop.f32.mrf.mxu0
      %v1573 = vadd.f32 0.0, %v1572
      %v1574 = vpop.f32.mrf.mxu0
      %1575 = vmatprep.mubr.f32.mxu0 0.0
      %1576 = vmatmul.mubr.f32.gmra.mxu0 %v1494
      %v1577 = vpop.f32.mrf.mxu0
      %v1578 = vadd.f32 0.0, %v1577
      %v1579 = vpop.f32.mrf.mxu0
      %1580 = vdwg.mxu0
      %v1582 = vsel %vm223, %v210, 0
      %v1585 = vsel %vm223, %v211, 0
      %v1588 = vsel %vm223, %v212, 0
      %v1591 = vsel %vm223, %v213, 0
      %1593 = vmatprep.subr.mxu0 0.0
      %1594 = vmatpush1.msra.mxu0 0.0
      %1595 = vmatprep.subr.mxu0 0.0
      %1596 = vmatpush1.msra.mxu0 0.0
      %1597 = vmatprep.subr.mxu0 0.0
      %1598 = vmatpush1.msra.mxu0 0.0
      %1599 = vmatprep.subr.mxu0 0.0
      %1600 = vmatpush1.msra.mxu0 0.0
      %1601 = vmatprep.subr.mxu0 0.0
      %1602 = vmatpush1.msra.mxu0 0.0
      %1603 = vmatprep.subr.mxu0 0.0
      %1604 = vmatpush1.msra.mxu0 0.0
      %1605 = vmatprep.subr.mxu0 0.0
      %1606 = vmatpush1.msra.mxu0 0.0
      %1607 = vmatprep.subr.mxu0 0.0
      %1608 = vmatpush1.msra.mxu0 0.0
      %1609 = vmatprep.subr.mxu0 0.0
      %1610 = vmatpush1.msra.mxu0 0.0
      %1611 = vmatprep.subr.mxu0 0.0
      %1612 = vmatpush1.msra.mxu0 0.0
      %1613 = vmatprep.subr.mxu0 0.0
      %1614 = vmatpush1.msra.mxu0 0.0
      %1615 = vmatprep.subr.mxu0 0.0
      %1616 = vmatpush1.msra.mxu0 0.0
      %1617 = vmatprep.subr.mxu0 0.0
      %1618 = vmatpush1.msra.mxu0 %v899
      %1619 = vmatprep.subr.mxu0 0.0
      %1620 = vmatpush1.msra.mxu0 %v894
      %1621 = vmatprep.subr.mxu0 0.0
      %1622 = vmatpush1.msra.mxu0 %v889
      %1623 = vmatprep.subr.mxu0 0.0
      %1624 = vmatpush1.msra.mxu0 %v884
      %1625 = vmatprep.subr.mxu0 0.0
      %1626 = vmatpush2.msra.mxu0 0.0
      %1627 = vmatprep.subr.mxu0 0.0
      %1628 = vmatpush2.msra.mxu0 0.0
      %1629 = vmatprep.subr.mxu0 0.0
      %1630 = vmatpush2.msra.mxu0 0.0
      %1631 = vmatprep.subr.mxu0 0.0
      %1632 = vmatpush2.msra.mxu0 0.0
      %1633 = vmatprep.subr.mxu0 0.0
      %1634 = vmatpush2.msra.mxu0 0.0
      %1635 = vmatprep.subr.mxu0 0.0
      %1636 = vmatpush2.msra.mxu0 0.0
      %1637 = vmatprep.subr.mxu0 0.0
      %1638 = vmatpush2.msra.mxu0 0.0
      %1639 = vmatprep.subr.mxu0 0.0
      %1640 = vmatpush2.msra.mxu0 0.0
      %1641 = vmatprep.subr.mxu0 0.0
      %1642 = vmatpush2.msra.mxu0 0.0
      %1643 = vmatprep.subr.mxu0 0.0
      %1644 = vmatpush2.msra.mxu0 0.0
      %1645 = vmatprep.subr.mxu0 0.0
      %1646 = vmatpush2.msra.mxu0 0.0
      %1647 = vmatprep.subr.mxu0 0.0
      %1648 = vmatpush2.msra.mxu0 0.0
      %1649 = vmatprep.subr.mxu0 0.0
      %1650 = vmatpush2.msra.mxu0 0.0
      %1651 = vmatprep.subr.mxu0 0.0
      %1652 = vmatpush2.msra.mxu0 0.0
      %1653 = vmatprep.subr.mxu0 0.0
      %1654 = vmatpush2.msra.mxu0 0.0
      %1655 = vmatprep.subr.mxu0 0.0
      %1656 = vmatpush2.msra.mxu0 0.0
      %1657 = vmatprep.mubr.f32.mxu0 0.0
      %1658 = vmatmul.mubr.f32.gmra.mxu0 %v1582
      %v1659 = vpop.f32.mrf.mxu0
      %v1660 = vadd.f32 0.0, %v1659
      %v1661 = vpop.f32.mrf.mxu0
      %1662 = vmatprep.mubr.f32.mxu0 0.0
      %1663 = vmatmul.mubr.f32.gmra.mxu0 %v1585
      %v1664 = vpop.f32.mrf.mxu0
      %v1665 = vadd.f32 0.0, %v1664
      %v1666 = vpop.f32.mrf.mxu0
      %1667 = vmatprep.mubr.f32.mxu0 0.0
      %1668 = vmatmul.mubr.f32.gmra.mxu0 %v1588
      %v1669 = vpop.f32.mrf.mxu0
      %v1670 = vadd.f32 0.0, %v1669
      %v1671 = vpop.f32.mrf.mxu0
      %1672 = vmatprep.mubr.f32.mxu0 0.0
      %1673 = vmatmul.mubr.f32.gmra.mxu0 %v1591
      %v1674 = vpop.f32.mrf.mxu0
      %v1675 = vadd.f32 0.0, %v1674
      %v1676 = vpop.f32.mrf.mxu0
      %1677 = vdwg.mxu0
      %v1678 = vld [vmem:[%s1 + $0x128] sm:$0x1]
      %v1679 = vlaneseq
      %v1680 = vshrl.u32 %v1679, 7
      %v1681 = vsub.s32 0, %v1680
      %v1682 = vrot.slane %v1678, %v1681
      %v1683 = vadd.f32 %v981, %v1682
      %v1684 = vadd.f32 %v986, %v1682
      %v1685 = vadd.f32 %v991, %v1682
      %v1686 = vadd.f32 %v996, %v1682
      %v1687 = vadd.f32 %v1078, %v1682
      %v1688 = vadd.f32 %v1083, %v1682
      %v1689 = vadd.f32 %v1088, %v1682
      %v1690 = vadd.f32 %v1093, %v1682
      %v1691 = vadd.f32 %v1175, %v1682
      %v1692 = vadd.f32 %v1180, %v1682
      %v1693 = vadd.f32 %v1185, %v1682
      %v1694 = vadd.f32 %v1190, %v1682
      %v1695 = vadd.f32 %v1272, %v1682
      %v1696 = vadd.f32 %v1277, %v1682
      %v1697 = vadd.f32 %v1282, %v1682
      %v1698 = vadd.f32 %v1287, %v1682
      %v1699 = vadd.f32 %v1369, %v1682
      %v1700 = vadd.f32 %v1374, %v1682
      %v1701 = vadd.f32 %v1379, %v1682
      %v1702 = vadd.f32 %v1384, %v1682
      %v1703 = vadd.f32 %v1466, %v1682
      %v1704 = vadd.f32 %v1471, %v1682
      %v1705 = vadd.f32 %v1476, %v1682
      %v1706 = vadd.f32 %v1481, %v1682
      %v1707 = vadd.f32 %v1563, %v1682
      %v1708 = vadd.f32 %v1568, %v1682
      %v1709 = vadd.f32 %v1573, %v1682
      %v1710 = vadd.f32 %v1578, %v1682
      %v1711 = vadd.f32 %v1660, %v1682
      %v1712 = vadd.f32 %v1665, %v1682
      %v1713 = vadd.f32 %v1670, %v1682
      %v1714 = vadd.f32 %v1675, %v1682
      %v1715 = vld [vmem:[%s1 + $0x40] sm:$0xff]
      %v1716 = vld [vmem:[%s1 + $0x48] sm:$0xff]
      %v1717 = vld [vmem:[%s1 + $0x50] sm:$0xff]
      %v1718 = vld [vmem:[%s1 + $0x58] sm:$0xff]
      %v1719 = vld [vmem:[%s1 + $0x130] sm:$0x1]
      %v1720 = vlaneseq
      %v1721 = vshrl.u32 %v1720, 7
      %v1722 = vsub.s32 0, %v1721
      %v1723 = vrot.slane %v1719, %v1722
      %v1725 = vsel %vm223, %v1683, 0
      %v1728 = vsel %vm223, %v1684, 0
      %v1731 = vsel %vm223, %v1685, 0
      %v1734 = vsel %vm223, %v1686, 0
      %v1737 = vsel %vm223, %v1687, 0
      %v1740 = vsel %vm223, %v1688, 0
      %v1743 = vsel %vm223, %v1689, 0
      %v1746 = vsel %vm223, %v1690, 0
      %v1749 = vsel %vm223, %v1691, 0
      %v1752 = vsel %vm223, %v1692, 0
      %v1755 = vsel %vm223, %v1693, 0
      %v1758 = vsel %vm223, %v1694, 0
      %v1761 = vsel %vm223, %v1695, 0
      %v1764 = vsel %vm223, %v1696, 0
      %v1767 = vsel %vm223, %v1697, 0
      %v1770 = vsel %vm223, %v1698, 0
      %v1773 = vsel %vm223, %v1699, 0
      %v1776 = vsel %vm223, %v1700, 0
      %v1779 = vsel %vm223, %v1701, 0
      %v1782 = vsel %vm223, %v1702, 0
      %v1785 = vsel %vm223, %v1703, 0
      %v1788 = vsel %vm223, %v1704, 0
      %v1791 = vsel %vm223, %v1705, 0
      %v1794 = vsel %vm223, %v1706, 0
      %v1797 = vsel %vm223, %v1707, 0
      %v1800 = vsel %vm223, %v1708, 0
      %v1803 = vsel %vm223, %v1709, 0
      %v1806 = vsel %vm223, %v1710, 0
      %v1809 = vsel %vm223, %v1711, 0
      %v1812 = vsel %vm223, %v1712, 0
      %v1815 = vsel %vm223, %v1713, 0
      %v1818 = vsel %vm223, %v1714, 0
      %1820 = vmatprep.subr.mxu0 0.0
      %1821 = vmatpush1.msra.mxu0 0.0
      %1822 = vmatprep.subr.mxu0 0.0
      %1823 = vmatpush1.msra.mxu0 0.0
      %1824 = vmatprep.subr.mxu0 0.0
      %1825 = vmatpush1.msra.mxu0 0.0
      %1826 = vmatprep.subr.mxu0 0.0
      %1827 = vmatpush1.msra.mxu0 0.0
      %1828 = vmatprep.subr.mxu0 0.0
      %1829 = vmatpush1.msra.mxu0 0.0
      %1830 = vmatprep.subr.mxu0 0.0
      %1831 = vmatpush1.msra.mxu0 0.0
      %1832 = vmatprep.subr.mxu0 0.0
      %1833 = vmatpush1.msra.mxu0 0.0
      %1834 = vmatprep.subr.mxu0 0.0
      %1835 = vmatpush1.msra.mxu0 0.0
      %1836 = vmatprep.subr.mxu0 0.0
      %1837 = vmatpush1.msra.mxu0 0.0
      %1838 = vmatprep.subr.mxu0 0.0
      %1839 = vmatpush1.msra.mxu0 0.0
      %1840 = vmatprep.subr.mxu0 0.0
      %1841 = vmatpush1.msra.mxu0 0.0
      %1842 = vmatprep.subr.mxu0 0.0
      %1843 = vmatpush1.msra.mxu0 0.0
      %1844 = vmatprep.subr.mxu0 0.0
      %1845 = vmatpush1.msra.mxu0 %v1718
      %1846 = vmatprep.subr.mxu0 0.0
      %1847 = vmatpush1.msra.mxu0 %v1717
      %1848 = vmatprep.subr.mxu0 0.0
      %1849 = vmatpush1.msra.mxu0 %v1716
      %1850 = vmatprep.subr.mxu0 0.0
      %1851 = vmatpush1.msra.mxu0 %v1715
      %1852 = vmatprep.subr.mxu0 0.0
      %1853 = vmatpush2.msra.mxu0 0.0
      %1854 = vmatprep.subr.mxu0 0.0
      %1855 = vmatpush2.msra.mxu0 0.0
      %1856 = vmatprep.subr.mxu0 0.0
      %1857 = vmatpush2.msra.mxu0 0.0
      %1858 = vmatprep.subr.mxu0 0.0
      %1859 = vmatpush2.msra.mxu0 0.0
      %1860 = vmatprep.subr.mxu0 0.0
      %1861 = vmatpush2.msra.mxu0 0.0
      %1862 = vmatprep.subr.mxu0 0.0
      %1863 = vmatpush2.msra.mxu0 0.0
      %1864 = vmatprep.subr.mxu0 0.0
      %1865 = vmatpush2.msra.mxu0 0.0
      %1866 = vmatprep.subr.mxu0 0.0
      %1867 = vmatpush2.msra.mxu0 0.0
      %1868 = vmatprep.subr.mxu0 0.0
      %1869 = vmatpush2.msra.mxu0 0.0
      %1870 = vmatprep.subr.mxu0 0.0
      %1871 = vmatpush2.msra.mxu0 0.0
      %1872 = vmatprep.subr.mxu0 0.0
      %1873 = vmatpush2.msra.mxu0 0.0
      %1874 = vmatprep.subr.mxu0 0.0
      %1875 = vmatpush2.msra.mxu0 0.0
      %1876 = vmatprep.subr.mxu0 0.0
      %1877 = vmatpush2.msra.mxu0 0.0
      %1878 = vmatprep.subr.mxu0 0.0
      %1879 = vmatpush2.msra.mxu0 0.0
      %1880 = vmatprep.subr.mxu0 0.0
      %1881 = vmatpush2.msra.mxu0 0.0
      %1882 = vmatprep.subr.mxu0 0.0
      %1883 = vmatpush2.msra.mxu0 0.0
      %1884 = vmatprep.mubr.f32.mxu0 0.0
      %1885 = vmatmul.mubr.f32.gmra.mxu0 %v1725
      %v1886 = vpop.f32.mrf.mxu0
      %v1887 = vadd.f32 %v1723, %v1886
      %v1888 = vpop.f32.mrf.mxu0
      %1889 = vmatprep.mubr.f32.mxu0 0.0
      %1890 = vmatmul.mubr.f32.gmra.mxu0 %v1728
      %v1891 = vpop.f32.mrf.mxu0
      %v1892 = vadd.f32 %v1723, %v1891
      %v1893 = vpop.f32.mrf.mxu0
      %1894 = vmatprep.mubr.f32.mxu0 0.0
      %1895 = vmatmul.mubr.f32.gmra.mxu0 %v1731
      %v1896 = vpop.f32.mrf.mxu0
      %v1897 = vadd.f32 %v1723, %v1896
      %v1898 = vpop.f32.mrf.mxu0
      %1899 = vmatprep.mubr.f32.mxu0 0.0
      %1900 = vmatmul.mubr.f32.gmra.mxu0 %v1734
      %v1901 = vpop.f32.mrf.mxu0
      %v1902 = vadd.f32 %v1723, %v1901
      %v1903 = vpop.f32.mrf.mxu0
      %1904 = vmatprep.mubr.f32.mxu0 0.0
      %1905 = vmatmul.mubr.f32.gmra.mxu0 %v1737
      %v1906 = vpop.f32.mrf.mxu0
      %v1907 = vadd.f32 %v1723, %v1906
      %v1908 = vpop.f32.mrf.mxu0
      %1909 = vmatprep.mubr.f32.mxu0 0.0
      %1910 = vmatmul.mubr.f32.gmra.mxu0 %v1740
      %v1911 = vpop.f32.mrf.mxu0
      %v1912 = vadd.f32 %v1723, %v1911
      %v1913 = vpop.f32.mrf.mxu0
      %1914 = vmatprep.mubr.f32.mxu0 0.0
      %1915 = vmatmul.mubr.f32.gmra.mxu0 %v1743
      %v1916 = vpop.f32.mrf.mxu0
      %v1917 = vadd.f32 %v1723, %v1916
      %v1918 = vpop.f32.mrf.mxu0
      %1919 = vmatprep.mubr.f32.mxu0 0.0
      %1920 = vmatmul.mubr.f32.gmra.mxu0 %v1746
      %v1921 = vpop.f32.mrf.mxu0
      %v1922 = vadd.f32 %v1723, %v1921
      %v1923 = vpop.f32.mrf.mxu0
      %1924 = vmatprep.mubr.f32.mxu0 0.0
      %1925 = vmatmul.mubr.f32.gmra.mxu0 %v1749
      %v1926 = vpop.f32.mrf.mxu0
      %v1927 = vadd.f32 %v1723, %v1926
      %v1928 = vpop.f32.mrf.mxu0
      %1929 = vmatprep.mubr.f32.mxu0 0.0
      %1930 = vmatmul.mubr.f32.gmra.mxu0 %v1752
      %v1931 = vpop.f32.mrf.mxu0
      %v1932 = vadd.f32 %v1723, %v1931
      %v1933 = vpop.f32.mrf.mxu0
      %1934 = vmatprep.mubr.f32.mxu0 0.0
      %1935 = vmatmul.mubr.f32.gmra.mxu0 %v1755
      %v1936 = vpop.f32.mrf.mxu0
      %v1937 = vadd.f32 %v1723, %v1936
      %v1938 = vpop.f32.mrf.mxu0
      %1939 = vmatprep.mubr.f32.mxu0 0.0
      %1940 = vmatmul.mubr.f32.gmra.mxu0 %v1758
      %v1941 = vpop.f32.mrf.mxu0
      %v1942 = vadd.f32 %v1723, %v1941
      %v1943 = vpop.f32.mrf.mxu0
      %1944 = vmatprep.mubr.f32.mxu0 0.0
      %1945 = vmatmul.mubr.f32.gmra.mxu0 %v1761
      %v1946 = vpop.f32.mrf.mxu0
      %v1947 = vadd.f32 %v1723, %v1946
      %v1948 = vpop.f32.mrf.mxu0
      %1949 = vmatprep.mubr.f32.mxu0 0.0
      %1950 = vmatmul.mubr.f32.gmra.mxu0 %v1764
      %v1951 = vpop.f32.mrf.mxu0
      %v1952 = vadd.f32 %v1723, %v1951
      %v1953 = vpop.f32.mrf.mxu0
      %1954 = vmatprep.mubr.f32.mxu0 0.0
      %1955 = vmatmul.mubr.f32.gmra.mxu0 %v1767
      %v1956 = vpop.f32.mrf.mxu0
      %v1957 = vadd.f32 %v1723, %v1956
      %v1958 = vpop.f32.mrf.mxu0
      %1959 = vmatprep.mubr.f32.mxu0 0.0
      %1960 = vmatmul.mubr.f32.gmra.mxu0 %v1770
      %v1961 = vpop.f32.mrf.mxu0
      %v1962 = vadd.f32 %v1723, %v1961
      %v1963 = vpop.f32.mrf.mxu0
      %1964 = vmatprep.mubr.f32.mxu0 0.0
      %1965 = vmatmul.mubr.f32.gmra.mxu0 %v1773
      %v1966 = vpop.f32.mrf.mxu0
      %v1967 = vadd.f32 %v1723, %v1966
      %v1968 = vpop.f32.mrf.mxu0
      %1969 = vmatprep.mubr.f32.mxu0 0.0
      %1970 = vmatmul.mubr.f32.gmra.mxu0 %v1776
      %v1971 = vpop.f32.mrf.mxu0
      %v1972 = vadd.f32 %v1723, %v1971
      %v1973 = vpop.f32.mrf.mxu0
      %1974 = vmatprep.mubr.f32.mxu0 0.0
      %1975 = vmatmul.mubr.f32.gmra.mxu0 %v1779
      %v1976 = vpop.f32.mrf.mxu0
      %v1977 = vadd.f32 %v1723, %v1976
      %v1978 = vpop.f32.mrf.mxu0
      %1979 = vmatprep.mubr.f32.mxu0 0.0
      %1980 = vmatmul.mubr.f32.gmra.mxu0 %v1782
      %v1981 = vpop.f32.mrf.mxu0
      %v1982 = vadd.f32 %v1723, %v1981
      %v1983 = vpop.f32.mrf.mxu0
      %1984 = vmatprep.mubr.f32.mxu0 0.0
      %1985 = vmatmul.mubr.f32.gmra.mxu0 %v1785
      %v1986 = vpop.f32.mrf.mxu0
      %v1987 = vadd.f32 %v1723, %v1986
      %v1988 = vpop.f32.mrf.mxu0
      %1989 = vmatprep.mubr.f32.mxu0 0.0
      %1990 = vmatmul.mubr.f32.gmra.mxu0 %v1788
      %v1991 = vpop.f32.mrf.mxu0
      %v1992 = vadd.f32 %v1723, %v1991
      %v1993 = vpop.f32.mrf.mxu0
      %1994 = vmatprep.mubr.f32.mxu0 0.0
      %1995 = vmatmul.mubr.f32.gmra.mxu0 %v1791
      %v1996 = vpop.f32.mrf.mxu0
      %v1997 = vadd.f32 %v1723, %v1996
      %v1998 = vpop.f32.mrf.mxu0
      %1999 = vmatprep.mubr.f32.mxu0 0.0
      %2000 = vmatmul.mubr.f32.gmra.mxu0 %v1794
      %v2001 = vpop.f32.mrf.mxu0
      %v2002 = vadd.f32 %v1723, %v2001
      %v2003 = vpop.f32.mrf.mxu0
      %2004 = vmatprep.mubr.f32.mxu0 0.0
      %2005 = vmatmul.mubr.f32.gmra.mxu0 %v1797
      %v2006 = vpop.f32.mrf.mxu0
      %v2007 = vadd.f32 %v1723, %v2006
      %v2008 = vpop.f32.mrf.mxu0
      %2009 = vmatprep.mubr.f32.mxu0 0.0
      %2010 = vmatmul.mubr.f32.gmra.mxu0 %v1800
      %v2011 = vpop.f32.mrf.mxu0
      %v2012 = vadd.f32 %v1723, %v2011
      %v2013 = vpop.f32.mrf.mxu0
      %2014 = vmatprep.mubr.f32.mxu0 0.0
      %2015 = vmatmul.mubr.f32.gmra.mxu0 %v1803
      %v2016 = vpop.f32.mrf.mxu0
      %v2017 = vadd.f32 %v1723, %v2016
      %v2018 = vpop.f32.mrf.mxu0
      %2019 = vmatprep.mubr.f32.mxu0 0.0
      %2020 = vmatmul.mubr.f32.gmra.mxu0 %v1806
      %v2021 = vpop.f32.mrf.mxu0
      %v2022 = vadd.f32 %v1723, %v2021
      %v2023 = vpop.f32.mrf.mxu0
      %2024 = vmatprep.mubr.f32.mxu0 0.0
      %2025 = vmatmul.mubr.f32.gmra.mxu0 %v1809
      %v2026 = vpop.f32.mrf.mxu0
      %v2027 = vadd.f32 %v1723, %v2026
      %v2028 = vpop.f32.mrf.mxu0
      %2029 = vmatprep.mubr.f32.mxu0 0.0
      %2030 = vmatmul.mubr.f32.gmra.mxu0 %v1812
      %v2031 = vpop.f32.mrf.mxu0
      %v2032 = vadd.f32 %v1723, %v2031
      %v2033 = vpop.f32.mrf.mxu0
      %2034 = vmatprep.mubr.f32.mxu0 0.0
      %2035 = vmatmul.mubr.f32.gmra.mxu0 %v1815
      %v2036 = vpop.f32.mrf.mxu0
      %v2037 = vadd.f32 %v1723, %v2036
      %v2038 = vpop.f32.mrf.mxu0
      %2039 = vmatprep.mubr.f32.mxu0 0.0
      %2040 = vmatmul.mubr.f32.gmra.mxu0 %v1818
      %v2041 = vpop.f32.mrf.mxu0
      %v2042 = vadd.f32 %v1723, %v2041
      %v2043 = vpop.f32.mrf.mxu0
      %2044 = vdwg.mxu0
      %v2045 = vmax.f32 %v1887, 0.0
      %v2046 = vmax.f32 %v1892, 0.0
      %v2047 = vmax.f32 %v1897, 0.0
      %v2048 = vmax.f32 %v1902, 0.0
      %v2049 = vmax.f32 %v1907, 0.0
      %v2050 = vmax.f32 %v1912, 0.0
      %v2051 = vmax.f32 %v1917, 0.0
      %v2052 = vmax.f32 %v1922, 0.0
      %v2053 = vmax.f32 %v1927, 0.0
      %v2054 = vmax.f32 %v1932, 0.0
      %v2055 = vmax.f32 %v1937, 0.0
      %v2056 = vmax.f32 %v1942, 0.0
      %v2057 = vmax.f32 %v1947, 0.0
      %v2058 = vmax.f32 %v1952, 0.0
      %v2059 = vmax.f32 %v1957, 0.0
      %v2060 = vmax.f32 %v1962, 0.0
      %v2061 = vmax.f32 %v1967, 0.0
      %v2062 = vmax.f32 %v1972, 0.0
      %v2063 = vmax.f32 %v1977, 0.0
      %v2064 = vmax.f32 %v1982, 0.0
      %v2065 = vmax.f32 %v1987, 0.0
      %v2066 = vmax.f32 %v1992, 0.0
      %v2067 = vmax.f32 %v1997, 0.0
      %v2068 = vmax.f32 %v2002, 0.0
      %v2069 = vmax.f32 %v2007, 0.0
      %v2070 = vmax.f32 %v2012, 0.0
      %v2071 = vmax.f32 %v2017, 0.0
      %v2072 = vmax.f32 %v2022, 0.0
      %v2073 = vmax.f32 %v2027, 0.0
      %v2074 = vmax.f32 %v2032, 0.0
      %v2075 = vmax.f32 %v2037, 0.0
      %v2076 = vmax.f32 %v2042, 0.0
      %v2077 = vld [vmem:[%s1 + $0x60] sm:$0xff]
      %v2078 = vld [vmem:[%s1 + $0x68] sm:$0xff]
      %v2079 = vld [vmem:[%s1 + $0x70] sm:$0xff]
      %v2080 = vld [vmem:[%s1 + $0x78] sm:$0xff]
      %v2082 = vsel %vm223, %v2045, 0
      %v2085 = vsel %vm223, %v2046, 0
      %v2088 = vsel %vm223, %v2047, 0
      %v2091 = vsel %vm223, %v2048, 0
      %v2094 = vsel %vm223, %v2049, 0
      %v2097 = vsel %vm223, %v2050, 0
      %v2100 = vsel %vm223, %v2051, 0
      %v2103 = vsel %vm223, %v2052, 0
      %v2106 = vsel %vm223, %v2053, 0
      %v2109 = vsel %vm223, %v2054, 0
      %v2112 = vsel %vm223, %v2055, 0
      %v2115 = vsel %vm223, %v2056, 0
      %v2118 = vsel %vm223, %v2057, 0
      %v2121 = vsel %vm223, %v2058, 0
      %v2124 = vsel %vm223, %v2059, 0
      %v2127 = vsel %vm223, %v2060, 0
      %v2130 = vsel %vm223, %v2061, 0
      %v2133 = vsel %vm223, %v2062, 0
      %v2136 = vsel %vm223, %v2063, 0
      %v2139 = vsel %vm223, %v2064, 0
      %v2142 = vsel %vm223, %v2065, 0
      %v2145 = vsel %vm223, %v2066, 0
      %v2148 = vsel %vm223, %v2067, 0
      %v2151 = vsel %vm223, %v2068, 0
      %v2154 = vsel %vm223, %v2069, 0
      %v2157 = vsel %vm223, %v2070, 0
      %v2160 = vsel %vm223, %v2071, 0
      %v2163 = vsel %vm223, %v2072, 0
      %v2166 = vsel %vm223, %v2073, 0
      %v2169 = vsel %vm223, %v2074, 0
      %v2172 = vsel %vm223, %v2075, 0
      %v2175 = vsel %vm223, %v2076, 0
      %2177 = vmatprep.subr.mxu0 0.0
      %2178 = vmatpush1.msra.mxu0 0.0
      %2179 = vmatprep.subr.mxu0 0.0
      %2180 = vmatpush1.msra.mxu0 0.0
      %2181 = vmatprep.subr.mxu0 0.0
      %2182 = vmatpush1.msra.mxu0 0.0
      %2183 = vmatprep.subr.mxu0 0.0
      %2184 = vmatpush1.msra.mxu0 0.0
      %2185 = vmatprep.subr.mxu0 0.0
      %2186 = vmatpush1.msra.mxu0 0.0
      %2187 = vmatprep.subr.mxu0 0.0
      %2188 = vmatpush1.msra.mxu0 0.0
      %2189 = vmatprep.subr.mxu0 0.0
      %2190 = vmatpush1.msra.mxu0 0.0
      %2191 = vmatprep.subr.mxu0 0.0
      %2192 = vmatpush1.msra.mxu0 0.0
      %2193 = vmatprep.subr.mxu0 0.0
      %2194 = vmatpush1.msra.mxu0 0.0
      %2195 = vmatprep.subr.mxu0 0.0
      %2196 = vmatpush1.msra.mxu0 0.0
      %2197 = vmatprep.subr.mxu0 0.0
      %2198 = vmatpush1.msra.mxu0 0.0
      %2199 = vmatprep.subr.mxu0 0.0
      %2200 = vmatpush1.msra.mxu0 0.0
      %2201 = vmatprep.subr.mxu0 0.0
      %2202 = vmatpush1.msra.mxu0 %v2080
      %2203 = vmatprep.subr.mxu0 0.0
      %2204 = vmatpush1.msra.mxu0 %v2079
      %2205 = vmatprep.subr.mxu0 0.0
      %2206 = vmatpush1.msra.mxu0 %v2078
      %2207 = vmatprep.subr.mxu0 0.0
      %2208 = vmatpush1.msra.mxu0 %v2077
      %2209 = vmatprep.subr.mxu0 0.0
      %2210 = vmatpush2.msra.mxu0 0.0
      %2211 = vmatprep.subr.mxu0 0.0
      %2212 = vmatpush2.msra.mxu0 0.0
      %2213 = vmatprep.subr.mxu0 0.0
      %2214 = vmatpush2.msra.mxu0 0.0
      %2215 = vmatprep.subr.mxu0 0.0
      %2216 = vmatpush2.msra.mxu0 0.0
      %2217 = vmatprep.subr.mxu0 0.0
      %2218 = vmatpush2.msra.mxu0 0.0
      %2219 = vmatprep.subr.mxu0 0.0
      %2220 = vmatpush2.msra.mxu0 0.0
      %2221 = vmatprep.subr.mxu0 0.0
      %2222 = vmatpush2.msra.mxu0 0.0
      %2223 = vmatprep.subr.mxu0 0.0
      %2224 = vmatpush2.msra.mxu0 0.0
      %2225 = vmatprep.subr.mxu0 0.0
      %2226 = vmatpush2.msra.mxu0 0.0
      %2227 = vmatprep.subr.mxu0 0.0
      %2228 = vmatpush2.msra.mxu0 0.0
      %2229 = vmatprep.subr.mxu0 0.0
      %2230 = vmatpush2.msra.mxu0 0.0
      %2231 = vmatprep.subr.mxu0 0.0
      %2232 = vmatpush2.msra.mxu0 0.0
      %2233 = vmatprep.subr.mxu0 0.0
      %2234 = vmatpush2.msra.mxu0 0.0
      %2235 = vmatprep.subr.mxu0 0.0
      %2236 = vmatpush2.msra.mxu0 0.0
      %2237 = vmatprep.subr.mxu0 0.0
      %2238 = vmatpush2.msra.mxu0 0.0
      %2239 = vmatprep.subr.mxu0 0.0
      %2240 = vmatpush2.msra.mxu0 0.0
      %2241 = vmatprep.mubr.f32.mxu0 0.0
      %2242 = vmatmul.mubr.f32.gmra.mxu0 %v2082
      %v2243 = vpop.f32.mrf.mxu0
      %v2244 = vadd.f32 0.0, %v2243
      %v2245 = vpop.f32.mrf.mxu0
      %2246 = vmatprep.mubr.f32.mxu0 0.0
      %2247 = vmatmul.mubr.f32.gmra.mxu0 %v2085
      %v2248 = vpop.f32.mrf.mxu0
      %v2249 = vadd.f32 0.0, %v2248
      %v2250 = vpop.f32.mrf.mxu0
      %2251 = vmatprep.mubr.f32.mxu0 0.0
      %2252 = vmatmul.mubr.f32.gmra.mxu0 %v2088
      %v2253 = vpop.f32.mrf.mxu0
      %v2254 = vadd.f32 0.0, %v2253
      %v2255 = vpop.f32.mrf.mxu0
      %2256 = vmatprep.mubr.f32.mxu0 0.0
      %2257 = vmatmul.mubr.f32.gmra.mxu0 %v2091
      %v2258 = vpop.f32.mrf.mxu0
      %v2259 = vadd.f32 0.0, %v2258
      %v2260 = vpop.f32.mrf.mxu0
      %2261 = vmatprep.mubr.f32.mxu0 0.0
      %2262 = vmatmul.mubr.f32.gmra.mxu0 %v2094
      %v2263 = vpop.f32.mrf.mxu0
      %v2264 = vadd.f32 0.0, %v2263
      %v2265 = vpop.f32.mrf.mxu0
      %2266 = vmatprep.mubr.f32.mxu0 0.0
      %2267 = vmatmul.mubr.f32.gmra.mxu0 %v2097
      %v2268 = vpop.f32.mrf.mxu0
      %v2269 = vadd.f32 0.0, %v2268
      %v2270 = vpop.f32.mrf.mxu0
      %2271 = vmatprep.mubr.f32.mxu0 0.0
      %2272 = vmatmul.mubr.f32.gmra.mxu0 %v2100
      %v2273 = vpop.f32.mrf.mxu0
      %v2274 = vadd.f32 0.0, %v2273
      %v2275 = vpop.f32.mrf.mxu0
      %2276 = vmatprep.mubr.f32.mxu0 0.0
      %2277 = vmatmul.mubr.f32.gmra.mxu0 %v2103
      %v2278 = vpop.f32.mrf.mxu0
      %v2279 = vadd.f32 0.0, %v2278
      %v2280 = vpop.f32.mrf.mxu0
      %2281 = vmatprep.mubr.f32.mxu0 0.0
      %2282 = vmatmul.mubr.f32.gmra.mxu0 %v2106
      %v2283 = vpop.f32.mrf.mxu0
      %v2284 = vadd.f32 0.0, %v2283
      %v2285 = vpop.f32.mrf.mxu0
      %2286 = vmatprep.mubr.f32.mxu0 0.0
      %2287 = vmatmul.mubr.f32.gmra.mxu0 %v2109
      %v2288 = vpop.f32.mrf.mxu0
      %v2289 = vadd.f32 0.0, %v2288
      %v2290 = vpop.f32.mrf.mxu0
      %2291 = vmatprep.mubr.f32.mxu0 0.0
      %2292 = vmatmul.mubr.f32.gmra.mxu0 %v2112
      %v2293 = vpop.f32.mrf.mxu0
      %v2294 = vadd.f32 0.0, %v2293
      %v2295 = vpop.f32.mrf.mxu0
      %2296 = vmatprep.mubr.f32.mxu0 0.0
      %2297 = vmatmul.mubr.f32.gmra.mxu0 %v2115
      %v2298 = vpop.f32.mrf.mxu0
      %v2299 = vadd.f32 0.0, %v2298
      %v2300 = vpop.f32.mrf.mxu0
      %2301 = vmatprep.mubr.f32.mxu0 0.0
      %2302 = vmatmul.mubr.f32.gmra.mxu0 %v2118
      %v2303 = vpop.f32.mrf.mxu0
      %v2304 = vadd.f32 0.0, %v2303
      %v2305 = vpop.f32.mrf.mxu0
      %2306 = vmatprep.mubr.f32.mxu0 0.0
      %2307 = vmatmul.mubr.f32.gmra.mxu0 %v2121
      %v2308 = vpop.f32.mrf.mxu0
      %v2309 = vadd.f32 0.0, %v2308
      %v2310 = vpop.f32.mrf.mxu0
      %2311 = vmatprep.mubr.f32.mxu0 0.0
      %2312 = vmatmul.mubr.f32.gmra.mxu0 %v2124
      %v2313 = vpop.f32.mrf.mxu0
      %v2314 = vadd.f32 0.0, %v2313
      %v2315 = vpop.f32.mrf.mxu0
      %2316 = vmatprep.mubr.f32.mxu0 0.0
      %2317 = vmatmul.mubr.f32.gmra.mxu0 %v2127
      %v2318 = vpop.f32.mrf.mxu0
      %v2319 = vadd.f32 0.0, %v2318
      %v2320 = vpop.f32.mrf.mxu0
      %2321 = vmatprep.mubr.f32.mxu0 0.0
      %2322 = vmatmul.mubr.f32.gmra.mxu0 %v2130
      %v2323 = vpop.f32.mrf.mxu0
      %v2324 = vadd.f32 0.0, %v2323
      %v2325 = vpop.f32.mrf.mxu0
      %2326 = vmatprep.mubr.f32.mxu0 0.0
      %2327 = vmatmul.mubr.f32.gmra.mxu0 %v2133
      %v2328 = vpop.f32.mrf.mxu0
      %v2329 = vadd.f32 0.0, %v2328
      %v2330 = vpop.f32.mrf.mxu0
      %2331 = vmatprep.mubr.f32.mxu0 0.0
      %2332 = vmatmul.mubr.f32.gmra.mxu0 %v2136
      %v2333 = vpop.f32.mrf.mxu0
      %v2334 = vadd.f32 0.0, %v2333
      %v2335 = vpop.f32.mrf.mxu0
      %2336 = vmatprep.mubr.f32.mxu0 0.0
      %2337 = vmatmul.mubr.f32.gmra.mxu0 %v2139
      %v2338 = vpop.f32.mrf.mxu0
      %v2339 = vadd.f32 0.0, %v2338
      %v2340 = vpop.f32.mrf.mxu0
      %2341 = vmatprep.mubr.f32.mxu0 0.0
      %2342 = vmatmul.mubr.f32.gmra.mxu0 %v2142
      %v2343 = vpop.f32.mrf.mxu0
      %v2344 = vadd.f32 0.0, %v2343
      %v2345 = vpop.f32.mrf.mxu0
      %2346 = vmatprep.mubr.f32.mxu0 0.0
      %2347 = vmatmul.mubr.f32.gmra.mxu0 %v2145
      %v2348 = vpop.f32.mrf.mxu0
      %v2349 = vadd.f32 0.0, %v2348
      %v2350 = vpop.f32.mrf.mxu0
      %2351 = vmatprep.mubr.f32.mxu0 0.0
      %2352 = vmatmul.mubr.f32.gmra.mxu0 %v2148
      %v2353 = vpop.f32.mrf.mxu0
      %v2354 = vadd.f32 0.0, %v2353
      %v2355 = vpop.f32.mrf.mxu0
      %2356 = vmatprep.mubr.f32.mxu0 0.0
      %2357 = vmatmul.mubr.f32.gmra.mxu0 %v2151
      %v2358 = vpop.f32.mrf.mxu0
      %v2359 = vadd.f32 0.0, %v2358
      %v2360 = vpop.f32.mrf.mxu0
      %2361 = vmatprep.mubr.f32.mxu0 0.0
      %2362 = vmatmul.mubr.f32.gmra.mxu0 %v2154
      %v2363 = vpop.f32.mrf.mxu0
      %v2364 = vadd.f32 0.0, %v2363
      %v2365 = vpop.f32.mrf.mxu0
      %2366 = vmatprep.mubr.f32.mxu0 0.0
      %2367 = vmatmul.mubr.f32.gmra.mxu0 %v2157
      %v2368 = vpop.f32.mrf.mxu0
      %v2369 = vadd.f32 0.0, %v2368
      %v2370 = vpop.f32.mrf.mxu0
      %2371 = vmatprep.mubr.f32.mxu0 0.0
      %2372 = vmatmul.mubr.f32.gmra.mxu0 %v2160
      %v2373 = vpop.f32.mrf.mxu0
      %v2374 = vadd.f32 0.0, %v2373
      %v2375 = vpop.f32.mrf.mxu0
      %2376 = vmatprep.mubr.f32.mxu0 0.0
      %2377 = vmatmul.mubr.f32.gmra.mxu0 %v2163
      %v2378 = vpop.f32.mrf.mxu0
      %v2379 = vadd.f32 0.0, %v2378
      %v2380 = vpop.f32.mrf.mxu0
      %2381 = vmatprep.mubr.f32.mxu0 0.0
      %2382 = vmatmul.mubr.f32.gmra.mxu0 %v2166
      %v2383 = vpop.f32.mrf.mxu0
      %v2384 = vadd.f32 0.0, %v2383
      %v2385 = vpop.f32.mrf.mxu0
      %2386 = vmatprep.mubr.f32.mxu0 0.0
      %2387 = vmatmul.mubr.f32.gmra.mxu0 %v2169
      %v2388 = vpop.f32.mrf.mxu0
      %v2389 = vadd.f32 0.0, %v2388
      %v2390 = vpop.f32.mrf.mxu0
      %2391 = vmatprep.mubr.f32.mxu0 0.0
      %2392 = vmatmul.mubr.f32.gmra.mxu0 %v2172
      %v2393 = vpop.f32.mrf.mxu0
      %v2394 = vadd.f32 0.0, %v2393
      %v2395 = vpop.f32.mrf.mxu0
      %2396 = vmatprep.mubr.f32.mxu0 0.0
      %2397 = vmatmul.mubr.f32.gmra.mxu0 %v2175
      %v2398 = vpop.f32.mrf.mxu0
      %v2399 = vadd.f32 0.0, %v2398
      %v2400 = vpop.f32.mrf.mxu0
      %2401 = vdwg.mxu0
      %2402 = vmatprep.subr.mxu0 0.0
      %2403 = vmatpush1.msra.mxu0 0.0
      %2404 = vmatprep.subr.mxu0 0.0
      %2405 = vmatpush1.msra.mxu0 0.0
      %2406 = vmatprep.subr.mxu0 0.0
      %2407 = vmatpush1.msra.mxu0 0.0
      %2408 = vmatprep.subr.mxu0 0.0
      %2409 = vmatpush1.msra.mxu0 0.0
      %2410 = vmatprep.subr.mxu0 0.0
      %2411 = vmatpush1.msra.mxu0 0.0
      %2412 = vmatprep.subr.mxu0 0.0
      %2413 = vmatpush1.msra.mxu0 0.0
      %2414 = vmatprep.subr.mxu0 0.0
      %2415 = vmatpush1.msra.mxu0 0.0
      %2416 = vmatprep.subr.mxu0 0.0
      %2417 = vmatpush1.msra.mxu0 0.0
      %2418 = vmatprep.subr.mxu0 0.0
      %2419 = vmatpush1.msra.mxu0 0.0
      %2420 = vmatprep.subr.mxu0 0.0
      %2421 = vmatpush1.msra.mxu0 0.0
      %2422 = vmatprep.subr.mxu0 0.0
      %2423 = vmatpush1.msra.mxu0 0.0
      %2424 = vmatprep.subr.mxu0 0.0
      %2425 = vmatpush1.msra.mxu0 0.0
      %2426 = vmatprep.subr.mxu0 0.0
      %2427 = vmatpush1.msra.mxu0 %v2259
      %2428 = vmatprep.subr.mxu0 0.0
      %2429 = vmatpush1.msra.mxu0 %v2254
      %2430 = vmatprep.subr.mxu0 0.0
      %2431 = vmatpush1.msra.mxu0 %v2249
      %2432 = vmatprep.subr.mxu0 0.0
      %2433 = vmatpush1.msra.mxu0 %v2244
      %2434 = vmatprep.subr.mxu0 0.0
      %2435 = vmatpush2.msra.mxu0 0.0
      %2436 = vmatprep.subr.mxu0 0.0
      %2437 = vmatpush2.msra.mxu0 0.0
      %2438 = vmatprep.subr.mxu0 0.0
      %2439 = vmatpush2.msra.mxu0 0.0
      %2440 = vmatprep.subr.mxu0 0.0
      %2441 = vmatpush2.msra.mxu0 0.0
      %2442 = vmatprep.subr.mxu0 0.0
      %2443 = vmatpush2.msra.mxu0 0.0
      %2444 = vmatprep.subr.mxu0 0.0
      %2445 = vmatpush2.msra.mxu0 0.0
      %2446 = vmatprep.subr.mxu0 0.0
      %2447 = vmatpush2.msra.mxu0 0.0
      %2448 = vmatprep.subr.mxu0 0.0
      %2449 = vmatpush2.msra.mxu0 0.0
      %2450 = vmatprep.subr.mxu0 0.0
      %2451 = vmatpush2.msra.mxu0 0.0
      %2452 = vmatprep.subr.mxu0 0.0
      %2453 = vmatpush2.msra.mxu0 0.0
      %2454 = vmatprep.subr.mxu0 0.0
      %2455 = vmatpush2.msra.mxu0 0.0
      %2456 = vmatprep.subr.mxu0 0.0
      %2457 = vmatpush2.msra.mxu0 0.0
      %2458 = vmatprep.subr.mxu0 0.0
      %2459 = vmatpush2.msra.mxu0 0.0
      %2460 = vmatprep.subr.mxu0 0.0
      %2461 = vmatpush2.msra.mxu0 0.0
      %2462 = vmatprep.subr.mxu0 0.0
      %2463 = vmatpush2.msra.mxu0 0.0
      %2464 = vmatprep.subr.mxu0 0.0
      %2465 = vmatpush2.msra.mxu0 0.0
      %2466 = vmatprep.mubr.f32.mxu0 0.0
      %2467 = vmatmul.mubr.f32.gmra.mxu0 %v903
      %v2468 = vpop.f32.mrf.mxu0
      %v2469 = vadd.f32 0.0, %v2468
      %v2470 = vpop.f32.mrf.mxu0
      %2471 = vmatprep.mubr.f32.mxu0 0.0
      %2472 = vmatmul.mubr.f32.gmra.mxu0 %v906
      %v2473 = vpop.f32.mrf.mxu0
      %v2474 = vadd.f32 0.0, %v2473
      %v2475 = vpop.f32.mrf.mxu0
      %2476 = vmatprep.mubr.f32.mxu0 0.0
      %2477 = vmatmul.mubr.f32.gmra.mxu0 %v909
      %v2478 = vpop.f32.mrf.mxu0
      %v2479 = vadd.f32 0.0, %v2478
      %v2480 = vpop.f32.mrf.mxu0
      %2481 = vmatprep.mubr.f32.mxu0 0.0
      %2482 = vmatmul.mubr.f32.gmra.mxu0 %v912
      %v2483 = vpop.f32.mrf.mxu0
      %v2484 = vadd.f32 0.0, %v2483
      %v2485 = vpop.f32.mrf.mxu0
      %2486 = vdwg.mxu0
      %2487 = vmatprep.subr.mxu0 0.0
      %2488 = vmatpush1.msra.mxu0 0.0
      %2489 = vmatprep.subr.mxu0 0.0
      %2490 = vmatpush1.msra.mxu0 0.0
      %2491 = vmatprep.subr.mxu0 0.0
      %2492 = vmatpush1.msra.mxu0 0.0
      %2493 = vmatprep.subr.mxu0 0.0
      %2494 = vmatpush1.msra.mxu0 0.0
      %2495 = vmatprep.subr.mxu0 0.0
      %2496 = vmatpush1.msra.mxu0 0.0
      %2497 = vmatprep.subr.mxu0 0.0
      %2498 = vmatpush1.msra.mxu0 0.0
      %2499 = vmatprep.subr.mxu0 0.0
      %2500 = vmatpush1.msra.mxu0 0.0
      %2501 = vmatprep.subr.mxu0 0.0
      %2502 = vmatpush1.msra.mxu0 0.0
      %2503 = vmatprep.subr.mxu0 0.0
      %2504 = vmatpush1.msra.mxu0 0.0
      %2505 = vmatprep.subr.mxu0 0.0
      %2506 = vmatpush1.msra.mxu0 0.0
      %2507 = vmatprep.subr.mxu0 0.0
      %2508 = vmatpush1.msra.mxu0 0.0
      %2509 = vmatprep.subr.mxu0 0.0
      %2510 = vmatpush1.msra.mxu0 0.0
      %2511 = vmatprep.subr.mxu0 0.0
      %2512 = vmatpush1.msra.mxu0 %v2279
      %2513 = vmatprep.subr.mxu0 0.0
      %2514 = vmatpush1.msra.mxu0 %v2274
      %2515 = vmatprep.subr.mxu0 0.0
      %2516 = vmatpush1.msra.mxu0 %v2269
      %2517 = vmatprep.subr.mxu0 0.0
      %2518 = vmatpush1.msra.mxu0 %v2264
      %2519 = vmatprep.subr.mxu0 0.0
      %2520 = vmatpush2.msra.mxu0 0.0
      %2521 = vmatprep.subr.mxu0 0.0
      %2522 = vmatpush2.msra.mxu0 0.0
      %2523 = vmatprep.subr.mxu0 0.0
      %2524 = vmatpush2.msra.mxu0 0.0
      %2525 = vmatprep.subr.mxu0 0.0
      %2526 = vmatpush2.msra.mxu0 0.0
      %2527 = vmatprep.subr.mxu0 0.0
      %2528 = vmatpush2.msra.mxu0 0.0
      %2529 = vmatprep.subr.mxu0 0.0
      %2530 = vmatpush2.msra.mxu0 0.0
      %2531 = vmatprep.subr.mxu0 0.0
      %2532 = vmatpush2.msra.mxu0 0.0
      %2533 = vmatprep.subr.mxu0 0.0
      %2534 = vmatpush2.msra.mxu0 0.0
      %2535 = vmatprep.subr.mxu0 0.0
      %2536 = vmatpush2.msra.mxu0 0.0
      %2537 = vmatprep.subr.mxu0 0.0
      %2538 = vmatpush2.msra.mxu0 0.0
      %2539 = vmatprep.subr.mxu0 0.0
      %2540 = vmatpush2.msra.mxu0 0.0
      %2541 = vmatprep.subr.mxu0 0.0
      %2542 = vmatpush2.msra.mxu0 0.0
      %2543 = vmatprep.subr.mxu0 0.0
      %2544 = vmatpush2.msra.mxu0 0.0
      %2545 = vmatprep.subr.mxu0 0.0
      %2546 = vmatpush2.msra.mxu0 0.0
      %2547 = vmatprep.subr.mxu0 0.0
      %2548 = vmatpush2.msra.mxu0 0.0
      %2549 = vmatprep.subr.mxu0 0.0
      %2550 = vmatpush2.msra.mxu0 0.0
      %2551 = vmatprep.mubr.f32.mxu0 0.0
      %2552 = vmatmul.mubr.f32.gmra.mxu0 %v1000
      %v2553 = vpop.f32.mrf.mxu0
      %v2554 = vadd.f32 0.0, %v2553
      %v2555 = vpop.f32.mrf.mxu0
      %2556 = vmatprep.mubr.f32.mxu0 0.0
      %2557 = vmatmul.mubr.f32.gmra.mxu0 %v1003
      %v2558 = vpop.f32.mrf.mxu0
      %v2559 = vadd.f32 0.0, %v2558
      %v2560 = vpop.f32.mrf.mxu0
      %2561 = vmatprep.mubr.f32.mxu0 0.0
      %2562 = vmatmul.mubr.f32.gmra.mxu0 %v1006
      %v2563 = vpop.f32.mrf.mxu0
      %v2564 = vadd.f32 0.0, %v2563
      %v2565 = vpop.f32.mrf.mxu0
      %2566 = vmatprep.mubr.f32.mxu0 0.0
      %2567 = vmatmul.mubr.f32.gmra.mxu0 %v1009
      %v2568 = vpop.f32.mrf.mxu0
      %v2569 = vadd.f32 0.0, %v2568
      %v2570 = vpop.f32.mrf.mxu0
      %2571 = vdwg.mxu0
      %2572 = vmatprep.subr.mxu0 0.0
      %2573 = vmatpush1.msra.mxu0 0.0
      %2574 = vmatprep.subr.mxu0 0.0
      %2575 = vmatpush1.msra.mxu0 0.0
      %2576 = vmatprep.subr.mxu0 0.0
      %2577 = vmatpush1.msra.mxu0 0.0
      %2578 = vmatprep.subr.mxu0 0.0
      %2579 = vmatpush1.msra.mxu0 0.0
      %2580 = vmatprep.subr.mxu0 0.0
      %2581 = vmatpush1.msra.mxu0 0.0
      %2582 = vmatprep.subr.mxu0 0.0
      %2583 = vmatpush1.msra.mxu0 0.0
      %2584 = vmatprep.subr.mxu0 0.0
      %2585 = vmatpush1.msra.mxu0 0.0
      %2586 = vmatprep.subr.mxu0 0.0
      %2587 = vmatpush1.msra.mxu0 0.0
      %2588 = vmatprep.subr.mxu0 0.0
      %2589 = vmatpush1.msra.mxu0 0.0
      %2590 = vmatprep.subr.mxu0 0.0
      %2591 = vmatpush1.msra.mxu0 0.0
      %2592 = vmatprep.subr.mxu0 0.0
      %2593 = vmatpush1.msra.mxu0 0.0
      %2594 = vmatprep.subr.mxu0 0.0
      %2595 = vmatpush1.msra.mxu0 0.0
      %2596 = vmatprep.subr.mxu0 0.0
      %2597 = vmatpush1.msra.mxu0 %v2299
      %2598 = vmatprep.subr.mxu0 0.0
      %2599 = vmatpush1.msra.mxu0 %v2294
      %2600 = vmatprep.subr.mxu0 0.0
      %2601 = vmatpush1.msra.mxu0 %v2289
      %2602 = vmatprep.subr.mxu0 0.0
      %2603 = vmatpush1.msra.mxu0 %v2284
      %2604 = vmatprep.subr.mxu0 0.0
      %2605 = vmatpush2.msra.mxu0 0.0
      %2606 = vmatprep.subr.mxu0 0.0
      %2607 = vmatpush2.msra.mxu0 0.0
      %2608 = vmatprep.subr.mxu0 0.0
      %2609 = vmatpush2.msra.mxu0 0.0
      %2610 = vmatprep.subr.mxu0 0.0
      %2611 = vmatpush2.msra.mxu0 0.0
      %2612 = vmatprep.subr.mxu0 0.0
      %2613 = vmatpush2.msra.mxu0 0.0
      %2614 = vmatprep.subr.mxu0 0.0
      %2615 = vmatpush2.msra.mxu0 0.0
      %2616 = vmatprep.subr.mxu0 0.0
      %2617 = vmatpush2.msra.mxu0 0.0
      %2618 = vmatprep.subr.mxu0 0.0
      %2619 = vmatpush2.msra.mxu0 0.0
      %2620 = vmatprep.subr.mxu0 0.0
      %2621 = vmatpush2.msra.mxu0 0.0
      %2622 = vmatprep.subr.mxu0 0.0
      %2623 = vmatpush2.msra.mxu0 0.0
      %2624 = vmatprep.subr.mxu0 0.0
      %2625 = vmatpush2.msra.mxu0 0.0
      %2626 = vmatprep.subr.mxu0 0.0
      %2627 = vmatpush2.msra.mxu0 0.0
      %2628 = vmatprep.subr.mxu0 0.0
      %2629 = vmatpush2.msra.mxu0 0.0
      %2630 = vmatprep.subr.mxu0 0.0
      %2631 = vmatpush2.msra.mxu0 0.0
      %2632 = vmatprep.subr.mxu0 0.0
      %2633 = vmatpush2.msra.mxu0 0.0
      %2634 = vmatprep.subr.mxu0 0.0
      %2635 = vmatpush2.msra.mxu0 0.0
      %2636 = vmatprep.mubr.f32.mxu0 0.0
      %2637 = vmatmul.mubr.f32.gmra.mxu0 %v1097
      %v2638 = vpop.f32.mrf.mxu0
      %v2639 = vadd.f32 0.0, %v2638
      %v2640 = vpop.f32.mrf.mxu0
      %2641 = vmatprep.mubr.f32.mxu0 0.0
      %2642 = vmatmul.mubr.f32.gmra.mxu0 %v1100
      %v2643 = vpop.f32.mrf.mxu0
      %v2644 = vadd.f32 0.0, %v2643
      %v2645 = vpop.f32.mrf.mxu0
      %2646 = vmatprep.mubr.f32.mxu0 0.0
      %2647 = vmatmul.mubr.f32.gmra.mxu0 %v1103
      %v2648 = vpop.f32.mrf.mxu0
      %v2649 = vadd.f32 0.0, %v2648
      %v2650 = vpop.f32.mrf.mxu0
      %2651 = vmatprep.mubr.f32.mxu0 0.0
      %2652 = vmatmul.mubr.f32.gmra.mxu0 %v1106
      %v2653 = vpop.f32.mrf.mxu0
      %v2654 = vadd.f32 0.0, %v2653
      %v2655 = vpop.f32.mrf.mxu0
      %2656 = vdwg.mxu0
      %2657 = vmatprep.subr.mxu0 0.0
      %2658 = vmatpush1.msra.mxu0 0.0
      %2659 = vmatprep.subr.mxu0 0.0
      %2660 = vmatpush1.msra.mxu0 0.0
      %2661 = vmatprep.subr.mxu0 0.0
      %2662 = vmatpush1.msra.mxu0 0.0
      %2663 = vmatprep.subr.mxu0 0.0
      %2664 = vmatpush1.msra.mxu0 0.0
      %2665 = vmatprep.subr.mxu0 0.0
      %2666 = vmatpush1.msra.mxu0 0.0
      %2667 = vmatprep.subr.mxu0 0.0
      %2668 = vmatpush1.msra.mxu0 0.0
      %2669 = vmatprep.subr.mxu0 0.0
      %2670 = vmatpush1.msra.mxu0 0.0
      %2671 = vmatprep.subr.mxu0 0.0
      %2672 = vmatpush1.msra.mxu0 0.0
      %2673 = vmatprep.subr.mxu0 0.0
      %2674 = vmatpush1.msra.mxu0 0.0
      %2675 = vmatprep.subr.mxu0 0.0
      %2676 = vmatpush1.msra.mxu0 0.0
      %2677 = vmatprep.subr.mxu0 0.0
      %2678 = vmatpush1.msra.mxu0 0.0
      %2679 = vmatprep.subr.mxu0 0.0
      %2680 = vmatpush1.msra.mxu0 0.0
      %2681 = vmatprep.subr.mxu0 0.0
      %2682 = vmatpush1.msra.mxu0 %v2319
      %2683 = vmatprep.subr.mxu0 0.0
      %2684 = vmatpush1.msra.mxu0 %v2314
      %2685 = vmatprep.subr.mxu0 0.0
      %2686 = vmatpush1.msra.mxu0 %v2309
      %2687 = vmatprep.subr.mxu0 0.0
      %2688 = vmatpush1.msra.mxu0 %v2304
      %2689 = vmatprep.subr.mxu0 0.0
      %2690 = vmatpush2.msra.mxu0 0.0
      %2691 = vmatprep.subr.mxu0 0.0
      %2692 = vmatpush2.msra.mxu0 0.0
      %2693 = vmatprep.subr.mxu0 0.0
      %2694 = vmatpush2.msra.mxu0 0.0
      %2695 = vmatprep.subr.mxu0 0.0
      %2696 = vmatpush2.msra.mxu0 0.0
      %2697 = vmatprep.subr.mxu0 0.0
      %2698 = vmatpush2.msra.mxu0 0.0
      %2699 = vmatprep.subr.mxu0 0.0
      %2700 = vmatpush2.msra.mxu0 0.0
      %2701 = vmatprep.subr.mxu0 0.0
      %2702 = vmatpush2.msra.mxu0 0.0
      %2703 = vmatprep.subr.mxu0 0.0
      %2704 = vmatpush2.msra.mxu0 0.0
      %2705 = vmatprep.subr.mxu0 0.0
      %2706 = vmatpush2.msra.mxu0 0.0
      %2707 = vmatprep.subr.mxu0 0.0
      %2708 = vmatpush2.msra.mxu0 0.0
      %2709 = vmatprep.subr.mxu0 0.0
      %2710 = vmatpush2.msra.mxu0 0.0
      %2711 = vmatprep.subr.mxu0 0.0
      %2712 = vmatpush2.msra.mxu0 0.0
      %2713 = vmatprep.subr.mxu0 0.0
      %2714 = vmatpush2.msra.mxu0 0.0
      %2715 = vmatprep.subr.mxu0 0.0
      %2716 = vmatpush2.msra.mxu0 0.0
      %2717 = vmatprep.subr.mxu0 0.0
      %2718 = vmatpush2.msra.mxu0 0.0
      %2719 = vmatprep.subr.mxu0 0.0
      %2720 = vmatpush2.msra.mxu0 0.0
      %2721 = vmatprep.mubr.f32.mxu0 0.0
      %2722 = vmatmul.mubr.f32.gmra.mxu0 %v1194
      %v2723 = vpop.f32.mrf.mxu0
      %v2724 = vadd.f32 0.0, %v2723
      %v2725 = vpop.f32.mrf.mxu0
      %2726 = vmatprep.mubr.f32.mxu0 0.0
      %2727 = vmatmul.mubr.f32.gmra.mxu0 %v1197
      %v2728 = vpop.f32.mrf.mxu0
      %v2729 = vadd.f32 0.0, %v2728
      %v2730 = vpop.f32.mrf.mxu0
      %2731 = vmatprep.mubr.f32.mxu0 0.0
      %2732 = vmatmul.mubr.f32.gmra.mxu0 %v1200
      %v2733 = vpop.f32.mrf.mxu0
      %v2734 = vadd.f32 0.0, %v2733
      %v2735 = vpop.f32.mrf.mxu0
      %2736 = vmatprep.mubr.f32.mxu0 0.0
      %2737 = vmatmul.mubr.f32.gmra.mxu0 %v1203
      %v2738 = vpop.f32.mrf.mxu0
      %v2739 = vadd.f32 0.0, %v2738
      %v2740 = vpop.f32.mrf.mxu0
      %2741 = vdwg.mxu0
      %2742 = vmatprep.subr.mxu0 0.0
      %2743 = vmatpush1.msra.mxu0 0.0
      %2744 = vmatprep.subr.mxu0 0.0
      %2745 = vmatpush1.msra.mxu0 0.0
      %2746 = vmatprep.subr.mxu0 0.0
      %2747 = vmatpush1.msra.mxu0 0.0
      %2748 = vmatprep.subr.mxu0 0.0
      %2749 = vmatpush1.msra.mxu0 0.0
      %2750 = vmatprep.subr.mxu0 0.0
      %2751 = vmatpush1.msra.mxu0 0.0
      %2752 = vmatprep.subr.mxu0 0.0
      %2753 = vmatpush1.msra.mxu0 0.0
      %2754 = vmatprep.subr.mxu0 0.0
      %2755 = vmatpush1.msra.mxu0 0.0
      %2756 = vmatprep.subr.mxu0 0.0
      %2757 = vmatpush1.msra.mxu0 0.0
      %2758 = vmatprep.subr.mxu0 0.0
      %2759 = vmatpush1.msra.mxu0 0.0
      %2760 = vmatprep.subr.mxu0 0.0
      %2761 = vmatpush1.msra.mxu0 0.0
      %2762 = vmatprep.subr.mxu0 0.0
      %2763 = vmatpush1.msra.mxu0 0.0
      %2764 = vmatprep.subr.mxu0 0.0
      %2765 = vmatpush1.msra.mxu0 0.0
      %2766 = vmatprep.subr.mxu0 0.0
      %2767 = vmatpush1.msra.mxu0 %v2339
      %2768 = vmatprep.subr.mxu0 0.0
      %2769 = vmatpush1.msra.mxu0 %v2334
      %2770 = vmatprep.subr.mxu0 0.0
      %2771 = vmatpush1.msra.mxu0 %v2329
      %2772 = vmatprep.subr.mxu0 0.0
      %2773 = vmatpush1.msra.mxu0 %v2324
      %2774 = vmatprep.subr.mxu0 0.0
      %2775 = vmatpush2.msra.mxu0 0.0
      %2776 = vmatprep.subr.mxu0 0.0
      %2777 = vmatpush2.msra.mxu0 0.0
      %2778 = vmatprep.subr.mxu0 0.0
      %2779 = vmatpush2.msra.mxu0 0.0
      %2780 = vmatprep.subr.mxu0 0.0
      %2781 = vmatpush2.msra.mxu0 0.0
      %2782 = vmatprep.subr.mxu0 0.0
      %2783 = vmatpush2.msra.mxu0 0.0
      %2784 = vmatprep.subr.mxu0 0.0
      %2785 = vmatpush2.msra.mxu0 0.0
      %2786 = vmatprep.subr.mxu0 0.0
      %2787 = vmatpush2.msra.mxu0 0.0
      %2788 = vmatprep.subr.mxu0 0.0
      %2789 = vmatpush2.msra.mxu0 0.0
      %2790 = vmatprep.subr.mxu0 0.0
      %2791 = vmatpush2.msra.mxu0 0.0
      %2792 = vmatprep.subr.mxu0 0.0
      %2793 = vmatpush2.msra.mxu0 0.0
      %2794 = vmatprep.subr.mxu0 0.0
      %2795 = vmatpush2.msra.mxu0 0.0
      %2796 = vmatprep.subr.mxu0 0.0
      %2797 = vmatpush2.msra.mxu0 0.0
      %2798 = vmatprep.subr.mxu0 0.0
      %2799 = vmatpush2.msra.mxu0 0.0
      %2800 = vmatprep.subr.mxu0 0.0
      %2801 = vmatpush2.msra.mxu0 0.0
      %2802 = vmatprep.subr.mxu0 0.0
      %2803 = vmatpush2.msra.mxu0 0.0
      %2804 = vmatprep.subr.mxu0 0.0
      %2805 = vmatpush2.msra.mxu0 0.0
      %2806 = vmatprep.mubr.f32.mxu0 0.0
      %2807 = vmatmul.mubr.f32.gmra.mxu0 %v1291
      %v2808 = vpop.f32.mrf.mxu0
      %v2809 = vadd.f32 0.0, %v2808
      %v2810 = vpop.f32.mrf.mxu0
      %2811 = vmatprep.mubr.f32.mxu0 0.0
      %2812 = vmatmul.mubr.f32.gmra.mxu0 %v1294
      %v2813 = vpop.f32.mrf.mxu0
      %v2814 = vadd.f32 0.0, %v2813
      %v2815 = vpop.f32.mrf.mxu0
      %2816 = vmatprep.mubr.f32.mxu0 0.0
      %2817 = vmatmul.mubr.f32.gmra.mxu0 %v1297
      %v2818 = vpop.f32.mrf.mxu0
      %v2819 = vadd.f32 0.0, %v2818
      %v2820 = vpop.f32.mrf.mxu0
      %2821 = vmatprep.mubr.f32.mxu0 0.0
      %2822 = vmatmul.mubr.f32.gmra.mxu0 %v1300
      %v2823 = vpop.f32.mrf.mxu0
      %v2824 = vadd.f32 0.0, %v2823
      %v2825 = vpop.f32.mrf.mxu0
      %2826 = vdwg.mxu0
      %2827 = vmatprep.subr.mxu0 0.0
      %2828 = vmatpush1.msra.mxu0 0.0
      %2829 = vmatprep.subr.mxu0 0.0
      %2830 = vmatpush1.msra.mxu0 0.0
      %2831 = vmatprep.subr.mxu0 0.0
      %2832 = vmatpush1.msra.mxu0 0.0
      %2833 = vmatprep.subr.mxu0 0.0
      %2834 = vmatpush1.msra.mxu0 0.0
      %2835 = vmatprep.subr.mxu0 0.0
      %2836 = vmatpush1.msra.mxu0 0.0
      %2837 = vmatprep.subr.mxu0 0.0
      %2838 = vmatpush1.msra.mxu0 0.0
      %2839 = vmatprep.subr.mxu0 0.0
      %2840 = vmatpush1.msra.mxu0 0.0
      %2841 = vmatprep.subr.mxu0 0.0
      %2842 = vmatpush1.msra.mxu0 0.0
      %2843 = vmatprep.subr.mxu0 0.0
      %2844 = vmatpush1.msra.mxu0 0.0
      %2845 = vmatprep.subr.mxu0 0.0
      %2846 = vmatpush1.msra.mxu0 0.0
      %2847 = vmatprep.subr.mxu0 0.0
      %2848 = vmatpush1.msra.mxu0 0.0
      %2849 = vmatprep.subr.mxu0 0.0
      %2850 = vmatpush1.msra.mxu0 0.0
      %2851 = vmatprep.subr.mxu0 0.0
      %2852 = vmatpush1.msra.mxu0 %v2359
      %2853 = vmatprep.subr.mxu0 0.0
      %2854 = vmatpush1.msra.mxu0 %v2354
      %2855 = vmatprep.subr.mxu0 0.0
      %2856 = vmatpush1.msra.mxu0 %v2349
      %2857 = vmatprep.subr.mxu0 0.0
      %2858 = vmatpush1.msra.mxu0 %v2344
      %2859 = vmatprep.subr.mxu0 0.0
      %2860 = vmatpush2.msra.mxu0 0.0
      %2861 = vmatprep.subr.mxu0 0.0
      %2862 = vmatpush2.msra.mxu0 0.0
      %2863 = vmatprep.subr.mxu0 0.0
      %2864 = vmatpush2.msra.mxu0 0.0
      %2865 = vmatprep.subr.mxu0 0.0
      %2866 = vmatpush2.msra.mxu0 0.0
      %2867 = vmatprep.subr.mxu0 0.0
      %2868 = vmatpush2.msra.mxu0 0.0
      %2869 = vmatprep.subr.mxu0 0.0
      %2870 = vmatpush2.msra.mxu0 0.0
      %2871 = vmatprep.subr.mxu0 0.0
      %2872 = vmatpush2.msra.mxu0 0.0
      %2873 = vmatprep.subr.mxu0 0.0
      %2874 = vmatpush2.msra.mxu0 0.0
      %2875 = vmatprep.subr.mxu0 0.0
      %2876 = vmatpush2.msra.mxu0 0.0
      %2877 = vmatprep.subr.mxu0 0.0
      %2878 = vmatpush2.msra.mxu0 0.0
      %2879 = vmatprep.subr.mxu0 0.0
      %2880 = vmatpush2.msra.mxu0 0.0
      %2881 = vmatprep.subr.mxu0 0.0
      %2882 = vmatpush2.msra.mxu0 0.0
      %2883 = vmatprep.subr.mxu0 0.0
      %2884 = vmatpush2.msra.mxu0 0.0
      %2885 = vmatprep.subr.mxu0 0.0
      %2886 = vmatpush2.msra.mxu0 0.0
      %2887 = vmatprep.subr.mxu0 0.0
      %2888 = vmatpush2.msra.mxu0 0.0
      %2889 = vmatprep.subr.mxu0 0.0
      %2890 = vmatpush2.msra.mxu0 0.0
      %2891 = vmatprep.mubr.f32.mxu0 0.0
      %2892 = vmatmul.mubr.f32.gmra.mxu0 %v1388
      %v2893 = vpop.f32.mrf.mxu0
      %v2894 = vadd.f32 0.0, %v2893
      %v2895 = vpop.f32.mrf.mxu0
      %2896 = vmatprep.mubr.f32.mxu0 0.0
      %2897 = vmatmul.mubr.f32.gmra.mxu0 %v1391
      %v2898 = vpop.f32.mrf.mxu0
      %v2899 = vadd.f32 0.0, %v2898
      %v2900 = vpop.f32.mrf.mxu0
      %2901 = vmatprep.mubr.f32.mxu0 0.0
      %2902 = vmatmul.mubr.f32.gmra.mxu0 %v1394
      %v2903 = vpop.f32.mrf.mxu0
      %v2904 = vadd.f32 0.0, %v2903
      %v2905 = vpop.f32.mrf.mxu0
      %2906 = vmatprep.mubr.f32.mxu0 0.0
      %2907 = vmatmul.mubr.f32.gmra.mxu0 %v1397
      %v2908 = vpop.f32.mrf.mxu0
      %v2909 = vadd.f32 0.0, %v2908
      %v2910 = vpop.f32.mrf.mxu0
      %2911 = vdwg.mxu0
      %2912 = vmatprep.subr.mxu0 0.0
      %2913 = vmatpush1.msra.mxu0 0.0
      %2914 = vmatprep.subr.mxu0 0.0
      %2915 = vmatpush1.msra.mxu0 0.0
      %2916 = vmatprep.subr.mxu0 0.0
      %2917 = vmatpush1.msra.mxu0 0.0
      %2918 = vmatprep.subr.mxu0 0.0
      %2919 = vmatpush1.msra.mxu0 0.0
      %2920 = vmatprep.subr.mxu0 0.0
      %2921 = vmatpush1.msra.mxu0 0.0
      %2922 = vmatprep.subr.mxu0 0.0
      %2923 = vmatpush1.msra.mxu0 0.0
      %2924 = vmatprep.subr.mxu0 0.0
      %2925 = vmatpush1.msra.mxu0 0.0
      %2926 = vmatprep.subr.mxu0 0.0
      %2927 = vmatpush1.msra.mxu0 0.0
      %2928 = vmatprep.subr.mxu0 0.0
      %2929 = vmatpush1.msra.mxu0 0.0
      %2930 = vmatprep.subr.mxu0 0.0
      %2931 = vmatpush1.msra.mxu0 0.0
      %2932 = vmatprep.subr.mxu0 0.0
      %2933 = vmatpush1.msra.mxu0 0.0
      %2934 = vmatprep.subr.mxu0 0.0
      %2935 = vmatpush1.msra.mxu0 0.0
      %2936 = vmatprep.subr.mxu0 0.0
      %2937 = vmatpush1.msra.mxu0 %v2379
      %2938 = vmatprep.subr.mxu0 0.0
      %2939 = vmatpush1.msra.mxu0 %v2374
      %2940 = vmatprep.subr.mxu0 0.0
      %2941 = vmatpush1.msra.mxu0 %v2369
      %2942 = vmatprep.subr.mxu0 0.0
      %2943 = vmatpush1.msra.mxu0 %v2364
      %2944 = vmatprep.subr.mxu0 0.0
      %2945 = vmatpush2.msra.mxu0 0.0
      %2946 = vmatprep.subr.mxu0 0.0
      %2947 = vmatpush2.msra.mxu0 0.0
      %2948 = vmatprep.subr.mxu0 0.0
      %2949 = vmatpush2.msra.mxu0 0.0
      %2950 = vmatprep.subr.mxu0 0.0
      %2951 = vmatpush2.msra.mxu0 0.0
      %2952 = vmatprep.subr.mxu0 0.0
      %2953 = vmatpush2.msra.mxu0 0.0
      %2954 = vmatprep.subr.mxu0 0.0
      %2955 = vmatpush2.msra.mxu0 0.0
      %2956 = vmatprep.subr.mxu0 0.0
      %2957 = vmatpush2.msra.mxu0 0.0
      %2958 = vmatprep.subr.mxu0 0.0
      %2959 = vmatpush2.msra.mxu0 0.0
      %2960 = vmatprep.subr.mxu0 0.0
      %2961 = vmatpush2.msra.mxu0 0.0
      %2962 = vmatprep.subr.mxu0 0.0
      %2963 = vmatpush2.msra.mxu0 0.0
      %2964 = vmatprep.subr.mxu0 0.0
      %2965 = vmatpush2.msra.mxu0 0.0
      %2966 = vmatprep.subr.mxu0 0.0
      %2967 = vmatpush2.msra.mxu0 0.0
      %2968 = vmatprep.subr.mxu0 0.0
      %2969 = vmatpush2.msra.mxu0 0.0
      %2970 = vmatprep.subr.mxu0 0.0
      %2971 = vmatpush2.msra.mxu0 0.0
      %2972 = vmatprep.subr.mxu0 0.0
      %2973 = vmatpush2.msra.mxu0 0.0
      %2974 = vmatprep.subr.mxu0 0.0
      %2975 = vmatpush2.msra.mxu0 0.0
      %2976 = vmatprep.mubr.f32.mxu0 0.0
      %2977 = vmatmul.mubr.f32.gmra.mxu0 %v1485
      %v2978 = vpop.f32.mrf.mxu0
      %v2979 = vadd.f32 0.0, %v2978
      %v2980 = vpop.f32.mrf.mxu0
      %2981 = vmatprep.mubr.f32.mxu0 0.0
      %2982 = vmatmul.mubr.f32.gmra.mxu0 %v1488
      %v2983 = vpop.f32.mrf.mxu0
      %v2984 = vadd.f32 0.0, %v2983
      %v2985 = vpop.f32.mrf.mxu0
      %2986 = vmatprep.mubr.f32.mxu0 0.0
      %2987 = vmatmul.mubr.f32.gmra.mxu0 %v1491
      %v2988 = vpop.f32.mrf.mxu0
      %v2989 = vadd.f32 0.0, %v2988
      %v2990 = vpop.f32.mrf.mxu0
      %2991 = vmatprep.mubr.f32.mxu0 0.0
      %2992 = vmatmul.mubr.f32.gmra.mxu0 %v1494
      %v2993 = vpop.f32.mrf.mxu0
      %v2994 = vadd.f32 0.0, %v2993
      %v2995 = vpop.f32.mrf.mxu0
      %2996 = vdwg.mxu0
      %2997 = vmatprep.subr.mxu0 0.0
      %2998 = vmatpush1.msra.mxu0 0.0
      %2999 = vmatprep.subr.mxu0 0.0
      %3000 = vmatpush1.msra.mxu0 0.0
      %3001 = vmatprep.subr.mxu0 0.0
      %3002 = vmatpush1.msra.mxu0 0.0
      %3003 = vmatprep.subr.mxu0 0.0
      %3004 = vmatpush1.msra.mxu0 0.0
      %3005 = vmatprep.subr.mxu0 0.0
      %3006 = vmatpush1.msra.mxu0 0.0
      %3007 = vmatprep.subr.mxu0 0.0
      %3008 = vmatpush1.msra.mxu0 0.0
      %3009 = vmatprep.subr.mxu0 0.0
      %3010 = vmatpush1.msra.mxu0 0.0
      %3011 = vmatprep.subr.mxu0 0.0
      %3012 = vmatpush1.msra.mxu0 0.0
      %3013 = vmatprep.subr.mxu0 0.0
      %3014 = vmatpush1.msra.mxu0 0.0
      %3015 = vmatprep.subr.mxu0 0.0
      %3016 = vmatpush1.msra.mxu0 0.0
      %3017 = vmatprep.subr.mxu0 0.0
      %3018 = vmatpush1.msra.mxu0 0.0
      %3019 = vmatprep.subr.mxu0 0.0
      %3020 = vmatpush1.msra.mxu0 0.0
      %3021 = vmatprep.subr.mxu0 0.0
      %3022 = vmatpush1.msra.mxu0 %v2399
      %3023 = vmatprep.subr.mxu0 0.0
      %3024 = vmatpush1.msra.mxu0 %v2394
      %3025 = vmatprep.subr.mxu0 0.0
      %3026 = vmatpush1.msra.mxu0 %v2389
      %3027 = vmatprep.subr.mxu0 0.0
      %3028 = vmatpush1.msra.mxu0 %v2384
      %3029 = vmatprep.subr.mxu0 0.0
      %3030 = vmatpush2.msra.mxu0 0.0
      %3031 = vmatprep.subr.mxu0 0.0
      %3032 = vmatpush2.msra.mxu0 0.0
      %3033 = vmatprep.subr.mxu0 0.0
      %3034 = vmatpush2.msra.mxu0 0.0
      %3035 = vmatprep.subr.mxu0 0.0
      %3036 = vmatpush2.msra.mxu0 0.0
      %3037 = vmatprep.subr.mxu0 0.0
      %3038 = vmatpush2.msra.mxu0 0.0
      %3039 = vmatprep.subr.mxu0 0.0
      %3040 = vmatpush2.msra.mxu0 0.0
      %3041 = vmatprep.subr.mxu0 0.0
      %3042 = vmatpush2.msra.mxu0 0.0
      %3043 = vmatprep.subr.mxu0 0.0
      %3044 = vmatpush2.msra.mxu0 0.0
      %3045 = vmatprep.subr.mxu0 0.0
      %3046 = vmatpush2.msra.mxu0 0.0
      %3047 = vmatprep.subr.mxu0 0.0
      %3048 = vmatpush2.msra.mxu0 0.0
      %3049 = vmatprep.subr.mxu0 0.0
      %3050 = vmatpush2.msra.mxu0 0.0
      %3051 = vmatprep.subr.mxu0 0.0
      %3052 = vmatpush2.msra.mxu0 0.0
      %3053 = vmatprep.subr.mxu0 0.0
      %3054 = vmatpush2.msra.mxu0 0.0
      %3055 = vmatprep.subr.mxu0 0.0
      %3056 = vmatpush2.msra.mxu0 0.0
      %3057 = vmatprep.subr.mxu0 0.0
      %3058 = vmatpush2.msra.mxu0 0.0
      %3059 = vmatprep.subr.mxu0 0.0
      %3060 = vmatpush2.msra.mxu0 0.0
      %3061 = vmatprep.mubr.f32.mxu0 0.0
      %3062 = vmatmul.mubr.f32.gmra.mxu0 %v1582
      %v3063 = vpop.f32.mrf.mxu0
      %v3064 = vadd.f32 0.0, %v3063
      %v3065 = vpop.f32.mrf.mxu0
      %3066 = vmatprep.mubr.f32.mxu0 0.0
      %3067 = vmatmul.mubr.f32.gmra.mxu0 %v1585
      %v3068 = vpop.f32.mrf.mxu0
      %v3069 = vadd.f32 0.0, %v3068
      %v3070 = vpop.f32.mrf.mxu0
      %3071 = vmatprep.mubr.f32.mxu0 0.0
      %3072 = vmatmul.mubr.f32.gmra.mxu0 %v1588
      %v3073 = vpop.f32.mrf.mxu0
      %v3074 = vadd.f32 0.0, %v3073
      %v3075 = vpop.f32.mrf.mxu0
      %3076 = vmatprep.mubr.f32.mxu0 0.0
      %3077 = vmatmul.mubr.f32.gmra.mxu0 %v1591
      %v3078 = vpop.f32.mrf.mxu0
      %v3079 = vadd.f32 0.0, %v3078
      %v3080 = vpop.f32.mrf.mxu0
      %3081 = vdwg.mxu0
      %v3082 = vld [vmem:[%s1 + $0x138] sm:$0x1]
      %v3083 = vlaneseq
      %v3084 = vshrl.u32 %v3083, 7
      %v3085 = vsub.s32 0, %v3084
      %v3086 = vrot.slane %v3082, %v3085
      %v3087 = vadd.f32 %v2469, %v3086
      %v3088 = vadd.f32 %v2474, %v3086
      %v3089 = vadd.f32 %v2479, %v3086
      %v3090 = vadd.f32 %v2484, %v3086
      %v3091 = vadd.f32 %v2554, %v3086
      %v3092 = vadd.f32 %v2559, %v3086
      %v3093 = vadd.f32 %v2564, %v3086
      %v3094 = vadd.f32 %v2569, %v3086
      %v3095 = vadd.f32 %v2639, %v3086
      %v3096 = vadd.f32 %v2644, %v3086
      %v3097 = vadd.f32 %v2649, %v3086
      %v3098 = vadd.f32 %v2654, %v3086
      %v3099 = vadd.f32 %v2724, %v3086
      %v3100 = vadd.f32 %v2729, %v3086
      %v3101 = vadd.f32 %v2734, %v3086
      %v3102 = vadd.f32 %v2739, %v3086
      %v3103 = vadd.f32 %v2809, %v3086
      %v3104 = vadd.f32 %v2814, %v3086
      %v3105 = vadd.f32 %v2819, %v3086
      %v3106 = vadd.f32 %v2824, %v3086
      %v3107 = vadd.f32 %v2894, %v3086
      %v3108 = vadd.f32 %v2899, %v3086
      %v3109 = vadd.f32 %v2904, %v3086
      %v3110 = vadd.f32 %v2909, %v3086
      %v3111 = vadd.f32 %v2979, %v3086
      %v3112 = vadd.f32 %v2984, %v3086
      %v3113 = vadd.f32 %v2989, %v3086
      %v3114 = vadd.f32 %v2994, %v3086
      %v3115 = vadd.f32 %v3064, %v3086
      %v3116 = vadd.f32 %v3069, %v3086
      %v3117 = vadd.f32 %v3074, %v3086
      %v3118 = vadd.f32 %v3079, %v3086
      %v3119 = vld [vmem:[%s1 + $0x80] sm:$0xff]
      %v3120 = vld [vmem:[%s1 + $0x88] sm:$0xff]
      %v3121 = vld [vmem:[%s1 + $0x90] sm:$0xff]
      %v3122 = vld [vmem:[%s1 + $0x98] sm:$0xff]
      %v3123 = vld [vmem:[%s1 + $0x140] sm:$0x1]
      %v3124 = vlaneseq
      %v3125 = vshrl.u32 %v3124, 7
      %v3126 = vsub.s32 0, %v3125
      %v3127 = vrot.slane %v3123, %v3126
      %v3129 = vsel %vm223, %v3087, 0
      %v3132 = vsel %vm223, %v3088, 0
      %v3135 = vsel %vm223, %v3089, 0
      %v3138 = vsel %vm223, %v3090, 0
      %v3141 = vsel %vm223, %v3091, 0
      %v3144 = vsel %vm223, %v3092, 0
      %v3147 = vsel %vm223, %v3093, 0
      %v3150 = vsel %vm223, %v3094, 0
      %v3153 = vsel %vm223, %v3095, 0
      %v3156 = vsel %vm223, %v3096, 0
      %v3159 = vsel %vm223, %v3097, 0
      %v3162 = vsel %vm223, %v3098, 0
      %v3165 = vsel %vm223, %v3099, 0
      %v3168 = vsel %vm223, %v3100, 0
      %v3171 = vsel %vm223, %v3101, 0
      %v3174 = vsel %vm223, %v3102, 0
      %v3177 = vsel %vm223, %v3103, 0
      %v3180 = vsel %vm223, %v3104, 0
      %v3183 = vsel %vm223, %v3105, 0
      %v3186 = vsel %vm223, %v3106, 0
      %v3189 = vsel %vm223, %v3107, 0
      %v3192 = vsel %vm223, %v3108, 0
      %v3195 = vsel %vm223, %v3109, 0
      %v3198 = vsel %vm223, %v3110, 0
      %v3201 = vsel %vm223, %v3111, 0
      %v3204 = vsel %vm223, %v3112, 0
      %v3207 = vsel %vm223, %v3113, 0
      %v3210 = vsel %vm223, %v3114, 0
      %v3213 = vsel %vm223, %v3115, 0
      %v3216 = vsel %vm223, %v3116, 0
      %v3219 = vsel %vm223, %v3117, 0
      %v3222 = vsel %vm223, %v3118, 0
      %3224 = vmatprep.subr.mxu0 0.0
      %3225 = vmatpush1.msra.mxu0 0.0
      %3226 = vmatprep.subr.mxu0 0.0
      %3227 = vmatpush1.msra.mxu0 0.0
      %3228 = vmatprep.subr.mxu0 0.0
      %3229 = vmatpush1.msra.mxu0 0.0
      %3230 = vmatprep.subr.mxu0 0.0
      %3231 = vmatpush1.msra.mxu0 0.0
      %3232 = vmatprep.subr.mxu0 0.0
      %3233 = vmatpush1.msra.mxu0 0.0
      %3234 = vmatprep.subr.mxu0 0.0
      %3235 = vmatpush1.msra.mxu0 0.0
      %3236 = vmatprep.subr.mxu0 0.0
      %3237 = vmatpush1.msra.mxu0 0.0
      %3238 = vmatprep.subr.mxu0 0.0
      %3239 = vmatpush1.msra.mxu0 0.0
      %3240 = vmatprep.subr.mxu0 0.0
      %3241 = vmatpush1.msra.mxu0 0.0
      %3242 = vmatprep.subr.mxu0 0.0
      %3243 = vmatpush1.msra.mxu0 0.0
      %3244 = vmatprep.subr.mxu0 0.0
      %3245 = vmatpush1.msra.mxu0 0.0
      %3246 = vmatprep.subr.mxu0 0.0
      %3247 = vmatpush1.msra.mxu0 0.0
      %3248 = vmatprep.subr.mxu0 0.0
      %3249 = vmatpush1.msra.mxu0 %v3122
      %3250 = vmatprep.subr.mxu0 0.0
      %3251 = vmatpush1.msra.mxu0 %v3121
      %3252 = vmatprep.subr.mxu0 0.0
      %3253 = vmatpush1.msra.mxu0 %v3120
      %3254 = vmatprep.subr.mxu0 0.0
      %3255 = vmatpush1.msra.mxu0 %v3119
      %3256 = vmatprep.subr.mxu0 0.0
      %3257 = vmatpush2.msra.mxu0 0.0
      %3258 = vmatprep.subr.mxu0 0.0
      %3259 = vmatpush2.msra.mxu0 0.0
      %3260 = vmatprep.subr.mxu0 0.0
      %3261 = vmatpush2.msra.mxu0 0.0
      %3262 = vmatprep.subr.mxu0 0.0
      %3263 = vmatpush2.msra.mxu0 0.0
      %3264 = vmatprep.subr.mxu0 0.0
      %3265 = vmatpush2.msra.mxu0 0.0
      %3266 = vmatprep.subr.mxu0 0.0
      %3267 = vmatpush2.msra.mxu0 0.0
      %3268 = vmatprep.subr.mxu0 0.0
      %3269 = vmatpush2.msra.mxu0 0.0
      %3270 = vmatprep.subr.mxu0 0.0
      %3271 = vmatpush2.msra.mxu0 0.0
      %3272 = vmatprep.subr.mxu0 0.0
      %3273 = vmatpush2.msra.mxu0 0.0
      %3274 = vmatprep.subr.mxu0 0.0
      %3275 = vmatpush2.msra.mxu0 0.0
      %3276 = vmatprep.subr.mxu0 0.0
      %3277 = vmatpush2.msra.mxu0 0.0
      %3278 = vmatprep.subr.mxu0 0.0
      %3279 = vmatpush2.msra.mxu0 0.0
      %3280 = vmatprep.subr.mxu0 0.0
      %3281 = vmatpush2.msra.mxu0 0.0
      %3282 = vmatprep.subr.mxu0 0.0
      %3283 = vmatpush2.msra.mxu0 0.0
      %3284 = vmatprep.subr.mxu0 0.0
      %3285 = vmatpush2.msra.mxu0 0.0
      %3286 = vmatprep.subr.mxu0 0.0
      %3287 = vmatpush2.msra.mxu0 0.0
      %3288 = vmatprep.mubr.f32.mxu0 0.0
      %3289 = vmatmul.mubr.f32.gmra.mxu0 %v3129
      %v3290 = vpop.f32.mrf.mxu0
      %v3291 = vadd.f32 %v3127, %v3290
      %v3292 = vpop.f32.mrf.mxu0
      %3293 = vmatprep.mubr.f32.mxu0 0.0
      %3294 = vmatmul.mubr.f32.gmra.mxu0 %v3132
      %v3295 = vpop.f32.mrf.mxu0
      %v3296 = vadd.f32 %v3127, %v3295
      %v3297 = vpop.f32.mrf.mxu0
      %3298 = vmatprep.mubr.f32.mxu0 0.0
      %3299 = vmatmul.mubr.f32.gmra.mxu0 %v3135
      %v3300 = vpop.f32.mrf.mxu0
      %v3301 = vadd.f32 %v3127, %v3300
      %v3302 = vpop.f32.mrf.mxu0
      %3303 = vmatprep.mubr.f32.mxu0 0.0
      %3304 = vmatmul.mubr.f32.gmra.mxu0 %v3138
      %v3305 = vpop.f32.mrf.mxu0
      %v3306 = vadd.f32 %v3127, %v3305
      %v3307 = vpop.f32.mrf.mxu0
      %3308 = vmatprep.mubr.f32.mxu0 0.0
      %3309 = vmatmul.mubr.f32.gmra.mxu0 %v3141
      %v3310 = vpop.f32.mrf.mxu0
      %v3311 = vadd.f32 %v3127, %v3310
      %v3312 = vpop.f32.mrf.mxu0
      %3313 = vmatprep.mubr.f32.mxu0 0.0
      %3314 = vmatmul.mubr.f32.gmra.mxu0 %v3144
      %v3315 = vpop.f32.mrf.mxu0
      %v3316 = vadd.f32 %v3127, %v3315
      %v3317 = vpop.f32.mrf.mxu0
      %3318 = vmatprep.mubr.f32.mxu0 0.0
      %3319 = vmatmul.mubr.f32.gmra.mxu0 %v3147
      %v3320 = vpop.f32.mrf.mxu0
      %v3321 = vadd.f32 %v3127, %v3320
      %v3322 = vpop.f32.mrf.mxu0
      %3323 = vmatprep.mubr.f32.mxu0 0.0
      %3324 = vmatmul.mubr.f32.gmra.mxu0 %v3150
      %v3325 = vpop.f32.mrf.mxu0
      %v3326 = vadd.f32 %v3127, %v3325
      %v3327 = vpop.f32.mrf.mxu0
      %3328 = vmatprep.mubr.f32.mxu0 0.0
      %3329 = vmatmul.mubr.f32.gmra.mxu0 %v3153
      %v3330 = vpop.f32.mrf.mxu0
      %v3331 = vadd.f32 %v3127, %v3330
      %v3332 = vpop.f32.mrf.mxu0
      %3333 = vmatprep.mubr.f32.mxu0 0.0
      %3334 = vmatmul.mubr.f32.gmra.mxu0 %v3156
      %v3335 = vpop.f32.mrf.mxu0
      %v3336 = vadd.f32 %v3127, %v3335
      %v3337 = vpop.f32.mrf.mxu0
      %3338 = vmatprep.mubr.f32.mxu0 0.0
      %3339 = vmatmul.mubr.f32.gmra.mxu0 %v3159
      %v3340 = vpop.f32.mrf.mxu0
      %v3341 = vadd.f32 %v3127, %v3340
      %v3342 = vpop.f32.mrf.mxu0
      %3343 = vmatprep.mubr.f32.mxu0 0.0
      %3344 = vmatmul.mubr.f32.gmra.mxu0 %v3162
      %v3345 = vpop.f32.mrf.mxu0
      %v3346 = vadd.f32 %v3127, %v3345
      %v3347 = vpop.f32.mrf.mxu0
      %3348 = vmatprep.mubr.f32.mxu0 0.0
      %3349 = vmatmul.mubr.f32.gmra.mxu0 %v3165
      %v3350 = vpop.f32.mrf.mxu0
      %v3351 = vadd.f32 %v3127, %v3350
      %v3352 = vpop.f32.mrf.mxu0
      %3353 = vmatprep.mubr.f32.mxu0 0.0
      %3354 = vmatmul.mubr.f32.gmra.mxu0 %v3168
      %v3355 = vpop.f32.mrf.mxu0
      %v3356 = vadd.f32 %v3127, %v3355
      %v3357 = vpop.f32.mrf.mxu0
      %3358 = vmatprep.mubr.f32.mxu0 0.0
      %3359 = vmatmul.mubr.f32.gmra.mxu0 %v3171
      %v3360 = vpop.f32.mrf.mxu0
      %v3361 = vadd.f32 %v3127, %v3360
      %v3362 = vpop.f32.mrf.mxu0
      %3363 = vmatprep.mubr.f32.mxu0 0.0
      %3364 = vmatmul.mubr.f32.gmra.mxu0 %v3174
      %v3365 = vpop.f32.mrf.mxu0
      %v3366 = vadd.f32 %v3127, %v3365
      %v3367 = vpop.f32.mrf.mxu0
      %3368 = vmatprep.mubr.f32.mxu0 0.0
      %3369 = vmatmul.mubr.f32.gmra.mxu0 %v3177
      %v3370 = vpop.f32.mrf.mxu0
      %v3371 = vadd.f32 %v3127, %v3370
      %v3372 = vpop.f32.mrf.mxu0
      %3373 = vmatprep.mubr.f32.mxu0 0.0
      %3374 = vmatmul.mubr.f32.gmra.mxu0 %v3180
      %v3375 = vpop.f32.mrf.mxu0
      %v3376 = vadd.f32 %v3127, %v3375
      %v3377 = vpop.f32.mrf.mxu0
      %3378 = vmatprep.mubr.f32.mxu0 0.0
      %3379 = vmatmul.mubr.f32.gmra.mxu0 %v3183
      %v3380 = vpop.f32.mrf.mxu0
      %v3381 = vadd.f32 %v3127, %v3380
      %v3382 = vpop.f32.mrf.mxu0
      %3383 = vmatprep.mubr.f32.mxu0 0.0
      %3384 = vmatmul.mubr.f32.gmra.mxu0 %v3186
      %v3385 = vpop.f32.mrf.mxu0
      %v3386 = vadd.f32 %v3127, %v3385
      %v3387 = vpop.f32.mrf.mxu0
      %3388 = vmatprep.mubr.f32.mxu0 0.0
      %3389 = vmatmul.mubr.f32.gmra.mxu0 %v3189
      %v3390 = vpop.f32.mrf.mxu0
      %v3391 = vadd.f32 %v3127, %v3390
      %v3392 = vpop.f32.mrf.mxu0
      %3393 = vmatprep.mubr.f32.mxu0 0.0
      %3394 = vmatmul.mubr.f32.gmra.mxu0 %v3192
      %v3395 = vpop.f32.mrf.mxu0
      %v3396 = vadd.f32 %v3127, %v3395
      %v3397 = vpop.f32.mrf.mxu0
      %3398 = vmatprep.mubr.f32.mxu0 0.0
      %3399 = vmatmul.mubr.f32.gmra.mxu0 %v3195
      %v3400 = vpop.f32.mrf.mxu0
      %v3401 = vadd.f32 %v3127, %v3400
      %v3402 = vpop.f32.mrf.mxu0
      %3403 = vmatprep.mubr.f32.mxu0 0.0
      %3404 = vmatmul.mubr.f32.gmra.mxu0 %v3198
      %v3405 = vpop.f32.mrf.mxu0
      %v3406 = vadd.f32 %v3127, %v3405
      %v3407 = vpop.f32.mrf.mxu0
      %3408 = vmatprep.mubr.f32.mxu0 0.0
      %3409 = vmatmul.mubr.f32.gmra.mxu0 %v3201
      %v3410 = vpop.f32.mrf.mxu0
      %v3411 = vadd.f32 %v3127, %v3410
      %v3412 = vpop.f32.mrf.mxu0
      %3413 = vmatprep.mubr.f32.mxu0 0.0
      %3414 = vmatmul.mubr.f32.gmra.mxu0 %v3204
      %v3415 = vpop.f32.mrf.mxu0
      %v3416 = vadd.f32 %v3127, %v3415
      %v3417 = vpop.f32.mrf.mxu0
      %3418 = vmatprep.mubr.f32.mxu0 0.0
      %3419 = vmatmul.mubr.f32.gmra.mxu0 %v3207
      %v3420 = vpop.f32.mrf.mxu0
      %v3421 = vadd.f32 %v3127, %v3420
      %v3422 = vpop.f32.mrf.mxu0
      %3423 = vmatprep.mubr.f32.mxu0 0.0
      %3424 = vmatmul.mubr.f32.gmra.mxu0 %v3210
      %v3425 = vpop.f32.mrf.mxu0
      %v3426 = vadd.f32 %v3127, %v3425
      %v3427 = vpop.f32.mrf.mxu0
      %3428 = vmatprep.mubr.f32.mxu0 0.0
      %3429 = vmatmul.mubr.f32.gmra.mxu0 %v3213
      %v3430 = vpop.f32.mrf.mxu0
      %v3431 = vadd.f32 %v3127, %v3430
      %v3432 = vpop.f32.mrf.mxu0
      %3433 = vmatprep.mubr.f32.mxu0 0.0
      %3434 = vmatmul.mubr.f32.gmra.mxu0 %v3216
      %v3435 = vpop.f32.mrf.mxu0
      %v3436 = vadd.f32 %v3127, %v3435
      %v3437 = vpop.f32.mrf.mxu0
      %3438 = vmatprep.mubr.f32.mxu0 0.0
      %3439 = vmatmul.mubr.f32.gmra.mxu0 %v3219
      %v3440 = vpop.f32.mrf.mxu0
      %v3441 = vadd.f32 %v3127, %v3440
      %v3442 = vpop.f32.mrf.mxu0
      %3443 = vmatprep.mubr.f32.mxu0 0.0
      %3444 = vmatmul.mubr.f32.gmra.mxu0 %v3222
      %v3445 = vpop.f32.mrf.mxu0
      %v3446 = vadd.f32 %v3127, %v3445
      %v3447 = vpop.f32.mrf.mxu0
      %3448 = vdwg.mxu0
      %v3449 = vmax.f32 %v3291, 0.0
      %v3450 = vmax.f32 %v3296, 0.0
      %v3451 = vmax.f32 %v3301, 0.0
      %v3452 = vmax.f32 %v3306, 0.0
      %v3453 = vmax.f32 %v3311, 0.0
      %v3454 = vmax.f32 %v3316, 0.0
      %v3455 = vmax.f32 %v3321, 0.0
      %v3456 = vmax.f32 %v3326, 0.0
      %v3457 = vmax.f32 %v3331, 0.0
      %v3458 = vmax.f32 %v3336, 0.0
      %v3459 = vmax.f32 %v3341, 0.0
      %v3460 = vmax.f32 %v3346, 0.0
      %v3461 = vmax.f32 %v3351, 0.0
      %v3462 = vmax.f32 %v3356, 0.0
      %v3463 = vmax.f32 %v3361, 0.0
      %v3464 = vmax.f32 %v3366, 0.0
      %v3465 = vmax.f32 %v3371, 0.0
      %v3466 = vmax.f32 %v3376, 0.0
      %v3467 = vmax.f32 %v3381, 0.0
      %v3468 = vmax.f32 %v3386, 0.0
      %v3469 = vmax.f32 %v3391, 0.0
      %v3470 = vmax.f32 %v3396, 0.0
      %v3471 = vmax.f32 %v3401, 0.0
      %v3472 = vmax.f32 %v3406, 0.0
      %v3473 = vmax.f32 %v3411, 0.0
      %v3474 = vmax.f32 %v3416, 0.0
      %v3475 = vmax.f32 %v3421, 0.0
      %v3476 = vmax.f32 %v3426, 0.0
      %v3477 = vmax.f32 %v3431, 0.0
      %v3478 = vmax.f32 %v3436, 0.0
      %v3479 = vmax.f32 %v3441, 0.0
      %v3480 = vmax.f32 %v3446, 0.0
      %v3481 = vsel %vm223, %v3449, 0.0
      %v3482 = vrot.slane %v3481, 4
      %v3483 = vadd.f32 %v3481, %v3482
      %v3484 = vrot.slane %v3483, 2
      %v3485 = vadd.f32 %v3483, %v3484
      %v3486 = vrot.slane %v3485, 1
      %v3487 = vadd.f32 %v3485, %v3486
      %v3488 = vsel %vm223, %v3450, 0.0
      %v3489 = vrot.slane %v3488, 4
      %v3490 = vadd.f32 %v3488, %v3489
      %v3491 = vrot.slane %v3490, 2
      %v3492 = vadd.f32 %v3490, %v3491
      %v3493 = vrot.slane %v3492, 1
      %v3494 = vadd.f32 %v3492, %v3493
      %v3495 = vsel %vm223, %v3451, 0.0
      %v3496 = vrot.slane %v3495, 4
      %v3497 = vadd.f32 %v3495, %v3496
      %v3498 = vrot.slane %v3497, 2
      %v3499 = vadd.f32 %v3497, %v3498
      %v3500 = vrot.slane %v3499, 1
      %v3501 = vadd.f32 %v3499, %v3500
      %v3502 = vsel %vm223, %v3452, 0.0
      %v3503 = vrot.slane %v3502, 4
      %v3504 = vadd.f32 %v3502, %v3503
      %v3505 = vrot.slane %v3504, 2
      %v3506 = vadd.f32 %v3504, %v3505
      %v3507 = vrot.slane %v3506, 1
      %v3508 = vadd.f32 %v3506, %v3507
      %v3509 = vsel %vm223, %v3453, 0.0
      %v3510 = vrot.slane %v3509, 4
      %v3511 = vadd.f32 %v3509, %v3510
      %v3512 = vrot.slane %v3511, 2
      %v3513 = vadd.f32 %v3511, %v3512
      %v3514 = vrot.slane %v3513, 1
      %v3515 = vadd.f32 %v3513, %v3514
      %v3516 = vsel %vm223, %v3454, 0.0
      %v3517 = vrot.slane %v3516, 4
      %v3518 = vadd.f32 %v3516, %v3517
      %v3519 = vrot.slane %v3518, 2
      %v3520 = vadd.f32 %v3518, %v3519
      %v3521 = vrot.slane %v3520, 1
      %v3522 = vadd.f32 %v3520, %v3521
      %v3523 = vsel %vm223, %v3455, 0.0
      %v3524 = vrot.slane %v3523, 4
      %v3525 = vadd.f32 %v3523, %v3524
      %v3526 = vrot.slane %v3525, 2
      %v3527 = vadd.f32 %v3525, %v3526
      %v3528 = vrot.slane %v3527, 1
      %v3529 = vadd.f32 %v3527, %v3528
      %v3530 = vsel %vm223, %v3456, 0.0
      %v3531 = vrot.slane %v3530, 4
      %v3532 = vadd.f32 %v3530, %v3531
      %v3533 = vrot.slane %v3532, 2
      %v3534 = vadd.f32 %v3532, %v3533
      %v3535 = vrot.slane %v3534, 1
      %v3536 = vadd.f32 %v3534, %v3535
      %v3537 = vsel %vm223, %v3457, 0.0
      %v3538 = vrot.slane %v3537, 4
      %v3539 = vadd.f32 %v3537, %v3538
      %v3540 = vrot.slane %v3539, 2
      %v3541 = vadd.f32 %v3539, %v3540
      %v3542 = vrot.slane %v3541, 1
      %v3543 = vadd.f32 %v3541, %v3542
      %v3544 = vsel %vm223, %v3458, 0.0
      %v3545 = vrot.slane %v3544, 4
      %v3546 = vadd.f32 %v3544, %v3545
      %v3547 = vrot.slane %v3546, 2
      %v3548 = vadd.f32 %v3546, %v3547
      %v3549 = vrot.slane %v3548, 1
      %v3550 = vadd.f32 %v3548, %v3549
      %v3551 = vsel %vm223, %v3459, 0.0
      %v3552 = vrot.slane %v3551, 4
      %v3553 = vadd.f32 %v3551, %v3552
      %v3554 = vrot.slane %v3553, 2
      %v3555 = vadd.f32 %v3553, %v3554
      %v3556 = vrot.slane %v3555, 1
      %v3557 = vadd.f32 %v3555, %v3556
      %v3558 = vsel %vm223, %v3460, 0.0
      %v3559 = vrot.slane %v3558, 4
      %v3560 = vadd.f32 %v3558, %v3559
      %v3561 = vrot.slane %v3560, 2
      %v3562 = vadd.f32 %v3560, %v3561
      %v3563 = vrot.slane %v3562, 1
      %v3564 = vadd.f32 %v3562, %v3563
      %v3565 = vsel %vm223, %v3461, 0.0
      %v3566 = vrot.slane %v3565, 4
      %v3567 = vadd.f32 %v3565, %v3566
      %v3568 = vrot.slane %v3567, 2
      %v3569 = vadd.f32 %v3567, %v3568
      %v3570 = vrot.slane %v3569, 1
      %v3571 = vadd.f32 %v3569, %v3570
      %v3572 = vsel %vm223, %v3462, 0.0
      %v3573 = vrot.slane %v3572, 4
      %v3574 = vadd.f32 %v3572, %v3573
      %v3575 = vrot.slane %v3574, 2
      %v3576 = vadd.f32 %v3574, %v3575
      %v3577 = vrot.slane %v3576, 1
      %v3578 = vadd.f32 %v3576, %v3577
      %v3579 = vsel %vm223, %v3463, 0.0
      %v3580 = vrot.slane %v3579, 4
      %v3581 = vadd.f32 %v3579, %v3580
      %v3582 = vrot.slane %v3581, 2
      %v3583 = vadd.f32 %v3581, %v3582
      %v3584 = vrot.slane %v3583, 1
      %v3585 = vadd.f32 %v3583, %v3584
      %v3586 = vsel %vm223, %v3464, 0.0
      %v3587 = vrot.slane %v3586, 4
      %v3588 = vadd.f32 %v3586, %v3587
      %v3589 = vrot.slane %v3588, 2
      %v3590 = vadd.f32 %v3588, %v3589
      %v3591 = vrot.slane %v3590, 1
      %v3592 = vadd.f32 %v3590, %v3591
      %v3593 = vsel %vm223, %v3465, 0.0
      %v3594 = vrot.slane %v3593, 4
      %v3595 = vadd.f32 %v3593, %v3594
      %v3596 = vrot.slane %v3595, 2
      %v3597 = vadd.f32 %v3595, %v3596
      %v3598 = vrot.slane %v3597, 1
      %v3599 = vadd.f32 %v3597, %v3598
      %v3600 = vsel %vm223, %v3466, 0.0
      %v3601 = vrot.slane %v3600, 4
      %v3602 = vadd.f32 %v3600, %v3601
      %v3603 = vrot.slane %v3602, 2
      %v3604 = vadd.f32 %v3602, %v3603
      %v3605 = vrot.slane %v3604, 1
      %v3606 = vadd.f32 %v3604, %v3605
      %v3607 = vsel %vm223, %v3467, 0.0
      %v3608 = vrot.slane %v3607, 4
      %v3609 = vadd.f32 %v3607, %v3608
      %v3610 = vrot.slane %v3609, 2
      %v3611 = vadd.f32 %v3609, %v3610
      %v3612 = vrot.slane %v3611, 1
      %v3613 = vadd.f32 %v3611, %v3612
      %v3614 = vsel %vm223, %v3468, 0.0
      %v3615 = vrot.slane %v3614, 4
      %v3616 = vadd.f32 %v3614, %v3615
      %v3617 = vrot.slane %v3616, 2
      %v3618 = vadd.f32 %v3616, %v3617
      %v3619 = vrot.slane %v3618, 1
      %v3620 = vadd.f32 %v3618, %v3619
      %v3621 = vsel %vm223, %v3469, 0.0
      %v3622 = vrot.slane %v3621, 4
      %v3623 = vadd.f32 %v3621, %v3622
      %v3624 = vrot.slane %v3623, 2
      %v3625 = vadd.f32 %v3623, %v3624
      %v3626 = vrot.slane %v3625, 1
      %v3627 = vadd.f32 %v3625, %v3626
      %v3628 = vsel %vm223, %v3470, 0.0
      %v3629 = vrot.slane %v3628, 4
      %v3630 = vadd.f32 %v3628, %v3629
      %v3631 = vrot.slane %v3630, 2
      %v3632 = vadd.f32 %v3630, %v3631
      %v3633 = vrot.slane %v3632, 1
      %v3634 = vadd.f32 %v3632, %v3633
      %v3635 = vsel %vm223, %v3471, 0.0
      %v3636 = vrot.slane %v3635, 4
      %v3637 = vadd.f32 %v3635, %v3636
      %v3638 = vrot.slane %v3637, 2
      %v3639 = vadd.f32 %v3637, %v3638
      %v3640 = vrot.slane %v3639, 1
      %v3641 = vadd.f32 %v3639, %v3640
      %v3642 = vsel %vm223, %v3472, 0.0
      %v3643 = vrot.slane %v3642, 4
      %v3644 = vadd.f32 %v3642, %v3643
      %v3645 = vrot.slane %v3644, 2
      %v3646 = vadd.f32 %v3644, %v3645
      %v3647 = vrot.slane %v3646, 1
      %v3648 = vadd.f32 %v3646, %v3647
      %v3649 = vsel %vm223, %v3473, 0.0
      %v3650 = vrot.slane %v3649, 4
      %v3651 = vadd.f32 %v3649, %v3650
      %v3652 = vrot.slane %v3651, 2
      %v3653 = vadd.f32 %v3651, %v3652
      %v3654 = vrot.slane %v3653, 1
      %v3655 = vadd.f32 %v3653, %v3654
      %v3656 = vsel %vm223, %v3474, 0.0
      %v3657 = vrot.slane %v3656, 4
      %v3658 = vadd.f32 %v3656, %v3657
      %v3659 = vrot.slane %v3658, 2
      %v3660 = vadd.f32 %v3658, %v3659
      %v3661 = vrot.slane %v3660, 1
      %v3662 = vadd.f32 %v3660, %v3661
      %v3663 = vsel %vm223, %v3475, 0.0
      %v3664 = vrot.slane %v3663, 4
      %v3665 = vadd.f32 %v3663, %v3664
      %v3666 = vrot.slane %v3665, 2
      %v3667 = vadd.f32 %v3665, %v3666
      %v3668 = vrot.slane %v3667, 1
      %v3669 = vadd.f32 %v3667, %v3668
      %v3670 = vsel %vm223, %v3476, 0.0
      %v3671 = vrot.slane %v3670, 4
      %v3672 = vadd.f32 %v3670, %v3671
      %v3673 = vrot.slane %v3672, 2
      %v3674 = vadd.f32 %v3672, %v3673
      %v3675 = vrot.slane %v3674, 1
      %v3676 = vadd.f32 %v3674, %v3675
      %v3677 = vsel %vm223, %v3477, 0.0
      %v3678 = vrot.slane %v3677, 4
      %v3679 = vadd.f32 %v3677, %v3678
      %v3680 = vrot.slane %v3679, 2
      %v3681 = vadd.f32 %v3679, %v3680
      %v3682 = vrot.slane %v3681, 1
      %v3683 = vadd.f32 %v3681, %v3682
      %v3684 = vsel %vm223, %v3478, 0.0
      %v3685 = vrot.slane %v3684, 4
      %v3686 = vadd.f32 %v3684, %v3685
      %v3687 = vrot.slane %v3686, 2
      %v3688 = vadd.f32 %v3686, %v3687
      %v3689 = vrot.slane %v3688, 1
      %v3690 = vadd.f32 %v3688, %v3689
      %v3691 = vsel %vm223, %v3479, 0.0
      %v3692 = vrot.slane %v3691, 4
      %v3693 = vadd.f32 %v3691, %v3692
      %v3694 = vrot.slane %v3693, 2
      %v3695 = vadd.f32 %v3693, %v3694
      %v3696 = vrot.slane %v3695, 1
      %v3697 = vadd.f32 %v3695, %v3696
      %v3698 = vsel %vm223, %v3480, 0.0
      %v3699 = vrot.slane %v3698, 4
      %v3700 = vadd.f32 %v3698, %v3699
      %v3701 = vrot.slane %v3700, 2
      %v3702 = vadd.f32 %v3700, %v3701
      %v3703 = vrot.slane %v3702, 1
      %v3704 = vadd.f32 %v3702, %v3703
      %v3705 = vrcp.pop 8.0
      %v3706 = vmul.f32 %v3487, %v3705
      %v3707 = vmul.f32 %v3494, %v3705
      %v3708 = vmul.f32 %v3501, %v3705
      %v3709 = vmul.f32 %v3508, %v3705
      %v3710 = vmul.f32 %v3515, %v3705
      %v3711 = vmul.f32 %v3522, %v3705
      %v3712 = vmul.f32 %v3529, %v3705
      %v3713 = vmul.f32 %v3536, %v3705
      %v3714 = vmul.f32 %v3543, %v3705
      %v3715 = vmul.f32 %v3550, %v3705
      %v3716 = vmul.f32 %v3557, %v3705
      %v3717 = vmul.f32 %v3564, %v3705
      %v3718 = vmul.f32 %v3571, %v3705
      %v3719 = vmul.f32 %v3578, %v3705
      %v3720 = vmul.f32 %v3585, %v3705
      %v3721 = vmul.f32 %v3592, %v3705
      %v3722 = vmul.f32 %v3599, %v3705
      %v3723 = vmul.f32 %v3606, %v3705
      %v3724 = vmul.f32 %v3613, %v3705
      %v3725 = vmul.f32 %v3620, %v3705
      %v3726 = vmul.f32 %v3627, %v3705
      %v3727 = vmul.f32 %v3634, %v3705
      %v3728 = vmul.f32 %v3641, %v3705
      %v3729 = vmul.f32 %v3648, %v3705
      %v3730 = vmul.f32 %v3655, %v3705
      %v3731 = vmul.f32 %v3662, %v3705
      %v3732 = vmul.f32 %v3669, %v3705
      %v3733 = vmul.f32 %v3676, %v3705
      %v3734 = vmul.f32 %v3683, %v3705
      %v3735 = vmul.f32 %v3690, %v3705
      %v3736 = vmul.f32 %v3697, %v3705
      %v3737 = vmul.f32 %v3704, %v3705
      %v3738 = vld [vmem:[%s1 + $0xa0] sm:$0xff]
      %v3739 = vld [vmem:[%s1 + $0xa8] sm:$0xff]
      %v3740 = vld [vmem:[%s1 + $0xb0] sm:$0xff]
      %v3741 = vld [vmem:[%s1 + $0xb8] sm:$0xff]
      %v3742 = vld [vmem:[%s1 + $0x148] sm:$0x1]
      %v3743 = vlaneseq
      %v3744 = vshrl.u32 %v3743, 7
      %v3745 = vsub.s32 0, %v3744
      %v3746 = vrot.slane %v3742, %v3745
      %vm3779 = vcmask 1041409
      %v3780 = vsel %vm3779, %v3707, %v3706
      %vm3781 = vcmask 1042434
      %v3782 = vsel %vm3781, %v3708, %v3780
      %vm3783 = vcmask 1043459
      %v3784 = vsel %vm3783, %v3709, %v3782
      %vm3785 = vcmask 1044484
      %v3786 = vsel %vm3785, %v3710, %v3784
      %vm3787 = vcmask 1045509
      %v3788 = vsel %vm3787, %v3711, %v3786
      %vm3789 = vcmask 1046534
      %v3790 = vsel %vm3789, %v3712, %v3788
      %vm3791 = vcmask 1047559
      %v3792 = vsel %vm3791, %v3713, %v3790
      %v3793 = vsel %vm3779, %v3715, %v3714
      %v3794 = vsel %vm3781, %v3716, %v3793
      %v3795 = vsel %vm3783, %v3717, %v3794
      %v3796 = vsel %vm3785, %v3718, %v3795
      %v3797 = vsel %vm3787, %v3719, %v3796
      %v3798 = vsel %vm3789, %v3720, %v3797
      %v3799 = vsel %vm3791, %v3721, %v3798
      %v3800 = vsel %vm3779, %v3723, %v3722
      %v3801 = vsel %vm3781, %v3724, %v3800
      %v3802 = vsel %vm3783, %v3725, %v3801
      %v3803 = vsel %vm3785, %v3726, %v3802
      %v3804 = vsel %vm3787, %v3727, %v3803
      %v3805 = vsel %vm3789, %v3728, %v3804
      %v3806 = vsel %vm3791, %v3729, %v3805
      %v3807 = vsel %vm3779, %v3731, %v3730
      %v3808 = vsel %vm3781, %v3732, %v3807
      %v3809 = vsel %vm3783, %v3733, %v3808
      %v3810 = vsel %vm3785, %v3734, %v3809
      %v3811 = vsel %vm3787, %v3735, %v3810
      %v3812 = vsel %vm3789, %v3736, %v3811
      %v3813 = vsel %vm3791, %v3737, %v3812
      %v3814 = vsel %vm223, %v3792, 0
      %v3816 = vsel %vm223, %v3799, 0
      %v3818 = vsel %vm223, %v3806, 0
      %v3820 = vsel %vm223, %v3813, 0
      %3822 = vmatprep.subr.mxu0 0.0
      %3823 = vmatpush1.msra.mxu0 0.0
      %3824 = vmatprep.subr.mxu0 0.0
      %3825 = vmatpush1.msra.mxu0 0.0
      %3826 = vmatprep.subr.mxu0 0.0
      %3827 = vmatpush1.msra.mxu0 0.0
      %3828 = vmatprep.subr.mxu0 0.0
      %3829 = vmatpush1.msra.mxu0 0.0
      %3830 = vmatprep.subr.mxu0 0.0
      %3831 = vmatpush1.msra.mxu0 0.0
      %3832 = vmatprep.subr.mxu0 0.0
      %3833 = vmatpush1.msra.mxu0 0.0
      %3834 = vmatprep.subr.mxu0 0.0
      %3835 = vmatpush1.msra.mxu0 0.0
      %3836 = vmatprep.subr.mxu0 0.0
      %3837 = vmatpush1.msra.mxu0 0.0
      %3838 = vmatprep.subr.mxu0 0.0
      %3839 = vmatpush1.msra.mxu0 0.0
      %3840 = vmatprep.subr.mxu0 0.0
      %3841 = vmatpush1.msra.mxu0 0.0
      %3842 = vmatprep.subr.mxu0 0.0
      %3843 = vmatpush1.msra.mxu0 0.0
      %3844 = vmatprep.subr.mxu0 0.0
      %3845 = vmatpush1.msra.mxu0 0.0
      %3846 = vmatprep.subr.mxu0 0.0
      %3847 = vmatpush1.msra.mxu0 %v3741
      %3848 = vmatprep.subr.mxu0 0.0
      %3849 = vmatpush1.msra.mxu0 %v3740
      %3850 = vmatprep.subr.mxu0 0.0
      %3851 = vmatpush1.msra.mxu0 %v3739
      %3852 = vmatprep.subr.mxu0 0.0
      %3853 = vmatpush1.msra.mxu0 %v3738
      %3854 = vmatprep.subr.mxu0 0.0
      %3855 = vmatpush2.msra.mxu0 0.0
      %3856 = vmatprep.subr.mxu0 0.0
      %3857 = vmatpush2.msra.mxu0 0.0
      %3858 = vmatprep.subr.mxu0 0.0
      %3859 = vmatpush2.msra.mxu0 0.0
      %3860 = vmatprep.subr.mxu0 0.0
      %3861 = vmatpush2.msra.mxu0 0.0
      %3862 = vmatprep.subr.mxu0 0.0
      %3863 = vmatpush2.msra.mxu0 0.0
      %3864 = vmatprep.subr.mxu0 0.0
      %3865 = vmatpush2.msra.mxu0 0.0
      %3866 = vmatprep.subr.mxu0 0.0
      %3867 = vmatpush2.msra.mxu0 0.0
      %3868 = vmatprep.subr.mxu0 0.0
      %3869 = vmatpush2.msra.mxu0 0.0
      %3870 = vmatprep.subr.mxu0 0.0
      %3871 = vmatpush2.msra.mxu0 0.0
      %3872 = vmatprep.subr.mxu0 0.0
      %3873 = vmatpush2.msra.mxu0 0.0
      %3874 = vmatprep.subr.mxu0 0.0
      %3875 = vmatpush2.msra.mxu0 0.0
      %3876 = vmatprep.subr.mxu0 0.0
      %3877 = vmatpush2.msra.mxu0 0.0
      %3878 = vmatprep.subr.mxu0 0.0
      %3879 = vmatpush2.msra.mxu0 0.0
      %3880 = vmatprep.subr.mxu0 0.0
      %3881 = vmatpush2.msra.mxu0 0.0
      %3882 = vmatprep.subr.mxu0 0.0
      %3883 = vmatpush2.msra.mxu0 0.0
      %3884 = vmatprep.subr.mxu0 0.0
      %3885 = vmatpush2.msra.mxu0 0.0
      %3886 = vmatprep.mubr.f32.mxu0 0.0
      %3887 = vmatmul.mubr.f32.gmra.mxu0 %v3814
      %v3888 = vpop.f32.mrf.mxu0
      %v3889 = vadd.f32 %v3746, %v3888
      %v3890 = vpop.f32.mrf.mxu0
      %3891 = vmatprep.mubr.f32.mxu0 0.0
      %3892 = vmatmul.mubr.f32.gmra.mxu0 %v3816
      %v3893 = vpop.f32.mrf.mxu0
      %v3894 = vadd.f32 %v3746, %v3893
      %v3895 = vpop.f32.mrf.mxu0
      %3896 = vmatprep.mubr.f32.mxu0 0.0
      %3897 = vmatmul.mubr.f32.gmra.mxu0 %v3818
      %v3898 = vpop.f32.mrf.mxu0
      %v3899 = vadd.f32 %v3746, %v3898
      %v3900 = vpop.f32.mrf.mxu0
      %3901 = vmatprep.mubr.f32.mxu0 0.0
      %3902 = vmatmul.mubr.f32.gmra.mxu0 %v3820
      %v3903 = vpop.f32.mrf.mxu0
      %v3904 = vadd.f32 %v3746, %v3903
      %v3905 = vpop.f32.mrf.mxu0
      %3906 = vdwg.mxu0
      %v3907 = vmax.f32 %v3889, 0.0
      %v3908 = vmax.f32 %v3894, 0.0
      %v3909 = vmax.f32 %v3899, 0.0
      %v3910 = vmax.f32 %v3904, 0.0
      %v3911 = vld [vmem:[%s1 + $0xc0] sm:$0xff]
      %v3912 = vld [vmem:[%s1 + $0xc8] sm:$0xff]
      %v3913 = vld [vmem:[%s1 + $0xd0] sm:$0xff]
      %v3914 = vld [vmem:[%s1 + $0xd8] sm:$0xff]
      %v3915 = vld [vmem:[%s1 + $0x150] sm:$0x1]
      %v3916 = vlaneseq
      %v3917 = vshrl.u32 %v3916, 7
      %v3918 = vsub.s32 0, %v3917
      %v3919 = vrot.slane %v3915, %v3918
      %v3921 = vsel %vm223, %v3907, 0
      %v3924 = vsel %vm223, %v3908, 0
      %v3927 = vsel %vm223, %v3909, 0
      %v3930 = vsel %vm223, %v3910, 0
      %3932 = vmatprep.subr.mxu0 0.0
      %3933 = vmatpush1.msra.mxu0 0.0
      %3934 = vmatprep.subr.mxu0 0.0
      %3935 = vmatpush1.msra.mxu0 0.0
      %3936 = vmatprep.subr.mxu0 0.0
      %3937 = vmatpush1.msra.mxu0 0.0
      %3938 = vmatprep.subr.mxu0 0.0
      %3939 = vmatpush1.msra.mxu0 0.0
      %3940 = vmatprep.subr.mxu0 0.0
      %3941 = vmatpush1.msra.mxu0 0.0
      %3942 = vmatprep.subr.mxu0 0.0
      %3943 = vmatpush1.msra.mxu0 0.0
      %3944 = vmatprep.subr.mxu0 0.0
      %3945 = vmatpush1.msra.mxu0 0.0
      %3946 = vmatprep.subr.mxu0 0.0
      %3947 = vmatpush1.msra.mxu0 0.0
      %3948 = vmatprep.subr.mxu0 0.0
      %3949 = vmatpush1.msra.mxu0 0.0
      %3950 = vmatprep.subr.mxu0 0.0
      %3951 = vmatpush1.msra.mxu0 0.0
      %3952 = vmatprep.subr.mxu0 0.0
      %3953 = vmatpush1.msra.mxu0 0.0
      %3954 = vmatprep.subr.mxu0 0.0
      %3955 = vmatpush1.msra.mxu0 0.0
      %3956 = vmatprep.subr.mxu0 0.0
      %3957 = vmatpush1.msra.mxu0 %v3914
      %3958 = vmatprep.subr.mxu0 0.0
      %3959 = vmatpush1.msra.mxu0 %v3913
      %3960 = vmatprep.subr.mxu0 0.0
      %3961 = vmatpush1.msra.mxu0 %v3912
      %3962 = vmatprep.subr.mxu0 0.0
      %3963 = vmatpush1.msra.mxu0 %v3911
      %3964 = vmatprep.subr.mxu0 0.0
      %3965 = vmatpush2.msra.mxu0 0.0
      %3966 = vmatprep.subr.mxu0 0.0
      %3967 = vmatpush2.msra.mxu0 0.0
      %3968 = vmatprep.subr.mxu0 0.0
      %3969 = vmatpush2.msra.mxu0 0.0
      %3970 = vmatprep.subr.mxu0 0.0
      %3971 = vmatpush2.msra.mxu0 0.0
      %3972 = vmatprep.subr.mxu0 0.0
      %3973 = vmatpush2.msra.mxu0 0.0
      %3974 = vmatprep.subr.mxu0 0.0
      %3975 = vmatpush2.msra.mxu0 0.0
      %3976 = vmatprep.subr.mxu0 0.0
      %3977 = vmatpush2.msra.mxu0 0.0
      %3978 = vmatprep.subr.mxu0 0.0
      %3979 = vmatpush2.msra.mxu0 0.0
      %3980 = vmatprep.subr.mxu0 0.0
      %3981 = vmatpush2.msra.mxu0 0.0
      %3982 = vmatprep.subr.mxu0 0.0
      %3983 = vmatpush2.msra.mxu0 0.0
      %3984 = vmatprep.subr.mxu0 0.0
      %3985 = vmatpush2.msra.mxu0 0.0
      %3986 = vmatprep.subr.mxu0 0.0
      %3987 = vmatpush2.msra.mxu0 0.0
      %3988 = vmatprep.subr.mxu0 0.0
      %3989 = vmatpush2.msra.mxu0 0.0
      %3990 = vmatprep.subr.mxu0 0.0
      %3991 = vmatpush2.msra.mxu0 0.0
      %3992 = vmatprep.subr.mxu0 0.0
      %3993 = vmatpush2.msra.mxu0 0.0
      %3994 = vmatprep.subr.mxu0 0.0
      %3995 = vmatpush2.msra.mxu0 0.0
      %3996 = vmatprep.mubr.f32.mxu0 0.0
      %3997 = vmatmul.mubr.f32.gmra.mxu0 %v3921
      %v3998 = vpop.f32.mrf.mxu0
      %v3999 = vadd.f32 %v3919, %v3998
      %v4000 = vpop.f32.mrf.mxu0
      %4001 = vmatprep.mubr.f32.mxu0 0.0
      %4002 = vmatmul.mubr.f32.gmra.mxu0 %v3924
      %v4003 = vpop.f32.mrf.mxu0
      %v4004 = vadd.f32 %v3919, %v4003
      %v4005 = vpop.f32.mrf.mxu0
      %4006 = vmatprep.mubr.f32.mxu0 0.0
      %4007 = vmatmul.mubr.f32.gmra.mxu0 %v3927
      %v4008 = vpop.f32.mrf.mxu0
      %v4009 = vadd.f32 %v3919, %v4008
      %v4010 = vpop.f32.mrf.mxu0
      %4011 = vmatprep.mubr.f32.mxu0 0.0
      %4012 = vmatmul.mubr.f32.gmra.mxu0 %v3930
      %v4013 = vpop.f32.mrf.mxu0
      %v4014 = vadd.f32 %v3919, %v4013
      %v4015 = vpop.f32.mrf.mxu0
      %4016 = vdwg.mxu0
      %v4017 = vld [vmem:[%s1 + $0xe0] sm:$0xff]
      %v4018 = vld [vmem:[%s1 + $0xe8] sm:$0xff]
      %v4019 = vld [vmem:[%s1 + $0xf0] sm:$0xff]
      %v4020 = vld [vmem:[%s1 + $0xf8] sm:$0xff]
      %v4021 = vld [vmem:[%s1 + $0x158] sm:$0x1]
      %v4022 = vlaneseq
      %v4023 = vshrl.u32 %v4022, 7
      %v4024 = vsub.s32 0, %v4023
      %v4025 = vrot.slane %v4021, %v4024
      %v4027 = vsel %vm223, %v3449, 0
      %v4030 = vsel %vm223, %v3450, 0
      %v4033 = vsel %vm223, %v3451, 0
      %v4036 = vsel %vm223, %v3452, 0
      %v4039 = vsel %vm223, %v3453, 0
      %v4042 = vsel %vm223, %v3454, 0
      %v4045 = vsel %vm223, %v3455, 0
      %v4048 = vsel %vm223, %v3456, 0
      %v4051 = vsel %vm223, %v3457, 0
      %v4054 = vsel %vm223, %v3458, 0
      %v4057 = vsel %vm223, %v3459, 0
      %v4060 = vsel %vm223, %v3460, 0
      %v4063 = vsel %vm223, %v3461, 0
      %v4066 = vsel %vm223, %v3462, 0
      %v4069 = vsel %vm223, %v3463, 0
      %v4072 = vsel %vm223, %v3464, 0
      %v4075 = vsel %vm223, %v3465, 0
      %v4078 = vsel %vm223, %v3466, 0
      %v4081 = vsel %vm223, %v3467, 0
      %v4084 = vsel %vm223, %v3468, 0
      %v4087 = vsel %vm223, %v3469, 0
      %v4090 = vsel %vm223, %v3470, 0
      %v4093 = vsel %vm223, %v3471, 0
      %v4096 = vsel %vm223, %v3472, 0
      %v4099 = vsel %vm223, %v3473, 0
      %v4102 = vsel %vm223, %v3474, 0
      %v4105 = vsel %vm223, %v3475, 0
      %v4108 = vsel %vm223, %v3476, 0
      %v4111 = vsel %vm223, %v3477, 0
      %v4114 = vsel %vm223, %v3478, 0
      %v4117 = vsel %vm223, %v3479, 0
      %v4120 = vsel %vm223, %v3480, 0
      %4122 = vmatprep.subr.mxu0 0.0
      %4123 = vmatpush1.msra.mxu0 0.0
      %4124 = vmatprep.subr.mxu0 0.0
      %4125 = vmatpush1.msra.mxu0 0.0
      %4126 = vmatprep.subr.mxu0 0.0
      %4127 = vmatpush1.msra.mxu0 0.0
      %4128 = vmatprep.subr.mxu0 0.0
      %4129 = vmatpush1.msra.mxu0 0.0
      %4130 = vmatprep.subr.mxu0 0.0
      %4131 = vmatpush1.msra.mxu0 0.0
      %4132 = vmatprep.subr.mxu0 0.0
      %4133 = vmatpush1.msra.mxu0 0.0
      %4134 = vmatprep.subr.mxu0 0.0
      %4135 = vmatpush1.msra.mxu0 0.0
      %4136 = vmatprep.subr.mxu0 0.0
      %4137 = vmatpush1.msra.mxu0 0.0
      %4138 = vmatprep.subr.mxu0 0.0
      %4139 = vmatpush1.msra.mxu0 0.0
      %4140 = vmatprep.subr.mxu0 0.0
      %4141 = vmatpush1.msra.mxu0 0.0
      %4142 = vmatprep.subr.mxu0 0.0
      %4143 = vmatpush1.msra.mxu0 0.0
      %4144 = vmatprep.subr.mxu0 0.0
      %4145 = vmatpush1.msra.mxu0 0.0
      %4146 = vmatprep.subr.mxu0 0.0
      %4147 = vmatpush1.msra.mxu0 %v4020
      %4148 = vmatprep.subr.mxu0 0.0
      %4149 = vmatpush1.msra.mxu0 %v4019
      %4150 = vmatprep.subr.mxu0 0.0
      %4151 = vmatpush1.msra.mxu0 %v4018
      %4152 = vmatprep.subr.mxu0 0.0
      %4153 = vmatpush1.msra.mxu0 %v4017
      %4154 = vmatprep.subr.mxu0 0.0
      %4155 = vmatpush2.msra.mxu0 0.0
      %4156 = vmatprep.subr.mxu0 0.0
      %4157 = vmatpush2.msra.mxu0 0.0
      %4158 = vmatprep.subr.mxu0 0.0
      %4159 = vmatpush2.msra.mxu0 0.0
      %4160 = vmatprep.subr.mxu0 0.0
      %4161 = vmatpush2.msra.mxu0 0.0
      %4162 = vmatprep.subr.mxu0 0.0
      %4163 = vmatpush2.msra.mxu0 0.0
      %4164 = vmatprep.subr.mxu0 0.0
      %4165 = vmatpush2.msra.mxu0 0.0
      %4166 = vmatprep.subr.mxu0 0.0
      %4167 = vmatpush2.msra.mxu0 0.0
      %4168 = vmatprep.subr.mxu0 0.0
      %4169 = vmatpush2.msra.mxu0 0.0
      %4170 = vmatprep.subr.mxu0 0.0
      %4171 = vmatpush2.msra.mxu0 0.0
      %4172 = vmatprep.subr.mxu0 0.0
      %4173 = vmatpush2.msra.mxu0 0.0
      %4174 = vmatprep.subr.mxu0 0.0
      %4175 = vmatpush2.msra.mxu0 0.0
      %4176 = vmatprep.subr.mxu0 0.0
      %4177 = vmatpush2.msra.mxu0 0.0
      %4178 = vmatprep.subr.mxu0 0.0
      %4179 = vmatpush2.msra.mxu0 0.0
      %4180 = vmatprep.subr.mxu0 0.0
      %4181 = vmatpush2.msra.mxu0 0.0
      %4182 = vmatprep.subr.mxu0 0.0
      %4183 = vmatpush2.msra.mxu0 0.0
      %4184 = vmatprep.subr.mxu0 0.0
      %4185 = vmatpush2.msra.mxu0 0.0
      %4186 = vmatprep.mubr.f32.mxu0 0.0
      %4187 = vmatmul.mubr.f32.gmra.mxu0 %v4027
      %v4188 = vpop.f32.mrf.mxu0
      %v4189 = vadd.f32 %v4025, %v4188
      %v4190 = vpop.f32.mrf.mxu0
      %4191 = vmatprep.mubr.f32.mxu0 0.0
      %4192 = vmatmul.mubr.f32.gmra.mxu0 %v4030
      %v4193 = vpop.f32.mrf.mxu0
      %v4194 = vadd.f32 %v4025, %v4193
      %v4195 = vpop.f32.mrf.mxu0
      %4196 = vmatprep.mubr.f32.mxu0 0.0
      %4197 = vmatmul.mubr.f32.gmra.mxu0 %v4033
      %v4198 = vpop.f32.mrf.mxu0
      %v4199 = vadd.f32 %v4025, %v4198
      %v4200 = vpop.f32.mrf.mxu0
      %4201 = vmatprep.mubr.f32.mxu0 0.0
      %4202 = vmatmul.mubr.f32.gmra.mxu0 %v4036
      %v4203 = vpop.f32.mrf.mxu0
      %v4204 = vadd.f32 %v4025, %v4203
      %v4205 = vpop.f32.mrf.mxu0
      %4206 = vmatprep.mubr.f32.mxu0 0.0
      %4207 = vmatmul.mubr.f32.gmra.mxu0 %v4039
      %v4208 = vpop.f32.mrf.mxu0
      %v4209 = vadd.f32 %v4025, %v4208
      %v4210 = vpop.f32.mrf.mxu0
      %4211 = vmatprep.mubr.f32.mxu0 0.0
      %4212 = vmatmul.mubr.f32.gmra.mxu0 %v4042
      %v4213 = vpop.f32.mrf.mxu0
      %v4214 = vadd.f32 %v4025, %v4213
      %v4215 = vpop.f32.mrf.mxu0
      %4216 = vmatprep.mubr.f32.mxu0 0.0
      %4217 = vmatmul.mubr.f32.gmra.mxu0 %v4045
      %v4218 = vpop.f32.mrf.mxu0
      %v4219 = vadd.f32 %v4025, %v4218
      %v4220 = vpop.f32.mrf.mxu0
      %4221 = vmatprep.mubr.f32.mxu0 0.0
      %4222 = vmatmul.mubr.f32.gmra.mxu0 %v4048
      %v4223 = vpop.f32.mrf.mxu0
      %v4224 = vadd.f32 %v4025, %v4223
      %v4225 = vpop.f32.mrf.mxu0
      %4226 = vmatprep.mubr.f32.mxu0 0.0
      %4227 = vmatmul.mubr.f32.gmra.mxu0 %v4051
      %v4228 = vpop.f32.mrf.mxu0
      %v4229 = vadd.f32 %v4025, %v4228
      %v4230 = vpop.f32.mrf.mxu0
      %4231 = vmatprep.mubr.f32.mxu0 0.0
      %4232 = vmatmul.mubr.f32.gmra.mxu0 %v4054
      %v4233 = vpop.f32.mrf.mxu0
      %v4234 = vadd.f32 %v4025, %v4233
      %v4235 = vpop.f32.mrf.mxu0
      %4236 = vmatprep.mubr.f32.mxu0 0.0
      %4237 = vmatmul.mubr.f32.gmra.mxu0 %v4057
      %v4238 = vpop.f32.mrf.mxu0
      %v4239 = vadd.f32 %v4025, %v4238
      %v4240 = vpop.f32.mrf.mxu0
      %4241 = vmatprep.mubr.f32.mxu0 0.0
      %4242 = vmatmul.mubr.f32.gmra.mxu0 %v4060
      %v4243 = vpop.f32.mrf.mxu0
      %v4244 = vadd.f32 %v4025, %v4243
      %v4245 = vpop.f32.mrf.mxu0
      %4246 = vmatprep.mubr.f32.mxu0 0.0
      %4247 = vmatmul.mubr.f32.gmra.mxu0 %v4063
      %v4248 = vpop.f32.mrf.mxu0
      %v4249 = vadd.f32 %v4025, %v4248
      %v4250 = vpop.f32.mrf.mxu0
      %4251 = vmatprep.mubr.f32.mxu0 0.0
      %4252 = vmatmul.mubr.f32.gmra.mxu0 %v4066
      %v4253 = vpop.f32.mrf.mxu0
      %v4254 = vadd.f32 %v4025, %v4253
      %v4255 = vpop.f32.mrf.mxu0
      %4256 = vmatprep.mubr.f32.mxu0 0.0
      %4257 = vmatmul.mubr.f32.gmra.mxu0 %v4069
      %v4258 = vpop.f32.mrf.mxu0
      %v4259 = vadd.f32 %v4025, %v4258
      %v4260 = vpop.f32.mrf.mxu0
      %4261 = vmatprep.mubr.f32.mxu0 0.0
      %4262 = vmatmul.mubr.f32.gmra.mxu0 %v4072
      %v4263 = vpop.f32.mrf.mxu0
      %v4264 = vadd.f32 %v4025, %v4263
      %v4265 = vpop.f32.mrf.mxu0
      %4266 = vmatprep.mubr.f32.mxu0 0.0
      %4267 = vmatmul.mubr.f32.gmra.mxu0 %v4075
      %v4268 = vpop.f32.mrf.mxu0
      %v4269 = vadd.f32 %v4025, %v4268
      %v4270 = vpop.f32.mrf.mxu0
      %4271 = vmatprep.mubr.f32.mxu0 0.0
      %4272 = vmatmul.mubr.f32.gmra.mxu0 %v4078
      %v4273 = vpop.f32.mrf.mxu0
      %v4274 = vadd.f32 %v4025, %v4273
      %v4275 = vpop.f32.mrf.mxu0
      %4276 = vmatprep.mubr.f32.mxu0 0.0
      %4277 = vmatmul.mubr.f32.gmra.mxu0 %v4081
      %v4278 = vpop.f32.mrf.mxu0
      %v4279 = vadd.f32 %v4025, %v4278
      %v4280 = vpop.f32.mrf.mxu0
      %4281 = vmatprep.mubr.f32.mxu0 0.0
      %4282 = vmatmul.mubr.f32.gmra.mxu0 %v4084
      %v4283 = vpop.f32.mrf.mxu0
      %v4284 = vadd.f32 %v4025, %v4283
      %v4285 = vpop.f32.mrf.mxu0
      %4286 = vmatprep.mubr.f32.mxu0 0.0
      %4287 = vmatmul.mubr.f32.gmra.mxu0 %v4087
      %v4288 = vpop.f32.mrf.mxu0
      %v4289 = vadd.f32 %v4025, %v4288
      %v4290 = vpop.f32.mrf.mxu0
      %4291 = vmatprep.mubr.f32.mxu0 0.0
      %4292 = vmatmul.mubr.f32.gmra.mxu0 %v4090
      %v4293 = vpop.f32.mrf.mxu0
      %v4294 = vadd.f32 %v4025, %v4293
      %v4295 = vpop.f32.mrf.mxu0
      %4296 = vmatprep.mubr.f32.mxu0 0.0
      %4297 = vmatmul.mubr.f32.gmra.mxu0 %v4093
      %v4298 = vpop.f32.mrf.mxu0
      %v4299 = vadd.f32 %v4025, %v4298
      %v4300 = vpop.f32.mrf.mxu0
      %4301 = vmatprep.mubr.f32.mxu0 0.0
      %4302 = vmatmul.mubr.f32.gmra.mxu0 %v4096
      %v4303 = vpop.f32.mrf.mxu0
      %v4304 = vadd.f32 %v4025, %v4303
      %v4305 = vpop.f32.mrf.mxu0
      %4306 = vmatprep.mubr.f32.mxu0 0.0
      %4307 = vmatmul.mubr.f32.gmra.mxu0 %v4099
      %v4308 = vpop.f32.mrf.mxu0
      %v4309 = vadd.f32 %v4025, %v4308
      %v4310 = vpop.f32.mrf.mxu0
      %4311 = vmatprep.mubr.f32.mxu0 0.0
      %4312 = vmatmul.mubr.f32.gmra.mxu0 %v4102
      %v4313 = vpop.f32.mrf.mxu0
      %v4314 = vadd.f32 %v4025, %v4313
      %v4315 = vpop.f32.mrf.mxu0
      %4316 = vmatprep.mubr.f32.mxu0 0.0
      %4317 = vmatmul.mubr.f32.gmra.mxu0 %v4105
      %v4318 = vpop.f32.mrf.mxu0
      %v4319 = vadd.f32 %v4025, %v4318
      %v4320 = vpop.f32.mrf.mxu0
      %4321 = vmatprep.mubr.f32.mxu0 0.0
      %4322 = vmatmul.mubr.f32.gmra.mxu0 %v4108
      %v4323 = vpop.f32.mrf.mxu0
      %v4324 = vadd.f32 %v4025, %v4323
      %v4325 = vpop.f32.mrf.mxu0
      %4326 = vmatprep.mubr.f32.mxu0 0.0
      %4327 = vmatmul.mubr.f32.gmra.mxu0 %v4111
      %v4328 = vpop.f32.mrf.mxu0
      %v4329 = vadd.f32 %v4025, %v4328
      %v4330 = vpop.f32.mrf.mxu0
      %4331 = vmatprep.mubr.f32.mxu0 0.0
      %4332 = vmatmul.mubr.f32.gmra.mxu0 %v4114
      %v4333 = vpop.f32.mrf.mxu0
      %v4334 = vadd.f32 %v4025, %v4333
      %v4335 = vpop.f32.mrf.mxu0
      %4336 = vmatprep.mubr.f32.mxu0 0.0
      %4337 = vmatmul.mubr.f32.gmra.mxu0 %v4117
      %v4338 = vpop.f32.mrf.mxu0
      %v4339 = vadd.f32 %v4025, %v4338
      %v4340 = vpop.f32.mrf.mxu0
      %4341 = vmatprep.mubr.f32.mxu0 0.0
      %4342 = vmatmul.mubr.f32.gmra.mxu0 %v4120
      %v4343 = vpop.f32.mrf.mxu0
      %v4344 = vadd.f32 %v4025, %v4343
      %v4345 = vpop.f32.mrf.mxu0
      %4346 = vdwg.mxu0
      %v4347 = vmax.f32 %v4189, 0.0
      %v4348 = vmax.f32 %v4194, 0.0
      %v4349 = vmax.f32 %v4199, 0.0
      %v4350 = vmax.f32 %v4204, 0.0
      %v4351 = vmax.f32 %v4209, 0.0
      %v4352 = vmax.f32 %v4214, 0.0
      %v4353 = vmax.f32 %v4219, 0.0
      %v4354 = vmax.f32 %v4224, 0.0
      %v4355 = vmax.f32 %v4229, 0.0
      %v4356 = vmax.f32 %v4234, 0.0
      %v4357 = vmax.f32 %v4239, 0.0
      %v4358 = vmax.f32 %v4244, 0.0
      %v4359 = vmax.f32 %v4249, 0.0
      %v4360 = vmax.f32 %v4254, 0.0
      %v4361 = vmax.f32 %v4259, 0.0
      %v4362 = vmax.f32 %v4264, 0.0
      %v4363 = vmax.f32 %v4269, 0.0
      %v4364 = vmax.f32 %v4274, 0.0
      %v4365 = vmax.f32 %v4279, 0.0
      %v4366 = vmax.f32 %v4284, 0.0
      %v4367 = vmax.f32 %v4289, 0.0
      %v4368 = vmax.f32 %v4294, 0.0
      %v4369 = vmax.f32 %v4299, 0.0
      %v4370 = vmax.f32 %v4304, 0.0
      %v4371 = vmax.f32 %v4309, 0.0
      %v4372 = vmax.f32 %v4314, 0.0
      %v4373 = vmax.f32 %v4319, 0.0
      %v4374 = vmax.f32 %v4324, 0.0
      %v4375 = vmax.f32 %v4329, 0.0
      %v4376 = vmax.f32 %v4334, 0.0
      %v4377 = vmax.f32 %v4339, 0.0
      %v4378 = vmax.f32 %v4344, 0.0
      %v4379 = vld [vmem:[%s1 + $0x100] sm:$0xff]
      %v4380 = vld [vmem:[%s1 + $0x108] sm:$0xff]
      %v4381 = vld [vmem:[%s1 + $0x110] sm:$0xff]
      %v4382 = vld [vmem:[%s1 + $0x118] sm:$0xff]
      %v4383 = vld [vmem:[%s1 + $0x160] sm:$0x1]
      %v4384 = vlaneseq
      %v4385 = vshrl.u32 %v4384, 7
      %v4386 = vsub.s32 0, %v4385
      %v4387 = vrot.slane %v4383, %v4386
      %v4389 = vsel %vm223, %v4347, 0
      %v4392 = vsel %vm223, %v4348, 0
      %v4395 = vsel %vm223, %v4349, 0
      %v4398 = vsel %vm223, %v4350, 0
      %v4401 = vsel %vm223, %v4351, 0
      %v4404 = vsel %vm223, %v4352, 0
      %v4407 = vsel %vm223, %v4353, 0
      %v4410 = vsel %vm223, %v4354, 0
      %v4413 = vsel %vm223, %v4355, 0
      %v4416 = vsel %vm223, %v4356, 0
      %v4419 = vsel %vm223, %v4357, 0
      %v4422 = vsel %vm223, %v4358, 0
      %v4425 = vsel %vm223, %v4359, 0
      %v4428 = vsel %vm223, %v4360, 0
      %v4431 = vsel %vm223, %v4361, 0
      %v4434 = vsel %vm223, %v4362, 0
      %v4437 = vsel %vm223, %v4363, 0
      %v4440 = vsel %vm223, %v4364, 0
      %v4443 = vsel %vm223, %v4365, 0
      %v4446 = vsel %vm223, %v4366, 0
      %v4449 = vsel %vm223, %v4367, 0
      %v4452 = vsel %vm223, %v4368, 0
      %v4455 = vsel %vm223, %v4369, 0
      %v4458 = vsel %vm223, %v4370, 0
      %v4461 = vsel %vm223, %v4371, 0
      %v4464 = vsel %vm223, %v4372, 0
      %v4467 = vsel %vm223, %v4373, 0
      %v4470 = vsel %vm223, %v4374, 0
      %v4473 = vsel %vm223, %v4375, 0
      %v4476 = vsel %vm223, %v4376, 0
      %v4479 = vsel %vm223, %v4377, 0
      %v4482 = vsel %vm223, %v4378, 0
      %4484 = vmatprep.subr.mxu0 0.0
      %4485 = vmatpush1.msra.mxu0 0.0
      %4486 = vmatprep.subr.mxu0 0.0
      %4487 = vmatpush1.msra.mxu0 0.0
      %4488 = vmatprep.subr.mxu0 0.0
      %4489 = vmatpush1.msra.mxu0 0.0
      %4490 = vmatprep.subr.mxu0 0.0
      %4491 = vmatpush1.msra.mxu0 0.0
      %4492 = vmatprep.subr.mxu0 0.0
      %4493 = vmatpush1.msra.mxu0 0.0
      %4494 = vmatprep.subr.mxu0 0.0
      %4495 = vmatpush1.msra.mxu0 0.0
      %4496 = vmatprep.subr.mxu0 0.0
      %4497 = vmatpush1.msra.mxu0 0.0
      %4498 = vmatprep.subr.mxu0 0.0
      %4499 = vmatpush1.msra.mxu0 0.0
      %4500 = vmatprep.subr.mxu0 0.0
      %4501 = vmatpush1.msra.mxu0 0.0
      %4502 = vmatprep.subr.mxu0 0.0
      %4503 = vmatpush1.msra.mxu0 0.0
      %4504 = vmatprep.subr.mxu0 0.0
      %4505 = vmatpush1.msra.mxu0 0.0
      %4506 = vmatprep.subr.mxu0 0.0
      %4507 = vmatpush1.msra.mxu0 0.0
      %4508 = vmatprep.subr.mxu0 0.0
      %4509 = vmatpush1.msra.mxu0 %v4382
      %4510 = vmatprep.subr.mxu0 0.0
      %4511 = vmatpush1.msra.mxu0 %v4381
      %4512 = vmatprep.subr.mxu0 0.0
      %4513 = vmatpush1.msra.mxu0 %v4380
      %4514 = vmatprep.subr.mxu0 0.0
      %4515 = vmatpush1.msra.mxu0 %v4379
      %4516 = vmatprep.subr.mxu0 0.0
      %4517 = vmatpush2.msra.mxu0 0.0
      %4518 = vmatprep.subr.mxu0 0.0
      %4519 = vmatpush2.msra.mxu0 0.0
      %4520 = vmatprep.subr.mxu0 0.0
      %4521 = vmatpush2.msra.mxu0 0.0
      %4522 = vmatprep.subr.mxu0 0.0
      %4523 = vmatpush2.msra.mxu0 0.0
      %4524 = vmatprep.subr.mxu0 0.0
      %4525 = vmatpush2.msra.mxu0 0.0
      %4526 = vmatprep.subr.mxu0 0.0
      %4527 = vmatpush2.msra.mxu0 0.0
      %4528 = vmatprep.subr.mxu0 0.0
      %4529 = vmatpush2.msra.mxu0 0.0
      %4530 = vmatprep.subr.mxu0 0.0
      %4531 = vmatpush2.msra.mxu0 0.0
      %4532 = vmatprep.subr.mxu0 0.0
      %4533 = vmatpush2.msra.mxu0 0.0
      %4534 = vmatprep.subr.mxu0 0.0
      %4535 = vmatpush2.msra.mxu0 0.0
      %4536 = vmatprep.subr.mxu0 0.0
      %4537 = vmatpush2.msra.mxu0 0.0
      %4538 = vmatprep.subr.mxu0 0.0
      %4539 = vmatpush2.msra.mxu0 0.0
      %4540 = vmatprep.subr.mxu0 0.0
      %4541 = vmatpush2.msra.mxu0 0.0
      %4542 = vmatprep.subr.mxu0 0.0
      %4543 = vmatpush2.msra.mxu0 0.0
      %4544 = vmatprep.subr.mxu0 0.0
      %4545 = vmatpush2.msra.mxu0 0.0
      %4546 = vmatprep.subr.mxu0 0.0
      %4547 = vmatpush2.msra.mxu0 0.0
      %4548 = vmatprep.mubr.f32.mxu0 0.0
      %4549 = vmatmul.mubr.f32.gmra.mxu0 %v4389
      %v4550 = vpop.f32.mrf.mxu0
      %v4551 = vadd.f32 %v4387, %v4550
      %v4552 = vpop.f32.mrf.mxu0
      %4553 = vmatprep.mubr.f32.mxu0 0.0
      %4554 = vmatmul.mubr.f32.gmra.mxu0 %v4392
      %v4555 = vpop.f32.mrf.mxu0
      %v4556 = vadd.f32 %v4387, %v4555
      %v4557 = vpop.f32.mrf.mxu0
      %4558 = vmatprep.mubr.f32.mxu0 0.0
      %4559 = vmatmul.mubr.f32.gmra.mxu0 %v4395
      %v4560 = vpop.f32.mrf.mxu0
      %v4561 = vadd.f32 %v4387, %v4560
      %v4562 = vpop.f32.mrf.mxu0
      %4563 = vmatprep.mubr.f32.mxu0 0.0
      %4564 = vmatmul.mubr.f32.gmra.mxu0 %v4398
      %v4565 = vpop.f32.mrf.mxu0
      %v4566 = vadd.f32 %v4387, %v4565
      %v4567 = vpop.f32.mrf.mxu0
      %4568 = vmatprep.mubr.f32.mxu0 0.0
      %4569 = vmatmul.mubr.f32.gmra.mxu0 %v4401
      %v4570 = vpop.f32.mrf.mxu0
      %v4571 = vadd.f32 %v4387, %v4570
      %v4572 = vpop.f32.mrf.mxu0
      %4573 = vmatprep.mubr.f32.mxu0 0.0
      %4574 = vmatmul.mubr.f32.gmra.mxu0 %v4404
      %v4575 = vpop.f32.mrf.mxu0
      %v4576 = vadd.f32 %v4387, %v4575
      %v4577 = vpop.f32.mrf.mxu0
      %4578 = vmatprep.mubr.f32.mxu0 0.0
      %4579 = vmatmul.mubr.f32.gmra.mxu0 %v4407
      %v4580 = vpop.f32.mrf.mxu0
      %v4581 = vadd.f32 %v4387, %v4580
      %v4582 = vpop.f32.mrf.mxu0
      %4583 = vmatprep.mubr.f32.mxu0 0.0
      %4584 = vmatmul.mubr.f32.gmra.mxu0 %v4410
      %v4585 = vpop.f32.mrf.mxu0
      %v4586 = vadd.f32 %v4387, %v4585
      %v4587 = vpop.f32.mrf.mxu0
      %4588 = vmatprep.mubr.f32.mxu0 0.0
      %4589 = vmatmul.mubr.f32.gmra.mxu0 %v4413
      %v4590 = vpop.f32.mrf.mxu0
      %v4591 = vadd.f32 %v4387, %v4590
      %v4592 = vpop.f32.mrf.mxu0
      %4593 = vmatprep.mubr.f32.mxu0 0.0
      %4594 = vmatmul.mubr.f32.gmra.mxu0 %v4416
      %v4595 = vpop.f32.mrf.mxu0
      %v4596 = vadd.f32 %v4387, %v4595
      %v4597 = vpop.f32.mrf.mxu0
      %4598 = vmatprep.mubr.f32.mxu0 0.0
      %4599 = vmatmul.mubr.f32.gmra.mxu0 %v4419
      %v4600 = vpop.f32.mrf.mxu0
      %v4601 = vadd.f32 %v4387, %v4600
      %v4602 = vpop.f32.mrf.mxu0
      %4603 = vmatprep.mubr.f32.mxu0 0.0
      %4604 = vmatmul.mubr.f32.gmra.mxu0 %v4422
      %v4605 = vpop.f32.mrf.mxu0
      %v4606 = vadd.f32 %v4387, %v4605
      %v4607 = vpop.f32.mrf.mxu0
      %4608 = vmatprep.mubr.f32.mxu0 0.0
      %4609 = vmatmul.mubr.f32.gmra.mxu0 %v4425
      %v4610 = vpop.f32.mrf.mxu0
      %v4611 = vadd.f32 %v4387, %v4610
      %v4612 = vpop.f32.mrf.mxu0
      %4613 = vmatprep.mubr.f32.mxu0 0.0
      %4614 = vmatmul.mubr.f32.gmra.mxu0 %v4428
      %v4615 = vpop.f32.mrf.mxu0
      %v4616 = vadd.f32 %v4387, %v4615
      %v4617 = vpop.f32.mrf.mxu0
      %4618 = vmatprep.mubr.f32.mxu0 0.0
      %4619 = vmatmul.mubr.f32.gmra.mxu0 %v4431
      %v4620 = vpop.f32.mrf.mxu0
      %v4621 = vadd.f32 %v4387, %v4620
      %v4622 = vpop.f32.mrf.mxu0
      %4623 = vmatprep.mubr.f32.mxu0 0.0
      %4624 = vmatmul.mubr.f32.gmra.mxu0 %v4434
      %v4625 = vpop.f32.mrf.mxu0
      %v4626 = vadd.f32 %v4387, %v4625
      %v4627 = vpop.f32.mrf.mxu0
      %4628 = vmatprep.mubr.f32.mxu0 0.0
      %4629 = vmatmul.mubr.f32.gmra.mxu0 %v4437
      %v4630 = vpop.f32.mrf.mxu0
      %v4631 = vadd.f32 %v4387, %v4630
      %v4632 = vpop.f32.mrf.mxu0
      %4633 = vmatprep.mubr.f32.mxu0 0.0
      %4634 = vmatmul.mubr.f32.gmra.mxu0 %v4440
      %v4635 = vpop.f32.mrf.mxu0
      %v4636 = vadd.f32 %v4387, %v4635
      %v4637 = vpop.f32.mrf.mxu0
      %4638 = vmatprep.mubr.f32.mxu0 0.0
      %4639 = vmatmul.mubr.f32.gmra.mxu0 %v4443
      %v4640 = vpop.f32.mrf.mxu0
      %v4641 = vadd.f32 %v4387, %v4640
      %v4642 = vpop.f32.mrf.mxu0
      %4643 = vmatprep.mubr.f32.mxu0 0.0
      %4644 = vmatmul.mubr.f32.gmra.mxu0 %v4446
      %v4645 = vpop.f32.mrf.mxu0
      %v4646 = vadd.f32 %v4387, %v4645
      %v4647 = vpop.f32.mrf.mxu0
      %4648 = vmatprep.mubr.f32.mxu0 0.0
      %4649 = vmatmul.mubr.f32.gmra.mxu0 %v4449
      %v4650 = vpop.f32.mrf.mxu0
      %v4651 = vadd.f32 %v4387, %v4650
      %v4652 = vpop.f32.mrf.mxu0
      %4653 = vmatprep.mubr.f32.mxu0 0.0
      %4654 = vmatmul.mubr.f32.gmra.mxu0 %v4452
      %v4655 = vpop.f32.mrf.mxu0
      %v4656 = vadd.f32 %v4387, %v4655
      %v4657 = vpop.f32.mrf.mxu0
      %4658 = vmatprep.mubr.f32.mxu0 0.0
      %4659 = vmatmul.mubr.f32.gmra.mxu0 %v4455
      %v4660 = vpop.f32.mrf.mxu0
      %v4661 = vadd.f32 %v4387, %v4660
      %v4662 = vpop.f32.mrf.mxu0
      %4663 = vmatprep.mubr.f32.mxu0 0.0
      %4664 = vmatmul.mubr.f32.gmra.mxu0 %v4458
      %v4665 = vpop.f32.mrf.mxu0
      %v4666 = vadd.f32 %v4387, %v4665
      %v4667 = vpop.f32.mrf.mxu0
      %4668 = vmatprep.mubr.f32.mxu0 0.0
      %4669 = vmatmul.mubr.f32.gmra.mxu0 %v4461
      %v4670 = vpop.f32.mrf.mxu0
      %v4671 = vadd.f32 %v4387, %v4670
      %v4672 = vpop.f32.mrf.mxu0
      %4673 = vmatprep.mubr.f32.mxu0 0.0
      %4674 = vmatmul.mubr.f32.gmra.mxu0 %v4464
      %v4675 = vpop.f32.mrf.mxu0
      %v4676 = vadd.f32 %v4387, %v4675
      %v4677 = vpop.f32.mrf.mxu0
      %4678 = vmatprep.mubr.f32.mxu0 0.0
      %4679 = vmatmul.mubr.f32.gmra.mxu0 %v4467
      %v4680 = vpop.f32.mrf.mxu0
      %v4681 = vadd.f32 %v4387, %v4680
      %v4682 = vpop.f32.mrf.mxu0
      %4683 = vmatprep.mubr.f32.mxu0 0.0
      %4684 = vmatmul.mubr.f32.gmra.mxu0 %v4470
      %v4685 = vpop.f32.mrf.mxu0
      %v4686 = vadd.f32 %v4387, %v4685
      %v4687 = vpop.f32.mrf.mxu0
      %4688 = vmatprep.mubr.f32.mxu0 0.0
      %4689 = vmatmul.mubr.f32.gmra.mxu0 %v4473
      %v4690 = vpop.f32.mrf.mxu0
      %v4691 = vadd.f32 %v4387, %v4690
      %v4692 = vpop.f32.mrf.mxu0
      %4693 = vmatprep.mubr.f32.mxu0 0.0
      %4694 = vmatmul.mubr.f32.gmra.mxu0 %v4476
      %v4695 = vpop.f32.mrf.mxu0
      %v4696 = vadd.f32 %v4387, %v4695
      %v4697 = vpop.f32.mrf.mxu0
      %4698 = vmatprep.mubr.f32.mxu0 0.0
      %4699 = vmatmul.mubr.f32.gmra.mxu0 %v4479
      %v4700 = vpop.f32.mrf.mxu0
      %v4701 = vadd.f32 %v4387, %v4700
      %v4702 = vpop.f32.mrf.mxu0
      %4703 = vmatprep.mubr.f32.mxu0 0.0
      %4704 = vmatmul.mubr.f32.gmra.mxu0 %v4482
      %v4705 = vpop.f32.mrf.mxu0
      %v4706 = vadd.f32 %v4387, %v4705
      %v4707 = vpop.f32.mrf.mxu0
      %4708 = vdwg.mxu0
      %v4709 = vlaneseq
      %v4710 = vand.u32 %v4709, 127
      %vm4711 = vcmp.ge.s32.totalorder %v4710, 4
      %v4712 = vmul.f32 %v3999, %v3999
      %v4713 = vmul.f32 %v4004, %v4004
      %v4714 = vmul.f32 %v4009, %v4009
      %v4715 = vmul.f32 %v4014, %v4014
      %v4716 = vsel %vm4711, %v4712, %v3999
      %v4717 = vsel %vm4711, %v4713, %v4004
      %v4718 = vsel %vm4711, %v4714, %v4009
      %v4719 = vsel %vm4711, %v4715, %v4014
      %4720 = vst.msk [vmem:[%s148] sm:$0xff] %vm223, %v4716
      %4721 = vst.msk [vmem:[%s148 + $0x8] sm:$0xff] %vm223, %v4717
      %4722 = vst.msk [vmem:[%s148 + $0x10] sm:$0xff] %vm223, %v4718
      %4723 = vst.msk [vmem:[%s148 + $0x18] sm:$0xff] %vm223, %v4719
      %v4724 = vmul.f32 %v4551, %v4551
      %v4725 = vmul.f32 %v4556, %v4556
      %v4726 = vmul.f32 %v4561, %v4561
      %v4727 = vmul.f32 %v4566, %v4566
      %v4728 = vmul.f32 %v4571, %v4571
      %v4729 = vmul.f32 %v4576, %v4576
      %v4730 = vmul.f32 %v4581, %v4581
      %v4731 = vmul.f32 %v4586, %v4586
      %v4732 = vmul.f32 %v4591, %v4591
      %v4733 = vmul.f32 %v4596, %v4596
      %v4734 = vmul.f32 %v4601, %v4601
      %v4735 = vmul.f32 %v4606, %v4606
      %v4736 = vmul.f32 %v4611, %v4611
      %v4737 = vmul.f32 %v4616, %v4616
      %v4738 = vmul.f32 %v4621, %v4621
      %v4739 = vmul.f32 %v4626, %v4626
      %v4740 = vmul.f32 %v4631, %v4631
      %v4741 = vmul.f32 %v4636, %v4636
      %v4742 = vmul.f32 %v4641, %v4641
      %v4743 = vmul.f32 %v4646, %v4646
      %v4744 = vmul.f32 %v4651, %v4651
      %v4745 = vmul.f32 %v4656, %v4656
      %v4746 = vmul.f32 %v4661, %v4661
      %v4747 = vmul.f32 %v4666, %v4666
      %v4748 = vmul.f32 %v4671, %v4671
      %v4749 = vmul.f32 %v4676, %v4676
      %v4750 = vmul.f32 %v4681, %v4681
      %v4751 = vmul.f32 %v4686, %v4686
      %v4752 = vmul.f32 %v4691, %v4691
      %v4753 = vmul.f32 %v4696, %v4696
      %v4754 = vmul.f32 %v4701, %v4701
      %v4755 = vmul.f32 %v4706, %v4706
      %v4756 = vsel %vm4711, %v4724, %v4551
      %v4757 = vsel %vm4711, %v4725, %v4556
      %v4758 = vsel %vm4711, %v4726, %v4561
      %v4759 = vsel %vm4711, %v4727, %v4566
      %v4760 = vsel %vm4711, %v4728, %v4571
      %v4761 = vsel %vm4711, %v4729, %v4576
      %v4762 = vsel %vm4711, %v4730, %v4581
      %v4763 = vsel %vm4711, %v4731, %v4586
      %v4764 = vsel %vm4711, %v4732, %v4591
      %v4765 = vsel %vm4711, %v4733, %v4596
      %v4766 = vsel %vm4711, %v4734, %v4601
      %v4767 = vsel %vm4711, %v4735, %v4606
      %v4768 = vsel %vm4711, %v4736, %v4611
      %v4769 = vsel %vm4711, %v4737, %v4616
      %v4770 = vsel %vm4711, %v4738, %v4621
      %v4771 = vsel %vm4711, %v4739, %v4626
      %v4772 = vsel %vm4711, %v4740, %v4631
      %v4773 = vsel %vm4711, %v4741, %v4636
      %v4774 = vsel %vm4711, %v4742, %v4641
      %v4775 = vsel %vm4711, %v4743, %v4646
      %v4776 = vsel %vm4711, %v4744, %v4651
      %v4777 = vsel %vm4711, %v4745, %v4656
      %v4778 = vsel %vm4711, %v4746, %v4661
      %v4779 = vsel %vm4711, %v4747, %v4666
      %v4780 = vsel %vm4711, %v4748, %v4671
      %v4781 = vsel %vm4711, %v4749, %v4676
      %v4782 = vsel %vm4711, %v4750, %v4681
      %v4783 = vsel %vm4711, %v4751, %v4686
      %v4784 = vsel %vm4711, %v4752, %v4691
      %v4785 = vsel %vm4711, %v4753, %v4696
      %v4786 = vsel %vm4711, %v4754, %v4701
      %v4787 = vsel %vm4711, %v4755, %v4706
      %4788 = vst.msk [vmem:[%s148 + $0x20] sm:$0xff] %vm223, %v4756
      %4789 = vst.msk [vmem:[%s148 + $0x28] sm:$0xff] %vm223, %v4757
      %4790 = vst.msk [vmem:[%s148 + $0x30] sm:$0xff] %vm223, %v4758
      %4791 = vst.msk [vmem:[%s148 + $0x38] sm:$0xff] %vm223, %v4759
      %4792 = vst.msk [vmem:[%s148 + $0x40] sm:$0xff] %vm223, %v4760
      %4793 = vst.msk [vmem:[%s148 + $0x48] sm:$0xff] %vm223, %v4761
      %4794 = vst.msk [vmem:[%s148 + $0x50] sm:$0xff] %vm223, %v4762
      %4795 = vst.msk [vmem:[%s148 + $0x58] sm:$0xff] %vm223, %v4763
      %4796 = vst.msk [vmem:[%s148 + $0x60] sm:$0xff] %vm223, %v4764
      %4797 = vst.msk [vmem:[%s148 + $0x68] sm:$0xff] %vm223, %v4765
      %4798 = vst.msk [vmem:[%s148 + $0x70] sm:$0xff] %vm223, %v4766
      %4799 = vst.msk [vmem:[%s148 + $0x78] sm:$0xff] %vm223, %v4767
      %4800 = vst.msk [vmem:[%s148 + $0x80] sm:$0xff] %vm223, %v4768
      %4801 = vst.msk [vmem:[%s148 + $0x88] sm:$0xff] %vm223, %v4769
      %4802 = vst.msk [vmem:[%s148 + $0x90] sm:$0xff] %vm223, %v4770
      %4803 = vst.msk [vmem:[%s148 + $0x98] sm:$0xff] %vm223, %v4771
      %4804 = vst.msk [vmem:[%s148 + $0xa0] sm:$0xff] %vm223, %v4772
      %4805 = vst.msk [vmem:[%s148 + $0xa8] sm:$0xff] %vm223, %v4773
      %4806 = vst.msk [vmem:[%s148 + $0xb0] sm:$0xff] %vm223, %v4774
      %4807 = vst.msk [vmem:[%s148 + $0xb8] sm:$0xff] %vm223, %v4775
      %4808 = vst.msk [vmem:[%s148 + $0xc0] sm:$0xff] %vm223, %v4776
      %4809 = vst.msk [vmem:[%s148 + $0xc8] sm:$0xff] %vm223, %v4777
      %4810 = vst.msk [vmem:[%s148 + $0xd0] sm:$0xff] %vm223, %v4778
      %4811 = vst.msk [vmem:[%s148 + $0xd8] sm:$0xff] %vm223, %v4779
      %4812 = vst.msk [vmem:[%s148 + $0xe0] sm:$0xff] %vm223, %v4780
      %4813 = vst.msk [vmem:[%s148 + $0xe8] sm:$0xff] %vm223, %v4781
      %4814 = vst.msk [vmem:[%s148 + $0xf0] sm:$0xff] %vm223, %v4782
      %4815 = vst.msk [vmem:[%s148 + $0xf8] sm:$0xff] %vm223, %v4783
      %4816 = vst.msk [vmem:[%s148 + $0x100] sm:$0xff] %vm223, %v4784
      %4817 = vst.msk [vmem:[%s148 + $0x108] sm:$0xff] %vm223, %v4785
      %4818 = vst.msk [vmem:[%s148 + $0x110] sm:$0xff] %vm223, %v4786
      %4819 = vst.msk [vmem:[%s148 + $0x118] sm:$0xff] %vm223, %v4787
      %s4820 = smul.u32 36, %s13
      %p4821 = scmp.lt.s32.totalorder %s4820, 71
      %s4822 = scalar_select %p4821, %s4820, 71
      %s4823 = smul.addr %s4822, 8
      %s4824 = scalar_lea.vmem %s2, %s4823
      // Predicated region
      $region29: #{multitask_forward.1} parent=27 // pred_check
        %p4825 = pneg %p78
      $region30: #{multitask_forward.1} parent=27 // pred_check_branch
        %4827 = sbr.rel (%p4825) target = $region32
      $region31: #{multitask_forward.1} parent=27 // pred_region
        %s4828 = smul.u32 36, %s13
      $region32: #{multitask_forward.1} parent=27 // pred_fallthru
        _
    $region28: #{multitask_forward.1} parent=5 // pred_fallthru
      _
    %p4829 = scmp.le.s32.totalorder 2, %s8
    // Predicated region
    $region33: #{multitask_forward.1} parent=5 // pred_check
      %p4830 = pneg %p4829
    $region34: #{multitask_forward.1} parent=5 // pred_check_branch
      %4832 = sbr.rel (%p4830) target = $region36
    $region35: #{multitask_forward.1} parent=5 // pred_region
      %s4833 = ssub.s32 %s8, 2
      // Predicated region
      $region37: #{multitask_forward.1} parent=35 // pred_check
        %p4834 = pneg %p84
      $region38: #{multitask_forward.1} parent=35 // pred_check_branch
        %4836 = sbr.rel (%p4834) target = $region40
      $region39: #{multitask_forward.1} parent=35 // pred_region
        %s4837 = smul.u32 36, %s14
        %p4838 = scmp.lt.s32.totalorder %s4837, 71
        %s4839 = scalar_select %p4838, %s4837, 71
        %s4840 = smul.addr %s4839, 8
        %s4841 = scalar_lea.vmem %s2, %s4840
      $region40: #{multitask_forward.1} parent=35 // pred_fallthru
        _
    $region36: #{multitask_forward.1} parent=5 // pred_fallthru
      _
  $region6: #{multitask_forward.1} parent=0 // loop_footer
    %s12 = sadd.s32 1, %s8
  $region7: #{multitask_forward.1} parent=0 // loop_footer_branch
    %7 = sbr.rel target = $region3
  $region8: #{multitask_forward.1} parent=0 // loop_exit
    _

</llo_original>
